<compile_context>
chip_gen: v6e
topology: v6e:2x2x1
jax: 0.10.0
libtpu: 0.0.40
codegen_flags: <defaults>
</compile_context>

<pallas_src>
import functools

import jax
import jax.numpy as jnp
from jax.experimental import pallas as pl
from jax.experimental.pallas import tpu as pltpu


# ----------------------------- Pallas kernels ------------------------------

def _fused_gemm_kernel(x_ref, w_ref, b_ref, o_ref, acc_ref, *, relu):
    """acc += x @ w ; on last K step: out = [relu](acc + shift)."""
    k = pl.program_id(2)

    @pl.when(k == 0)
    def _():
        acc_ref[...] = jnp.zeros_like(acc_ref)

    acc_ref[...] += jnp.dot(x_ref[...], w_ref[...],
                            preferred_element_type=jnp.float32)

    @pl.when(k == pl.num_programs(2) - 1)
    def _():
        y = acc_ref[...] + b_ref[...]
        if relu:
            y = jnp.maximum(y, 0.0)
        o_ref[...] = y.astype(o_ref.dtype)


def _fused_gemm_add_kernel(x_ref, w_ref, b_ref, r_ref, o_ref, acc_ref):
    """acc += x @ w ; on last K step: out = acc + shift + residual.

    NOTE: the reference module applies NO ReLU after the residual add, so none
    is applied here.
    """
    k = pl.program_id(2)

    @pl.when(k == 0)
    def _():
        acc_ref[...] = jnp.zeros_like(acc_ref)

    acc_ref[...] += jnp.dot(x_ref[...], w_ref[...],
                            preferred_element_type=jnp.float32)

    @pl.when(k == pl.num_programs(2) - 1)
    def _():
        y = acc_ref[...] + b_ref[...] + r_ref[...].astype(jnp.float32)
        o_ref[...] = y.astype(o_ref.dtype)


# ----------------------------- tiling helpers -------------------------------

def _round_up(x, m):
    return (x + m - 1) // m * m


def _pick_tile(dim, candidates):
    for c in candidates:
        if dim % c == 0:
            return c
    return dim  # single full-extent block along this axis


def fused_matmul_bn(x2d, w, scale, shift, *, relu=False, residual=None,
                    out_dtype=jnp.bfloat16):
    """out = [relu](x2d @ (w * scale) + shift) [+ residual], tiled on the MXU."""
    M, K = x2d.shape
    K2, N = w.shape
    assert K == K2

    # Fold BN scale into the weight columns; cast MXU operands to bf16.
    w_f = (w.astype(jnp.float32) * scale.astype(jnp.float32)[None, :]
           ).astype(jnp.bfloat16)
    x_f = x2d.astype(jnp.bfloat16)
    b_f = shift.astype(jnp.float32).reshape(1, N)

    # Lane/sublane-friendly padded shapes (bf16 min tile is (16, 128)).
    Mp = _round_up(M, 16) if M < 128 else _round_up(M, 128)
    Kp = _round_up(K, 128)
    Np = _round_up(N, 128)

    tm = _pick_tile(Mp, (512, 256, 128))
    tn = _pick_tile(Np, (256, 128))
    tk = _pick_tile(Kp, (512, 256, 128))

    x_p = jnp.pad(x_f, ((0, Mp - M), (0, Kp - K)))
    w_p = jnp.pad(w_f, ((0, Kp - K), (0, Np - N)))
    b_p = jnp.pad(b_f, ((0, 0), (0, Np - N)))

    grid = (Mp // tm, Np // tn, Kp // tk)

    x_spec = pl.BlockSpec((tm, tk), lambda i, j, k: (i, k))
    w_spec = pl.BlockSpec((tk, tn), lambda i, j, k: (k, j))
    b_spec = pl.BlockSpec((1, tn), lambda i, j, k: (0, j))
    o_spec = pl.BlockSpec((tm, tn), lambda i, j, k: (i, j))

    if residual is None:
        kernel = functools.partial(_fused_gemm_kernel, relu=relu)
        in_specs = [x_spec, w_spec, b_spec]
        args = (x_p, w_p, b_p)
    else:
        r_p = jnp.pad(residual.astype(jnp.bfloat16),
                      ((0, Mp - M), (0, Np - N)))
        r_spec = pl.BlockSpec((tm, tn), lambda i, j, k: (i, j))
        kernel = _fused_gemm_add_kernel
        in_specs = [x_spec, w_spec, b_spec, r_spec]
        args = (x_p, w_p, b_p, r_p)

    out = pl.pallas_call(
        kernel,
        out_shape=jax.ShapeDtypeStruct((Mp, Np), out_dtype),
        grid_spec=pltpu.PrefetchScalarGridSpec(
            num_scalar_prefetch=0,
            grid=grid,
            in_specs=in_specs,
            out_specs=o_spec,
            scratch_shapes=[pltpu.VMEM((tm, tn), jnp.float32)],
        ),
        compiler_params=pltpu.CompilerParams(
            dimension_semantics=("parallel", "parallel", "arbitrary"),
            # Per-step working set is a few MiB; 32 MiB scoped limit is safe on
            # v5e/v6e (128 MiB physical) and v7x (64 MiB physical).
            vmem_limit_bytes=32 * 1024 * 1024,
        ),
    )(*args)

    return out[:M, :N]


# ------------------------------- JAX glue ----------------------------------

def bn_fold(gamma, beta, mean, var, eps=1e-5):
    scale = gamma / jnp.sqrt(var + eps)
    shift = beta - mean * scale
    return scale, shift


def im2col_3x3(x_nhwc, stride):
    """3x3 patches, padding=1, given stride; flatten order = (dy, dx, c)."""
    N, H, W, C = x_nhwc.shape
    xp = jnp.pad(x_nhwc, ((0, 0), (1, 1), (1, 1), (0, 0)))
    Ho = (H + 2 - 3) // stride + 1
    Wo = (W + 2 - 3) // stride + 1
    patches = []
    for dy in range(3):
        for dx in range(3):
            patches.append(
                xp[:, dy:dy + stride * Ho:stride, dx:dx + stride * Wo:stride, :])
    p = jnp.concatenate(patches, axis=-1)          # (N, Ho, Wo, 9*C), bf16
    return p.reshape(N * Ho * Wo, 9 * C), (Ho, Wo)


def bottleneck_forward(x_nchw, params, stride):
    x = jnp.transpose(x_nchw, (0, 2, 3, 1))        # NHWC
    N, H, W, Cin = x.shape
    x_bf = x.astype(jnp.bfloat16)                  # bf16 activations throughout

    # conv1 (1x1) + BN + ReLU
    s1, b1 = bn_fold(*params["bn1"])
    C = params["w1"].shape[1]
    h1 = fused_matmul_bn(x_bf.reshape(N * H * W, Cin), params["w1"], s1, b1,
                         relu=True, out_dtype=jnp.bfloat16)
    h1 = h1.reshape(N, H, W, C)

    # conv2 (3x3, stride, pad=1) + BN + ReLU   (im2col emitted in bf16)
    patches, (Ho, Wo) = im2col_3x3(h1, stride)
    s2, b2 = bn_fold(*params["bn2"])
    h2 = fused_matmul_bn(patches, params["w2"], s2, b2,
                         relu=True, out_dtype=jnp.bfloat16)

    # shortcut path (same condition as the reference module)
    Cout = params["w3"].shape[1]                   # expansion * out_ch
    if stride == 2 or Cin != Cout:
        xs = x_bf[:, ::stride, ::stride, :]        # 1x1 conv w/ stride -> subsample
        ss, bs = bn_fold(*params["bns"])
        shortcut = fused_matmul_bn(xs.reshape(N * Ho * Wo, Cin),
                                   params["ws"], ss, bs,
                                   relu=False, out_dtype=jnp.bfloat16)
    else:
        shortcut = x_bf.reshape(N * H * W, Cin)

    # conv3 (1x1) + BN + residual add (fused; no post-add ReLU in the reference)
    s3, b3 = bn_fold(*params["bn3"])
    out = fused_matmul_bn(h2, params["w3"], s3, b3, relu=False,
                          residual=shortcut, out_dtype=jnp.float32)
    out = out.reshape(N, Ho, Wo, Cout)
    return jnp.transpose(out, (0, 3, 1, 2))        # back to NCHW


# ----------------------------- parameter init ------------------------------

def make_bn_params(key, c):
    k1, k2, k3, k4 = jax.random.split(key, 4)
    gamma = jax.random.uniform(k1, (c,), minval=0.5, maxval=1.5)
    beta = jax.random.normal(k2, (c,)) * 0.1
    mean = jax.random.normal(k3, (c,)) * 0.1
    var = jax.random.uniform(k4, (c,), minval=0.5, maxval=1.5)
    return gamma, beta, mean, var


def make_params(key, in_ch, out_ch, expansion=4):
    ks = jax.random.split(key, 8)
    cexp = expansion * out_ch
    return {
        # GEMM-layout weights (K, C_out); w2 rows ordered (dy, dx, c_in)
        "w1": jax.random.normal(ks[0], (in_ch, out_ch)) * 0.1,
        "w2": jax.random.normal(ks[1], (9 * out_ch, out_ch)) * 0.05,
        "w3": jax.random.normal(ks[2], (out_ch, cexp)) * 0.1,
        "ws": jax.random.normal(ks[3], (in_ch, cexp)) * 0.1,
        "bn1": make_bn_params(ks[4], out_ch),
        "bn2": make_bn_params(ks[5], out_ch),
        "bn3": make_bn_params(ks[6], cexp),
        "bns": make_bn_params(ks[7], cexp),
    }


# --------------------------------- main -------------------------------------

if __name__ == "__main__":
    N, in_ch, H, W = 2, 64, 16, 16
    out_ch, expansion, stride = 32, 4, 2

    key = jax.random.PRNGKey(0)
    kx, kp = jax.random.split(key)
    x = jax.random.normal(kx, (N, in_ch, H, W), dtype=jnp.float32)
    params = make_params(kp, in_ch, out_ch, expansion)

    fwd = jax.jit(functools.partial(bottleneck_forward, stride=stride))
    out = jax.block_until_ready(fwd(x, params))

    assert out.shape == (N, expansion * out_ch, H // stride, W // stride), out.shape
    assert bool(jnp.all(jnp.isfinite(out)))
    print("KERNEL_OK")
</pallas_src>

<mosaic_0001>
module attributes {stable_mosaic.version = 11 : i64} {
  func.func @_fused_gemm_kernel(%arg0: i32, %arg1: i32, %arg2: i32, %arg3: memref<512x128xbf16, #tpu.memory_space<vmem>>, %arg4: memref<128x128xbf16, #tpu.memory_space<vmem>>, %arg5: memref<1x128xf32, #tpu.memory_space<vmem>>, %arg6: memref<512x128xbf16, #tpu.memory_space<vmem>>, %arg7: memref<512x128xf32, #tpu.memory_space<vmem>>) attributes {dimension_semantics = [#tpu.dimension_semantics<parallel>, #tpu.dimension_semantics<parallel>, #tpu.dimension_semantics<arbitrary>], iteration_bounds = array<i64: 1, 1, 1>, scalar_prefetch = 0 : i64, scratch_operands = 1 : i64, tpu.core_type = #tpu.core_type<tc>, window_params = [{transform_indices = @transform_0, window_bounds = array<i64: 512, 128>}, {transform_indices = @transform_1, window_bounds = array<i64: 128, 128>}, {transform_indices = @transform_2, window_bounds = array<i64: 1, 128>}, {transform_indices = @transform_3, window_bounds = array<i64: 512, 128>}]} {
    %c0_i32 = arith.constant 0 : i32
    %0 = arith.cmpi eq, %arg2, %c0_i32 : i32
    %1 = arith.extui %0 : i1 to i32
    %c0_i32_0 = arith.constant 0 : i32
    %2 = arith.cmpi ne, %1, %c0_i32_0 : i32
    scf.if %2 {
      %cst_10 = arith.constant 0.000000e+00 : f32
      %12 = vector.broadcast %cst_10 : f32 to vector<512x128xf32>
      %c0_11 = arith.constant 0 : index
      %c0_12 = arith.constant 0 : index
      %13 = vector.load %arg7[%c0_11, %c0_12] : memref<512x128xf32, #tpu.memory_space<vmem>>, vector<512x128xf32>
      tpu.vector_store %arg7[%c0_11, %c0_12], %12 {strides = array<i32>} : memref<512x128xf32, #tpu.memory_space<vmem>>, vector<512x128xf32>,
    } else {
    }
    %c0 = arith.constant 0 : index
    %c0_1 = arith.constant 0 : index
    %3 = vector.load %arg7[%c0, %c0_1] : memref<512x128xf32, #tpu.memory_space<vmem>>, vector<512x128xf32>
    %c0_2 = arith.constant 0 : index
    %c0_3 = arith.constant 0 : index
    %4 = vector.load %arg3[%c0_2, %c0_3] : memref<512x128xbf16, #tpu.memory_space<vmem>>, vector<512x128xbf16>
    %c0_4 = arith.constant 0 : index
    %c0_5 = arith.constant 0 : index
    %5 = vector.load %arg4[%c0_4, %c0_5] : memref<128x128xbf16, #tpu.memory_space<vmem>>, vector<128x128xbf16>
    %cst = arith.constant dense<0.000000e+00> : vector<512x128xf32>
    %6 = tpu.matmul %4, %5, %cst {dimension_numbers = #tpu.dot_dimension_numbers<[1], [0], [0], [1], [0, 0, 1, 1], [], []>} : vector<512x128xbf16>, vector<128x128xbf16>, vector<512x128xf32> -> vector<512x128xf32>
    %7 = arith.addf %3, %6 : vector<512x128xf32>
    %c0_6 = arith.constant 0 : index
    %c0_7 = arith.constant 0 : index
    %8 = vector.load %arg7[%c0_6, %c0_7] : memref<512x128xf32, #tpu.memory_space<vmem>>, vector<512x128xf32>
    tpu.vector_store %arg7[%c0_6, %c0_7], %7 {strides = array<i32>} : memref<512x128xf32, #tpu.memory_space<vmem>>, vector<512x128xf32>,
    %c0_i32_8 = arith.constant 0 : i32
    %9 = arith.cmpi eq, %arg2, %c0_i32_8 : i32
    %10 = arith.extui %9 : i1 to i32
    %c0_i32_9 = arith.constant 0 : i32
    %11 = arith.cmpi ne, %10, %c0_i32_9 : i32
    scf.if %11 {
      %c0_10 = arith.constant 0 : index
      %c0_11 = arith.constant 0 : index
      %12 = vector.load %arg7[%c0_10, %c0_11] : memref<512x128xf32, #tpu.memory_space<vmem>>, vector<512x128xf32>
      %c0_12 = arith.constant 0 : index
      %c0_13 = arith.constant 0 : index
      %13 = vector.load %arg5[%c0_12, %c0_13] : memref<1x128xf32, #tpu.memory_space<vmem>>, vector<1x128xf32>
      %14 = vector.broadcast %13 : vector<1x128xf32> to vector<512x128xf32>
      %15 = arith.addf %12, %14 : vector<512x128xf32>
      %cst_14 = arith.constant 0.000000e+00 : f32
      %16 = vector.broadcast %cst_14 : f32 to vector<512x128xf32>
      %17 = arith.maximumf %15, %16 : vector<512x128xf32>
      %18 = arith.truncf %17 : vector<512x128xf32> to vector<512x128xbf16>
      %c0_15 = arith.constant 0 : index
      %c0_16 = arith.constant 0 : index
      %19 = vector.load %arg6[%c0_15, %c0_16] : memref<512x128xbf16, #tpu.memory_space<vmem>>, vector<512x128xbf16>
      tpu.vector_store %arg6[%c0_15, %c0_16], %18 {strides = array<i32>} : memref<512x128xbf16, #tpu.memory_space<vmem>>, vector<512x128xbf16>,
    } else {
    }
    return
  }
  func.func @transform_0(%arg0: i32, %arg1: i32, %arg2: i32) -> (i32, i32) {
    %c0_i32 = arith.constant 0 : i32
    return %arg0, %arg2 : i32, i32
  }
  func.func @transform_1(%arg0: i32, %arg1: i32, %arg2: i32) -> (i32, i32) {
    %c0_i32 = arith.constant 0 : i32
    return %arg2, %arg1 : i32, i32
  }
  func.func @transform_2(%arg0: i32, %arg1: i32, %arg2: i32) -> (i32, i32) {
    %c0_i32 = arith.constant 0 : i32
    %c0_i32_0 = arith.constant 0 : i32
    return %c0_i32, %arg1 : i32, i32
  }
  func.func @transform_3(%arg0: i32, %arg1: i32, %arg2: i32) -> (i32, i32) {
    %c0_i32 = arith.constant 0 : i32
    return %arg0, %arg1 : i32, i32
  }
}

module attributes {stable_mosaic.version = 11 : i64} {
  func.func @_fused_gemm_kernel(%arg0: i32, %arg1: i32, %arg2: i32, %arg3: memref<128x128xbf16, #tpu.memory_space<vmem>>, %arg4: memref<128x128xbf16, #tpu.memory_space<vmem>>, %arg5: memref<1x128xf32, #tpu.memory_space<vmem>>, %arg6: memref<128x128xbf16, #tpu.memory_space<vmem>>, %arg7: memref<128x128xf32, #tpu.memory_space<vmem>>) attributes {dimension_semantics = [#tpu.dimension_semantics<parallel>, #tpu.dimension_semantics<parallel>, #tpu.dimension_semantics<arbitrary>], iteration_bounds = array<i64: 1, 1, 3>, scalar_prefetch = 0 : i64, scratch_operands = 1 : i64, tpu.core_type = #tpu.core_type<tc>, window_params = [{transform_indices = @transform_0, window_bounds = array<i64: 128, 128>}, {transform_indices = @transform_1, window_bounds = array<i64: 128, 128>}, {transform_indices = @transform_2, window_bounds = array<i64: 1, 128>}, {transform_indices = @transform_3, window_bounds = array<i64: 128, 128>}]} {
    %c0_i32 = arith.constant 0 : i32
    %0 = arith.cmpi eq, %arg2, %c0_i32 : i32
    %1 = arith.extui %0 : i1 to i32
    %c0_i32_0 = arith.constant 0 : i32
    %2 = arith.cmpi ne, %1, %c0_i32_0 : i32
    scf.if %2 {
      %cst_9 = arith.constant 0.000000e+00 : f32
      %12 = vector.broadcast %cst_9 : f32 to vector<128x128xf32>
      %c0_10 = arith.constant 0 : index
      %c0_11 = arith.constant 0 : index
      %13 = vector.load %arg7[%c0_10, %c0_11] : memref<128x128xf32, #tpu.memory_space<vmem>>, vector<128x128xf32>
      tpu.vector_store %arg7[%c0_10, %c0_11], %12 {strides = array<i32>} : memref<128x128xf32, #tpu.memory_space<vmem>>, vector<128x128xf32>,
    } else {
    }
    %c0 = arith.constant 0 : index
    %c0_1 = arith.constant 0 : index
    %3 = vector.load %arg7[%c0, %c0_1] : memref<128x128xf32, #tpu.memory_space<vmem>>, vector<128x128xf32>
    %c0_2 = arith.constant 0 : index
    %c0_3 = arith.constant 0 : index
    %4 = vector.load %arg3[%c0_2, %c0_3] : memref<128x128xbf16, #tpu.memory_space<vmem>>, vector<128x128xbf16>
    %c0_4 = arith.constant 0 : index
    %c0_5 = arith.constant 0 : index
    %5 = vector.load %arg4[%c0_4, %c0_5] : memref<128x128xbf16, #tpu.memory_space<vmem>>, vector<128x128xbf16>
    %cst = arith.constant dense<0.000000e+00> : vector<128x128xf32>
    %6 = tpu.matmul %4, %5, %cst {dimension_numbers = #tpu.dot_dimension_numbers<[1], [0], [0], [1], [0, 0, 1, 1], [], []>} : vector<128x128xbf16>, vector<128x128xbf16>, vector<128x128xf32> -> vector<128x128xf32>
    %7 = arith.addf %3, %6 : vector<128x128xf32>
    %c0_6 = arith.constant 0 : index
    %c0_7 = arith.constant 0 : index
    %8 = vector.load %arg7[%c0_6, %c0_7] : memref<128x128xf32, #tpu.memory_space<vmem>>, vector<128x128xf32>
    tpu.vector_store %arg7[%c0_6, %c0_7], %7 {strides = array<i32>} : memref<128x128xf32, #tpu.memory_space<vmem>>, vector<128x128xf32>,
    %c2_i32 = arith.constant 2 : i32
    %9 = arith.cmpi eq, %arg2, %c2_i32 : i32
    %10 = arith.extui %9 : i1 to i32
    %c0_i32_8 = arith.constant 0 : i32
    %11 = arith.cmpi ne, %10, %c0_i32_8 : i32
    scf.if %11 {
      %c0_9 = arith.constant 0 : index
      %c0_10 = arith.constant 0 : index
      %12 = vector.load %arg7[%c0_9, %c0_10] : memref<128x128xf32, #tpu.memory_space<vmem>>, vector<128x128xf32>
      %c0_11 = arith.constant 0 : index
      %c0_12 = arith.constant 0 : index
      %13 = vector.load %arg5[%c0_11, %c0_12] : memref<1x128xf32, #tpu.memory_space<vmem>>, vector<1x128xf32>
      %14 = vector.broadcast %13 : vector<1x128xf32> to vector<128x128xf32>
      %15 = arith.addf %12, %14 : vector<128x128xf32>
      %cst_13 = arith.constant 0.000000e+00 : f32
      %16 = vector.broadcast %cst_13 : f32 to vector<128x128xf32>
      %17 = arith.maximumf %15, %16 : vector<128x128xf32>
      %18 = arith.truncf %17 : vector<128x128xf32> to vector<128x128xbf16>
      %c0_14 = arith.constant 0 : index
      %c0_15 = arith.constant 0 : index
      %19 = vector.load %arg6[%c0_14, %c0_15] : memref<128x128xbf16, #tpu.memory_space<vmem>>, vector<128x128xbf16>
      tpu.vector_store %arg6[%c0_14, %c0_15], %18 {strides = array<i32>} : memref<128x128xbf16, #tpu.memory_space<vmem>>, vector<128x128xbf16>,
    } else {
    }
    return
  }
  func.func @transform_0(%arg0: i32, %arg1: i32, %arg2: i32) -> (i32, i32) {
    %c0_i32 = arith.constant 0 : i32
    return %arg0, %arg2 : i32, i32
  }
  func.func @transform_1(%arg0: i32, %arg1: i32, %arg2: i32) -> (i32, i32) {
    %c0_i32 = arith.constant 0 : i32
    return %arg2, %arg1 : i32, i32
  }
  func.func @transform_2(%arg0: i32, %arg1: i32, %arg2: i32) -> (i32, i32) {
    %c0_i32 = arith.constant 0 : i32
    %c0_i32_0 = arith.constant 0 : i32
    return %c0_i32, %arg1 : i32, i32
  }
  func.func @transform_3(%arg0: i32, %arg1: i32, %arg2: i32) -> (i32, i32) {
    %c0_i32 = arith.constant 0 : i32
    return %arg0, %arg1 : i32, i32
  }
}

module attributes {stable_mosaic.version = 11 : i64} {
  func.func @_fused_gemm_kernel(%arg0: i32, %arg1: i32, %arg2: i32, %arg3: memref<128x128xbf16, #tpu.memory_space<vmem>>, %arg4: memref<128x128xbf16, #tpu.memory_space<vmem>>, %arg5: memref<1x128xf32, #tpu.memory_space<vmem>>, %arg6: memref<128x128xbf16, #tpu.memory_space<vmem>>, %arg7: memref<128x128xf32, #tpu.memory_space<vmem>>) attributes {dimension_semantics = [#tpu.dimension_semantics<parallel>, #tpu.dimension_semantics<parallel>, #tpu.dimension_semantics<arbitrary>], iteration_bounds = array<i64: 1, 1, 1>, scalar_prefetch = 0 : i64, scratch_operands = 1 : i64, tpu.core_type = #tpu.core_type<tc>, window_params = [{transform_indices = @transform_0, window_bounds = array<i64: 128, 128>}, {transform_indices = @transform_1, window_bounds = array<i64: 128, 128>}, {transform_indices = @transform_2, window_bounds = array<i64: 1, 128>}, {transform_indices = @transform_3, window_bounds = array<i64: 128, 128>}]} {
    %c0_i32 = arith.constant 0 : i32
    %0 = arith.cmpi eq, %arg2, %c0_i32 : i32
    %1 = arith.extui %0 : i1 to i32
    %c0_i32_0 = arith.constant 0 : i32
    %2 = arith.cmpi ne, %1, %c0_i32_0 : i32
    scf.if %2 {
      %cst_10 = arith.constant 0.000000e+00 : f32
      %12 = vector.broadcast %cst_10 : f32 to vector<128x128xf32>
      %c0_11 = arith.constant 0 : index
      %c0_12 = arith.constant 0 : index
      %13 = vector.load %arg7[%c0_11, %c0_12] : memref<128x128xf32, #tpu.memory_space<vmem>>, vector<128x128xf32>
      tpu.vector_store %arg7[%c0_11, %c0_12], %12 {strides = array<i32>} : memref<128x128xf32, #tpu.memory_space<vmem>>, vector<128x128xf32>,
    } else {
    }
    %c0 = arith.constant 0 : index
    %c0_1 = arith.constant 0 : index
    %3 = vector.load %arg7[%c0, %c0_1] : memref<128x128xf32, #tpu.memory_space<vmem>>, vector<128x128xf32>
    %c0_2 = arith.constant 0 : index
    %c0_3 = arith.constant 0 : index
    %4 = vector.load %arg3[%c0_2, %c0_3] : memref<128x128xbf16, #tpu.memory_space<vmem>>, vector<128x128xbf16>
    %c0_4 = arith.constant 0 : index
    %c0_5 = arith.constant 0 : index
    %5 = vector.load %arg4[%c0_4, %c0_5] : memref<128x128xbf16, #tpu.memory_space<vmem>>, vector<128x128xbf16>
    %cst = arith.constant dense<0.000000e+00> : vector<128x128xf32>
    %6 = tpu.matmul %4, %5, %cst {dimension_numbers = #tpu.dot_dimension_numbers<[1], [0], [0], [1], [0, 0, 1, 1], [], []>} : vector<128x128xbf16>, vector<128x128xbf16>, vector<128x128xf32> -> vector<128x128xf32>
    %7 = arith.addf %3, %6 : vector<128x128xf32>
    %c0_6 = arith.constant 0 : index
    %c0_7 = arith.constant 0 : index
    %8 = vector.load %arg7[%c0_6, %c0_7] : memref<128x128xf32, #tpu.memory_space<vmem>>, vector<128x128xf32>
    tpu.vector_store %arg7[%c0_6, %c0_7], %7 {strides = array<i32>} : memref<128x128xf32, #tpu.memory_space<vmem>>, vector<128x128xf32>,
    %c0_i32_8 = arith.constant 0 : i32
    %9 = arith.cmpi eq, %arg2, %c0_i32_8 : i32
    %10 = arith.extui %9 : i1 to i32
    %c0_i32_9 = arith.constant 0 : i32
    %11 = arith.cmpi ne, %10, %c0_i32_9 : i32
    scf.if %11 {
      %c0_10 = arith.constant 0 : index
      %c0_11 = arith.constant 0 : index
      %12 = vector.load %arg7[%c0_10, %c0_11] : memref<128x128xf32, #tpu.memory_space<vmem>>, vector<128x128xf32>
      %c0_12 = arith.constant 0 : index
      %c0_13 = arith.constant 0 : index
      %13 = vector.load %arg5[%c0_12, %c0_13] : memref<1x128xf32, #tpu.memory_space<vmem>>, vector<1x128xf32>
      %14 = vector.broadcast %13 : vector<1x128xf32> to vector<128x128xf32>
      %15 = arith.addf %12, %14 : vector<128x128xf32>
      %16 = arith.truncf %15 : vector<128x128xf32> to vector<128x128xbf16>
      %c0_14 = arith.constant 0 : index
      %c0_15 = arith.constant 0 : index
      %17 = vector.load %arg6[%c0_14, %c0_15] : memref<128x128xbf16, #tpu.memory_space<vmem>>, vector<128x128xbf16>
      tpu.vector_store %arg6[%c0_14, %c0_15], %16 {strides = array<i32>} : memref<128x128xbf16, #tpu.memory_space<vmem>>, vector<128x128xbf16>,
    } else {
    }
    return
  }
  func.func @transform_0(%arg0: i32, %arg1: i32, %arg2: i32) -> (i32, i32) {
    %c0_i32 = arith.constant 0 : i32
    return %arg0, %arg2 : i32, i32
  }
  func.func @transform_1(%arg0: i32, %arg1: i32, %arg2: i32) -> (i32, i32) {
    %c0_i32 = arith.constant 0 : i32
    return %arg2, %arg1 : i32, i32
  }
  func.func @transform_2(%arg0: i32, %arg1: i32, %arg2: i32) -> (i32, i32) {
    %c0_i32 = arith.constant 0 : i32
    %c0_i32_0 = arith.constant 0 : i32
    return %c0_i32, %arg1 : i32, i32
  }
  func.func @transform_3(%arg0: i32, %arg1: i32, %arg2: i32) -> (i32, i32) {
    %c0_i32 = arith.constant 0 : i32
    return %arg0, %arg1 : i32, i32
  }
}

module attributes {stable_mosaic.version = 11 : i64} {
  func.func @_fused_gemm_add_kernel(%arg0: i32, %arg1: i32, %arg2: i32, %arg3: memref<128x128xbf16, #tpu.memory_space<vmem>>, %arg4: memref<128x128xbf16, #tpu.memory_space<vmem>>, %arg5: memref<1x128xf32, #tpu.memory_space<vmem>>, %arg6: memref<128x128xbf16, #tpu.memory_space<vmem>>, %arg7: memref<128x128xf32, #tpu.memory_space<vmem>>, %arg8: memref<128x128xf32, #tpu.memory_space<vmem>>) attributes {dimension_semantics = [#tpu.dimension_semantics<parallel>, #tpu.dimension_semantics<parallel>, #tpu.dimension_semantics<arbitrary>], iteration_bounds = array<i64: 1, 1, 1>, scalar_prefetch = 0 : i64, scratch_operands = 1 : i64, tpu.core_type = #tpu.core_type<tc>, window_params = [{transform_indices = @transform_0, window_bounds = array<i64: 128, 128>}, {transform_indices = @transform_1, window_bounds = array<i64: 128, 128>}, {transform_indices = @transform_2, window_bounds = array<i64: 1, 128>}, {transform_indices = @transform_3, window_bounds = array<i64: 128, 128>}, {transform_indices = @transform_4, window_bounds = array<i64: 128, 128>}]} {
    %c0_i32 = arith.constant 0 : i32
    %0 = arith.cmpi eq, %arg2, %c0_i32 : i32
    %1 = arith.extui %0 : i1 to i32
    %c0_i32_0 = arith.constant 0 : i32
    %2 = arith.cmpi ne, %1, %c0_i32_0 : i32
    scf.if %2 {
      %cst_10 = arith.constant 0.000000e+00 : f32
      %12 = vector.broadcast %cst_10 : f32 to vector<128x128xf32>
      %c0_11 = arith.constant 0 : index
      %c0_12 = arith.constant 0 : index
      %13 = vector.load %arg8[%c0_11, %c0_12] : memref<128x128xf32, #tpu.memory_space<vmem>>, vector<128x128xf32>
      tpu.vector_store %arg8[%c0_11, %c0_12], %12 {strides = array<i32>} : memref<128x128xf32, #tpu.memory_space<vmem>>, vector<128x128xf32>,
    } else {
    }
    %c0 = arith.constant 0 : index
    %c0_1 = arith.constant 0 : index
    %3 = vector.load %arg8[%c0, %c0_1] : memref<128x128xf32, #tpu.memory_space<vmem>>, vector<128x128xf32>
    %c0_2 = arith.constant 0 : index
    %c0_3 = arith.constant 0 : index
    %4 = vector.load %arg3[%c0_2, %c0_3] : memref<128x128xbf16, #tpu.memory_space<vmem>>, vector<128x128xbf16>
    %c0_4 = arith.constant 0 : index
    %c0_5 = arith.constant 0 : index
    %5 = vector.load %arg4[%c0_4, %c0_5] : memref<128x128xbf16, #tpu.memory_space<vmem>>, vector<128x128xbf16>
    %cst = arith.constant dense<0.000000e+00> : vector<128x128xf32>
    %6 = tpu.matmul %4, %5, %cst {dimension_numbers = #tpu.dot_dimension_numbers<[1], [0], [0], [1], [0, 0, 1, 1], [], []>} : vector<128x128xbf16>, vector<128x128xbf16>, vector<128x128xf32> -> vector<128x128xf32>
    %7 = arith.addf %3, %6 : vector<128x128xf32>
    %c0_6 = arith.constant 0 : index
    %c0_7 = arith.constant 0 : index
    %8 = vector.load %arg8[%c0_6, %c0_7] : memref<128x128xf32, #tpu.memory_space<vmem>>, vector<128x128xf32>
    tpu.vector_store %arg8[%c0_6, %c0_7], %7 {strides = array<i32>} : memref<128x128xf32, #tpu.memory_space<vmem>>, vector<128x128xf32>,
    %c0_i32_8 = arith.constant 0 : i32
    %9 = arith.cmpi eq, %arg2, %c0_i32_8 : i32
    %10 = arith.extui %9 : i1 to i32
    %c0_i32_9 = arith.constant 0 : i32
    %11 = arith.cmpi ne, %10, %c0_i32_9 : i32
    scf.if %11 {
      %c0_10 = arith.constant 0 : index
      %c0_11 = arith.constant 0 : index
      %12 = vector.load %arg8[%c0_10, %c0_11] : memref<128x128xf32, #tpu.memory_space<vmem>>, vector<128x128xf32>
      %c0_12 = arith.constant 0 : index
      %c0_13 = arith.constant 0 : index
      %13 = vector.load %arg5[%c0_12, %c0_13] : memref<1x128xf32, #tpu.memory_space<vmem>>, vector<1x128xf32>
      %14 = vector.broadcast %13 : vector<1x128xf32> to vector<128x128xf32>
      %15 = arith.addf %12, %14 : vector<128x128xf32>
      %c0_14 = arith.constant 0 : index
      %c0_15 = arith.constant 0 : index
      %16 = vector.load %arg6[%c0_14, %c0_15] : memref<128x128xbf16, #tpu.memory_space<vmem>>, vector<128x128xbf16>
      %17 = arith.extf %16 : vector<128x128xbf16> to vector<128x128xf32>
      %18 = arith.addf %15, %17 : vector<128x128xf32>
      %c0_16 = arith.constant 0 : index
      %c0_17 = arith.constant 0 : index
      %19 = vector.load %arg7[%c0_16, %c0_17] : memref<128x128xf32, #tpu.memory_space<vmem>>, vector<128x128xf32>
      tpu.vector_store %arg7[%c0_16, %c0_17], %18 {strides = array<i32>} : memref<128x128xf32, #tpu.memory_space<vmem>>, vector<128x128xf32>,
    } else {
    }
    return
  }
  func.func @transform_0(%arg0: i32, %arg1: i32, %arg2: i32) -> (i32, i32) {
    %c0_i32 = arith.constant 0 : i32
    return %arg0, %arg2 : i32, i32
  }
  func.func @transform_1(%arg0: i32, %arg1: i32, %arg2: i32) -> (i32, i32) {
    %c0_i32 = arith.constant 0 : i32
    return %arg2, %arg1 : i32, i32
  }
  func.func @transform_2(%arg0: i32, %arg1: i32, %arg2: i32) -> (i32, i32) {
    %c0_i32 = arith.constant 0 : i32
    %c0_i32_0 = arith.constant 0 : i32
    return %c0_i32, %arg1 : i32, i32
  }
  func.func @transform_3(%arg0: i32, %arg1: i32, %arg2: i32) -> (i32, i32) {
    %c0_i32 = arith.constant 0 : i32
    return %arg0, %arg1 : i32, i32
  }
  func.func @transform_4(%arg0: i32, %arg1: i32, %arg2: i32) -> (i32, i32) {
    %c0_i32 = arith.constant 0 : i32
    return %arg0, %arg1 : i32, i32
  }
}

</mosaic_0001>

<llo_original>
// kernel: bottleneck_forward.4
$region0: #{bottleneck_forward.4}
  #allocation0 [shape = 'u32[]', space=smem, size = 0x4, offset = 0x4, fixed_abs, tag = 'smem constant byte address 0x4 - core index']
  #allocation1 [shape = 'u32[144,128]{1,0:T(1,128)}', space=vmem, size = 0x12000, scoped, tag = 'internal scratch']
  #allocation2 [shape = 'f32[512,128]{1,0:T(8,128)}', space=vmem, size = 0x40000, scoped, tag = 'scratch operand']
  %s0 = inlined_call_operand.vmem [shape: bf16[512,128], index: 0, kind: input, shape index: {}]
  %s1 = inlined_call_operand.vmem [shape: bf16[128,128], index: 1, kind: input, shape index: {}]
  %s2 = inlined_call_operand.vmem [shape: f32[1,128], index: 2, kind: input, shape index: {}]
  %s3 = inlined_call_operand.vmem [shape: bf16[512,128], index: 3, kind: output, shape index: {}]
  %s4 = sld [smem:[#allocation0]]
  $region30: #{bottleneck_forward.4} parent=0
    _
  %s6 = ssub.s32 1, %s4
  %s7 = scalar_select 0, %s6, %s4
  // Predicated region
  $region2: #{bottleneck_forward.4} parent=0 // pred_check
    _
  $region3: #{bottleneck_forward.4} parent=0 // pred_check_branch
    %9 = sbr.rel (0) target = $region5
  $region4: #{bottleneck_forward.4} parent=0 // pred_region
    _
  $region5: #{bottleneck_forward.4} parent=0 // pred_fallthru
    _
  // Predicated region
  $region6: #{bottleneck_forward.4} parent=0 // pred_check
    _
  $region7: #{bottleneck_forward.4} parent=0 // pred_check_branch
    %11 = sbr.rel (0) target = $region9
  $region8: #{bottleneck_forward.4} parent=0 // pred_region
    _
  $region9: #{bottleneck_forward.4} parent=0 // pred_fallthru
    _
  // Predicated region
  $region10: #{bottleneck_forward.4} parent=0 // pred_check
    _
  $region11: #{bottleneck_forward.4} parent=0 // pred_check_branch
    %13 = sbr.rel (0) target = $region13
  $region12: #{bottleneck_forward.4} parent=0 // pred_region
    _
  $region13: #{bottleneck_forward.4} parent=0 // pred_fallthru
    _
  %p15 = scmp.eq.s32.totalorder 0, 0
  // Predicated region
  $region14: #{bottleneck_forward.4} parent=0 // pred_check
    %p16 = pneg %p15
  $region15: #{bottleneck_forward.4} parent=0 // pred_check_branch
    %18 = sbr.rel (%p16) target = $region17
  $region16: #{bottleneck_forward.4} parent=0 // pred_region
    %19 = vst [vmem:[#allocation2] sm:$0xff] 0.0
    %20 = vst [vmem:[#allocation2 + $0x8] sm:$0xff] 0.0
    %21 = vst [vmem:[#allocation2 + $0x10] sm:$0xff] 0.0
    %22 = vst [vmem:[#allocation2 + $0x18] sm:$0xff] 0.0
    %23 = vst [vmem:[#allocation2 + $0x20] sm:$0xff] 0.0
    %24 = vst [vmem:[#allocation2 + $0x28] sm:$0xff] 0.0
    %25 = vst [vmem:[#allocation2 + $0x30] sm:$0xff] 0.0
    %26 = vst [vmem:[#allocation2 + $0x38] sm:$0xff] 0.0
    %27 = vst [vmem:[#allocation2 + $0x40] sm:$0xff] 0.0
    %28 = vst [vmem:[#allocation2 + $0x48] sm:$0xff] 0.0
    %29 = vst [vmem:[#allocation2 + $0x50] sm:$0xff] 0.0
    %30 = vst [vmem:[#allocation2 + $0x58] sm:$0xff] 0.0
    %31 = vst [vmem:[#allocation2 + $0x60] sm:$0xff] 0.0
    %32 = vst [vmem:[#allocation2 + $0x68] sm:$0xff] 0.0
    %33 = vst [vmem:[#allocation2 + $0x70] sm:$0xff] 0.0
    %34 = vst [vmem:[#allocation2 + $0x78] sm:$0xff] 0.0
    %35 = vst [vmem:[#allocation2 + $0x80] sm:$0xff] 0.0
    %36 = vst [vmem:[#allocation2 + $0x88] sm:$0xff] 0.0
    %37 = vst [vmem:[#allocation2 + $0x90] sm:$0xff] 0.0
    %38 = vst [vmem:[#allocation2 + $0x98] sm:$0xff] 0.0
    %39 = vst [vmem:[#allocation2 + $0xa0] sm:$0xff] 0.0
    %40 = vst [vmem:[#allocation2 + $0xa8] sm:$0xff] 0.0
    %41 = vst [vmem:[#allocation2 + $0xb0] sm:$0xff] 0.0
    %42 = vst [vmem:[#allocation2 + $0xb8] sm:$0xff] 0.0
    %43 = vst [vmem:[#allocation2 + $0xc0] sm:$0xff] 0.0
    %44 = vst [vmem:[#allocation2 + $0xc8] sm:$0xff] 0.0
    %45 = vst [vmem:[#allocation2 + $0xd0] sm:$0xff] 0.0
    %46 = vst [vmem:[#allocation2 + $0xd8] sm:$0xff] 0.0
    %47 = vst [vmem:[#allocation2 + $0xe0] sm:$0xff] 0.0
    %48 = vst [vmem:[#allocation2 + $0xe8] sm:$0xff] 0.0
    %49 = vst [vmem:[#allocation2 + $0xf0] sm:$0xff] 0.0
    %50 = vst [vmem:[#allocation2 + $0xf8] sm:$0xff] 0.0
    %51 = vst [vmem:[#allocation2 + $0x100] sm:$0xff] 0.0
    %52 = vst [vmem:[#allocation2 + $0x108] sm:$0xff] 0.0
    %53 = vst [vmem:[#allocation2 + $0x110] sm:$0xff] 0.0
    %54 = vst [vmem:[#allocation2 + $0x118] sm:$0xff] 0.0
    %55 = vst [vmem:[#allocation2 + $0x120] sm:$0xff] 0.0
    %56 = vst [vmem:[#allocation2 + $0x128] sm:$0xff] 0.0
    %57 = vst [vmem:[#allocation2 + $0x130] sm:$0xff] 0.0
    %58 = vst [vmem:[#allocation2 + $0x138] sm:$0xff] 0.0
    %59 = vst [vmem:[#allocation2 + $0x140] sm:$0xff] 0.0
    %60 = vst [vmem:[#allocation2 + $0x148] sm:$0xff] 0.0
    %61 = vst [vmem:[#allocation2 + $0x150] sm:$0xff] 0.0
    %62 = vst [vmem:[#allocation2 + $0x158] sm:$0xff] 0.0
    %63 = vst [vmem:[#allocation2 + $0x160] sm:$0xff] 0.0
    %64 = vst [vmem:[#allocation2 + $0x168] sm:$0xff] 0.0
    %65 = vst [vmem:[#allocation2 + $0x170] sm:$0xff] 0.0
    %66 = vst [vmem:[#allocation2 + $0x178] sm:$0xff] 0.0
    %67 = vst [vmem:[#allocation2 + $0x180] sm:$0xff] 0.0
    %68 = vst [vmem:[#allocation2 + $0x188] sm:$0xff] 0.0
    %69 = vst [vmem:[#allocation2 + $0x190] sm:$0xff] 0.0
    %70 = vst [vmem:[#allocation2 + $0x198] sm:$0xff] 0.0
    %71 = vst [vmem:[#allocation2 + $0x1a0] sm:$0xff] 0.0
    %72 = vst [vmem:[#allocation2 + $0x1a8] sm:$0xff] 0.0
    %73 = vst [vmem:[#allocation2 + $0x1b0] sm:$0xff] 0.0
    %74 = vst [vmem:[#allocation2 + $0x1b8] sm:$0xff] 0.0
    %75 = vst [vmem:[#allocation2 + $0x1c0] sm:$0xff] 0.0
    %76 = vst [vmem:[#allocation2 + $0x1c8] sm:$0xff] 0.0
    %77 = vst [vmem:[#allocation2 + $0x1d0] sm:$0xff] 0.0
    %78 = vst [vmem:[#allocation2 + $0x1d8] sm:$0xff] 0.0
    %79 = vst [vmem:[#allocation2 + $0x1e0] sm:$0xff] 0.0
    %80 = vst [vmem:[#allocation2 + $0x1e8] sm:$0xff] 0.0
    %81 = vst [vmem:[#allocation2 + $0x1f0] sm:$0xff] 0.0
    %82 = vst [vmem:[#allocation2 + $0x1f8] sm:$0xff] 0.0
  $region17: #{bottleneck_forward.4} parent=0 // pred_fallthru
    _
  %v83 = vld [vmem:[#allocation2] sm:$0xff]
  %v84 = vld [vmem:[#allocation2 + $0x8] sm:$0xff]
  %v85 = vld [vmem:[#allocation2 + $0x10] sm:$0xff]
  %v86 = vld [vmem:[#allocation2 + $0x18] sm:$0xff]
  %v87 = vld [vmem:[#allocation2 + $0x20] sm:$0xff]
  %v88 = vld [vmem:[#allocation2 + $0x28] sm:$0xff]
  %v89 = vld [vmem:[#allocation2 + $0x30] sm:$0xff]
  %v90 = vld [vmem:[#allocation2 + $0x38] sm:$0xff]
  %v91 = vld [vmem:[#allocation2 + $0x40] sm:$0xff]
  %v92 = vld [vmem:[#allocation2 + $0x48] sm:$0xff]
  %v93 = vld [vmem:[#allocation2 + $0x50] sm:$0xff]
  %v94 = vld [vmem:[#allocation2 + $0x58] sm:$0xff]
  %v95 = vld [vmem:[#allocation2 + $0x60] sm:$0xff]
  %v96 = vld [vmem:[#allocation2 + $0x68] sm:$0xff]
  %v97 = vld [vmem:[#allocation2 + $0x70] sm:$0xff]
  %v98 = vld [vmem:[#allocation2 + $0x78] sm:$0xff]
  %v99 = vld [vmem:[#allocation2 + $0x80] sm:$0xff]
  %v100 = vld [vmem:[#allocation2 + $0x88] sm:$0xff]
  %v101 = vld [vmem:[#allocation2 + $0x90] sm:$0xff]
  %v102 = vld [vmem:[#allocation2 + $0x98] sm:$0xff]
  %v103 = vld [vmem:[#allocation2 + $0xa0] sm:$0xff]
  %v104 = vld [vmem:[#allocation2 + $0xa8] sm:$0xff]
  %v105 = vld [vmem:[#allocation2 + $0xb0] sm:$0xff]
  %v106 = vld [vmem:[#allocation2 + $0xb8] sm:$0xff]
  %v107 = vld [vmem:[#allocation2 + $0xc0] sm:$0xff]
  %v108 = vld [vmem:[#allocation2 + $0xc8] sm:$0xff]
  %v109 = vld [vmem:[#allocation2 + $0xd0] sm:$0xff]
  %v110 = vld [vmem:[#allocation2 + $0xd8] sm:$0xff]
  %v111 = vld [vmem:[#allocation2 + $0xe0] sm:$0xff]
  %v112 = vld [vmem:[#allocation2 + $0xe8] sm:$0xff]
  %v113 = vld [vmem:[#allocation2 + $0xf0] sm:$0xff]
  %v114 = vld [vmem:[#allocation2 + $0xf8] sm:$0xff]
  %v115 = vld [vmem:[#allocation2 + $0x100] sm:$0xff]
  %v116 = vld [vmem:[#allocation2 + $0x108] sm:$0xff]
  %v117 = vld [vmem:[#allocation2 + $0x110] sm:$0xff]
  %v118 = vld [vmem:[#allocation2 + $0x118] sm:$0xff]
  %v119 = vld [vmem:[#allocation2 + $0x120] sm:$0xff]
  %v120 = vld [vmem:[#allocation2 + $0x128] sm:$0xff]
  %v121 = vld [vmem:[#allocation2 + $0x130] sm:$0xff]
  %v122 = vld [vmem:[#allocation2 + $0x138] sm:$0xff]
  %v123 = vld [vmem:[#allocation2 + $0x140] sm:$0xff]
  %v124 = vld [vmem:[#allocation2 + $0x148] sm:$0xff]
  %v125 = vld [vmem:[#allocation2 + $0x150] sm:$0xff]
  %v126 = vld [vmem:[#allocation2 + $0x158] sm:$0xff]
  %v127 = vld [vmem:[#allocation2 + $0x160] sm:$0xff]
  %v128 = vld [vmem:[#allocation2 + $0x168] sm:$0xff]
  %v129 = vld [vmem:[#allocation2 + $0x170] sm:$0xff]
  %v130 = vld [vmem:[#allocation2 + $0x178] sm:$0xff]
  %v131 = vld [vmem:[#allocation2 + $0x180] sm:$0xff]
  %v132 = vld [vmem:[#allocation2 + $0x188] sm:$0xff]
  %v133 = vld [vmem:[#allocation2 + $0x190] sm:$0xff]
  %v134 = vld [vmem:[#allocation2 + $0x198] sm:$0xff]
  %v135 = vld [vmem:[#allocation2 + $0x1a0] sm:$0xff]
  %v136 = vld [vmem:[#allocation2 + $0x1a8] sm:$0xff]
  %v137 = vld [vmem:[#allocation2 + $0x1b0] sm:$0xff]
  %v138 = vld [vmem:[#allocation2 + $0x1b8] sm:$0xff]
  %v139 = vld [vmem:[#allocation2 + $0x1c0] sm:$0xff]
  %v140 = vld [vmem:[#allocation2 + $0x1c8] sm:$0xff]
  %v141 = vld [vmem:[#allocation2 + $0x1d0] sm:$0xff]
  %v142 = vld [vmem:[#allocation2 + $0x1d8] sm:$0xff]
  %v143 = vld [vmem:[#allocation2 + $0x1e0] sm:$0xff]
  %v144 = vld [vmem:[#allocation2 + $0x1e8] sm:$0xff]
  %v145 = vld [vmem:[#allocation2 + $0x1f0] sm:$0xff]
  %v146 = vld [vmem:[#allocation2 + $0x1f8] sm:$0xff]
  %v147 = vld [vmem:[%s0] sm:$0xf]
  %v148 = vld [vmem:[%s0 + $0x4] sm:$0xf]
  %v149 = vld [vmem:[%s0 + $0x8] sm:$0xf]
  %v150 = vld [vmem:[%s0 + $0xc] sm:$0xf]
  %v151 = vld [vmem:[%s0 + $0x10] sm:$0xf]
  %v152 = vld [vmem:[%s0 + $0x14] sm:$0xf]
  %v153 = vld [vmem:[%s0 + $0x18] sm:$0xf]
  %v154 = vld [vmem:[%s0 + $0x1c] sm:$0xf]
  %v155 = vld [vmem:[%s0 + $0x20] sm:$0xf]
  %v156 = vld [vmem:[%s0 + $0x24] sm:$0xf]
  %v157 = vld [vmem:[%s0 + $0x28] sm:$0xf]
  %v158 = vld [vmem:[%s0 + $0x2c] sm:$0xf]
  %v159 = vld [vmem:[%s0 + $0x30] sm:$0xf]
  %v160 = vld [vmem:[%s0 + $0x34] sm:$0xf]
  %v161 = vld [vmem:[%s0 + $0x38] sm:$0xf]
  %v162 = vld [vmem:[%s0 + $0x3c] sm:$0xf]
  %v163 = vld [vmem:[%s0 + $0x40] sm:$0xf]
  %v164 = vld [vmem:[%s0 + $0x44] sm:$0xf]
  %v165 = vld [vmem:[%s0 + $0x48] sm:$0xf]
  %v166 = vld [vmem:[%s0 + $0x4c] sm:$0xf]
  %v167 = vld [vmem:[%s0 + $0x50] sm:$0xf]
  %v168 = vld [vmem:[%s0 + $0x54] sm:$0xf]
  %v169 = vld [vmem:[%s0 + $0x58] sm:$0xf]
  %v170 = vld [vmem:[%s0 + $0x5c] sm:$0xf]
  %v171 = vld [vmem:[%s0 + $0x60] sm:$0xf]
  %v172 = vld [vmem:[%s0 + $0x64] sm:$0xf]
  %v173 = vld [vmem:[%s0 + $0x68] sm:$0xf]
  %v174 = vld [vmem:[%s0 + $0x6c] sm:$0xf]
  %v175 = vld [vmem:[%s0 + $0x70] sm:$0xf]
  %v176 = vld [vmem:[%s0 + $0x74] sm:$0xf]
  %v177 = vld [vmem:[%s0 + $0x78] sm:$0xf]
  %v178 = vld [vmem:[%s0 + $0x7c] sm:$0xf]
  %v179 = vld [vmem:[%s0 + $0x80] sm:$0xf]
  %v180 = vld [vmem:[%s0 + $0x84] sm:$0xf]
  %v181 = vld [vmem:[%s0 + $0x88] sm:$0xf]
  %v182 = vld [vmem:[%s0 + $0x8c] sm:$0xf]
  %v183 = vld [vmem:[%s0 + $0x90] sm:$0xf]
  %v184 = vld [vmem:[%s0 + $0x94] sm:$0xf]
  %v185 = vld [vmem:[%s0 + $0x98] sm:$0xf]
  %v186 = vld [vmem:[%s0 + $0x9c] sm:$0xf]
  %v187 = vld [vmem:[%s0 + $0xa0] sm:$0xf]
  %v188 = vld [vmem:[%s0 + $0xa4] sm:$0xf]
  %v189 = vld [vmem:[%s0 + $0xa8] sm:$0xf]
  %v190 = vld [vmem:[%s0 + $0xac] sm:$0xf]
  %v191 = vld [vmem:[%s0 + $0xb0] sm:$0xf]
  %v192 = vld [vmem:[%s0 + $0xb4] sm:$0xf]
  %v193 = vld [vmem:[%s0 + $0xb8] sm:$0xf]
  %v194 = vld [vmem:[%s0 + $0xbc] sm:$0xf]
  %v195 = vld [vmem:[%s0 + $0xc0] sm:$0xf]
  %v196 = vld [vmem:[%s0 + $0xc4] sm:$0xf]
  %v197 = vld [vmem:[%s0 + $0xc8] sm:$0xf]
  %v198 = vld [vmem:[%s0 + $0xcc] sm:$0xf]
  %v199 = vld [vmem:[%s0 + $0xd0] sm:$0xf]
  %v200 = vld [vmem:[%s0 + $0xd4] sm:$0xf]
  %v201 = vld [vmem:[%s0 + $0xd8] sm:$0xf]
  %v202 = vld [vmem:[%s0 + $0xdc] sm:$0xf]
  %v203 = vld [vmem:[%s0 + $0xe0] sm:$0xf]
  %v204 = vld [vmem:[%s0 + $0xe4] sm:$0xf]
  %v205 = vld [vmem:[%s0 + $0xe8] sm:$0xf]
  %v206 = vld [vmem:[%s0 + $0xec] sm:$0xf]
  %v207 = vld [vmem:[%s0 + $0xf0] sm:$0xf]
  %v208 = vld [vmem:[%s0 + $0xf4] sm:$0xf]
  %v209 = vld [vmem:[%s0 + $0xf8] sm:$0xf]
  %v210 = vld [vmem:[%s0 + $0xfc] sm:$0xf]
  %v211 = vld [vmem:[%s1] sm:$0xf]
  %v212 = vld [vmem:[%s1 + $0x4] sm:$0xf]
  %v213 = vld [vmem:[%s1 + $0x8] sm:$0xf]
  %v214 = vld [vmem:[%s1 + $0xc] sm:$0xf]
  %v215 = vld [vmem:[%s1 + $0x10] sm:$0xf]
  %v216 = vld [vmem:[%s1 + $0x14] sm:$0xf]
  %v217 = vld [vmem:[%s1 + $0x18] sm:$0xf]
  %v218 = vld [vmem:[%s1 + $0x1c] sm:$0xf]
  %v219 = vld [vmem:[%s1 + $0x20] sm:$0xf]
  %v220 = vld [vmem:[%s1 + $0x24] sm:$0xf]
  %v221 = vld [vmem:[%s1 + $0x28] sm:$0xf]
  %v222 = vld [vmem:[%s1 + $0x2c] sm:$0xf]
  %v223 = vld [vmem:[%s1 + $0x30] sm:$0xf]
  %v224 = vld [vmem:[%s1 + $0x34] sm:$0xf]
  %v225 = vld [vmem:[%s1 + $0x38] sm:$0xf]
  %v226 = vld [vmem:[%s1 + $0x3c] sm:$0xf]
  %v291 = vunpack.c.l.b16 %v147
  %v292 = vunpack.c.l.b16 %v148
  %v293 = vunpack.c.l.b16 %v149
  %v294 = vunpack.c.l.b16 %v150
  %v295 = vunpack.c.l.b16 %v151
  %v296 = vunpack.c.l.b16 %v152
  %v297 = vunpack.c.l.b16 %v153
  %v298 = vunpack.c.l.b16 %v154
  %v299 = vunpack.c.l.b16 %v155
  %v300 = vunpack.c.l.b16 %v156
  %v301 = vunpack.c.l.b16 %v157
  %v302 = vunpack.c.l.b16 %v158
  %v303 = vunpack.c.l.b16 %v159
  %v304 = vunpack.c.l.b16 %v160
  %v305 = vunpack.c.l.b16 %v161
  %v306 = vunpack.c.l.b16 %v162
  %v307 = vunpack.c.l.b16 %v163
  %v308 = vunpack.c.l.b16 %v164
  %v309 = vunpack.c.l.b16 %v165
  %v310 = vunpack.c.l.b16 %v166
  %v311 = vunpack.c.l.b16 %v167
  %v312 = vunpack.c.l.b16 %v168
  %v313 = vunpack.c.l.b16 %v169
  %v314 = vunpack.c.l.b16 %v170
  %v315 = vunpack.c.l.b16 %v171
  %v316 = vunpack.c.l.b16 %v172
  %v317 = vunpack.c.l.b16 %v173
  %v318 = vunpack.c.l.b16 %v174
  %v319 = vunpack.c.l.b16 %v175
  %v320 = vunpack.c.l.b16 %v176
  %v321 = vunpack.c.l.b16 %v177
  %v322 = vunpack.c.l.b16 %v178
  %v323 = vunpack.c.l.b16 %v179
  %v324 = vunpack.c.l.b16 %v180
  %v325 = vunpack.c.l.b16 %v181
  %v326 = vunpack.c.l.b16 %v182
  %v327 = vunpack.c.l.b16 %v183
  %v328 = vunpack.c.l.b16 %v184
  %v329 = vunpack.c.l.b16 %v185
  %v330 = vunpack.c.l.b16 %v186
  %v331 = vunpack.c.l.b16 %v187
  %v332 = vunpack.c.l.b16 %v188
  %v333 = vunpack.c.l.b16 %v189
  %v334 = vunpack.c.l.b16 %v190
  %v335 = vunpack.c.l.b16 %v191
  %v336 = vunpack.c.l.b16 %v192
  %v337 = vunpack.c.l.b16 %v193
  %v338 = vunpack.c.l.b16 %v194
  %v339 = vunpack.c.l.b16 %v195
  %v340 = vunpack.c.l.b16 %v196
  %v341 = vunpack.c.l.b16 %v197
  %v342 = vunpack.c.l.b16 %v198
  %v343 = vunpack.c.l.b16 %v199
  %v344 = vunpack.c.l.b16 %v200
  %v345 = vunpack.c.l.b16 %v201
  %v346 = vunpack.c.l.b16 %v202
  %v347 = vunpack.c.l.b16 %v203
  %v348 = vunpack.c.l.b16 %v204
  %v349 = vunpack.c.l.b16 %v205
  %v350 = vunpack.c.l.b16 %v206
  %v351 = vunpack.c.l.b16 %v207
  %v352 = vunpack.c.l.b16 %v208
  %v353 = vunpack.c.l.b16 %v209
  %v354 = vunpack.c.l.b16 %v210
  %v355 = vpack.c.b16 %v292, %v291
  %v356 = vpack.c.b16 %v294, %v293
  %v357 = vpack.c.b16 %v296, %v295
  %v358 = vpack.c.b16 %v298, %v297
  %v359 = vpack.c.b16 %v300, %v299
  %v360 = vpack.c.b16 %v302, %v301
  %v361 = vpack.c.b16 %v304, %v303
  %v362 = vpack.c.b16 %v306, %v305
  %v363 = vpack.c.b16 %v308, %v307
  %v364 = vpack.c.b16 %v310, %v309
  %v365 = vpack.c.b16 %v312, %v311
  %v366 = vpack.c.b16 %v314, %v313
  %v367 = vpack.c.b16 %v316, %v315
  %v368 = vpack.c.b16 %v318, %v317
  %v369 = vpack.c.b16 %v320, %v319
  %v370 = vpack.c.b16 %v322, %v321
  %v371 = vpack.c.b16 %v324, %v323
  %v372 = vpack.c.b16 %v326, %v325
  %v373 = vpack.c.b16 %v328, %v327
  %v374 = vpack.c.b16 %v330, %v329
  %v375 = vpack.c.b16 %v332, %v331
  %v376 = vpack.c.b16 %v334, %v333
  %v377 = vpack.c.b16 %v336, %v335
  %v378 = vpack.c.b16 %v338, %v337
  %v379 = vpack.c.b16 %v340, %v339
  %v380 = vpack.c.b16 %v342, %v341
  %v381 = vpack.c.b16 %v344, %v343
  %v382 = vpack.c.b16 %v346, %v345
  %v383 = vpack.c.b16 %v348, %v347
  %v384 = vpack.c.b16 %v350, %v349
  %v385 = vpack.c.b16 %v352, %v351
  %v386 = vpack.c.b16 %v354, %v353
  %v435 = vunpack.c.l.b16 %v211
  %v436 = vunpack.c.l.b16 %v212
  %v437 = vunpack.c.l.b16 %v213
  %v438 = vunpack.c.l.b16 %v214
  %v439 = vunpack.c.l.b16 %v215
  %v440 = vunpack.c.l.b16 %v216
  %v441 = vunpack.c.l.b16 %v217
  %v442 = vunpack.c.l.b16 %v218
  %v443 = vunpack.c.l.b16 %v219
  %v444 = vunpack.c.l.b16 %v220
  %v445 = vunpack.c.l.b16 %v221
  %v446 = vunpack.c.l.b16 %v222
  %v447 = vunpack.c.l.b16 %v223
  %v448 = vunpack.c.l.b16 %v224
  %v449 = vunpack.c.l.b16 %v225
  %v450 = vunpack.c.l.b16 %v226
  %v451 = vpack.c.b16 %v436, %v435
  %v452 = vpack.c.b16 %v438, %v437
  %v453 = vpack.c.b16 %v440, %v439
  %v454 = vpack.c.b16 %v442, %v441
  %v455 = vpack.c.b16 %v444, %v443
  %v456 = vpack.c.b16 %v446, %v445
  %v457 = vpack.c.b16 %v448, %v447
  %v458 = vpack.c.b16 %v450, %v449
  %467 = vmatprep.subr.bf16.mxu0 0
  %468 = vmatpush1.bf16.msra.mxu0 %v458
  %469 = vmatprep.subr.bf16.mxu0 0
  %470 = vmatpush1.bf16.msra.mxu0 %v457
  %471 = vmatprep.subr.bf16.mxu0 0
  %472 = vmatpush1.bf16.msra.mxu0 %v456
  %473 = vmatprep.subr.bf16.mxu0 0
  %474 = vmatpush1.bf16.msra.mxu0 %v455
  %475 = vmatprep.subr.bf16.mxu0 0
  %476 = vmatpush1.bf16.msra.mxu0 %v454
  %477 = vmatprep.subr.bf16.mxu0 0
  %478 = vmatpush1.bf16.msra.mxu0 %v453
  %479 = vmatprep.subr.bf16.mxu0 0
  %480 = vmatpush1.bf16.msra.mxu0 %v452
  %481 = vmatprep.subr.bf16.mxu0 0
  %482 = vmatpush1.bf16.msra.mxu0 %v451
  %483 = vmatprep.subr.bf16.mxu0 0
  %484 = vmatpush2.bf16.msra.mxu0 0
  %485 = vmatprep.subr.bf16.mxu0 0
  %486 = vmatpush2.bf16.msra.mxu0 0
  %487 = vmatprep.subr.bf16.mxu0 0
  %488 = vmatpush2.bf16.msra.mxu0 0
  %489 = vmatprep.subr.bf16.mxu0 0
  %490 = vmatpush2.bf16.msra.mxu0 0
  %491 = vmatprep.subr.bf16.mxu0 0
  %492 = vmatpush2.bf16.msra.mxu0 0
  %493 = vmatprep.subr.bf16.mxu0 0
  %494 = vmatpush2.bf16.msra.mxu0 0
  %495 = vmatprep.subr.bf16.mxu0 0
  %496 = vmatpush2.bf16.msra.mxu0 0
  %497 = vmatprep.subr.bf16.mxu0 0
  %498 = vmatpush2.bf16.msra.mxu0 0
  %499 = vmatprep.mubr.bf16.mxu0 0
  %500 = vmatmul.mubr.bf16.gmra.mxu0 %v355
  %v501 = vpop.f32.mrf.mxu0
  %v502 = vadd.f32 0.0, %v501
  %v503 = vpop.f32.mrf.mxu0
  %v504 = vpop.f32.mrf.mxu0
  %v505 = vadd.f32 0.0, %v504
  %v506 = vpop.f32.mrf.mxu0
  %507 = vmatprep.mubr.bf16.mxu0 0
  %508 = vmatmul.mubr.bf16.gmra.mxu0 %v356
  %v509 = vpop.f32.mrf.mxu0
  %v510 = vadd.f32 0.0, %v509
  %v511 = vpop.f32.mrf.mxu0
  %v512 = vpop.f32.mrf.mxu0
  %v513 = vadd.f32 0.0, %v512
  %v514 = vpop.f32.mrf.mxu0
  %515 = vmatprep.mubr.bf16.mxu0 0
  %516 = vmatmul.mubr.bf16.gmra.mxu0 %v357
  %v517 = vpop.f32.mrf.mxu0
  %v518 = vadd.f32 0.0, %v517
  %v519 = vpop.f32.mrf.mxu0
  %v520 = vpop.f32.mrf.mxu0
  %v521 = vadd.f32 0.0, %v520
  %v522 = vpop.f32.mrf.mxu0
  %523 = vmatprep.mubr.bf16.mxu0 0
  %524 = vmatmul.mubr.bf16.gmra.mxu0 %v358
  %v525 = vpop.f32.mrf.mxu0
  %v526 = vadd.f32 0.0, %v525
  %v527 = vpop.f32.mrf.mxu0
  %v528 = vpop.f32.mrf.mxu0
  %v529 = vadd.f32 0.0, %v528
  %v530 = vpop.f32.mrf.mxu0
  %531 = vmatprep.mubr.bf16.mxu0 0
  %532 = vmatmul.mubr.bf16.gmra.mxu0 %v359
  %v533 = vpop.f32.mrf.mxu0
  %v534 = vadd.f32 0.0, %v533
  %v535 = vpop.f32.mrf.mxu0
  %v536 = vpop.f32.mrf.mxu0
  %v537 = vadd.f32 0.0, %v536
  %v538 = vpop.f32.mrf.mxu0
  %539 = vmatprep.mubr.bf16.mxu0 0
  %540 = vmatmul.mubr.bf16.gmra.mxu0 %v360
  %v541 = vpop.f32.mrf.mxu0
  %v542 = vadd.f32 0.0, %v541
  %v543 = vpop.f32.mrf.mxu0
  %v544 = vpop.f32.mrf.mxu0
  %v545 = vadd.f32 0.0, %v544
  %v546 = vpop.f32.mrf.mxu0
  %547 = vmatprep.mubr.bf16.mxu0 0
  %548 = vmatmul.mubr.bf16.gmra.mxu0 %v361
  %v549 = vpop.f32.mrf.mxu0
  %v550 = vadd.f32 0.0, %v549
  %v551 = vpop.f32.mrf.mxu0
  %v552 = vpop.f32.mrf.mxu0
  %v553 = vadd.f32 0.0, %v552
  %v554 = vpop.f32.mrf.mxu0
  %555 = vmatprep.mubr.bf16.mxu0 0
  %556 = vmatmul.mubr.bf16.gmra.mxu0 %v362
  %v557 = vpop.f32.mrf.mxu0
  %v558 = vadd.f32 0.0, %v557
  %v559 = vpop.f32.mrf.mxu0
  %v560 = vpop.f32.mrf.mxu0
  %v561 = vadd.f32 0.0, %v560
  %v562 = vpop.f32.mrf.mxu0
  %563 = vmatprep.mubr.bf16.mxu0 0
  %564 = vmatmul.mubr.bf16.gmra.mxu0 %v363
  %v565 = vpop.f32.mrf.mxu0
  %v566 = vadd.f32 0.0, %v565
  %v567 = vpop.f32.mrf.mxu0
  %v568 = vpop.f32.mrf.mxu0
  %v569 = vadd.f32 0.0, %v568
  %v570 = vpop.f32.mrf.mxu0
  %571 = vmatprep.mubr.bf16.mxu0 0
  %572 = vmatmul.mubr.bf16.gmra.mxu0 %v364
  %v573 = vpop.f32.mrf.mxu0
  %v574 = vadd.f32 0.0, %v573
  %v575 = vpop.f32.mrf.mxu0
  %v576 = vpop.f32.mrf.mxu0
  %v577 = vadd.f32 0.0, %v576
  %v578 = vpop.f32.mrf.mxu0
  %579 = vmatprep.mubr.bf16.mxu0 0
  %580 = vmatmul.mubr.bf16.gmra.mxu0 %v365
  %v581 = vpop.f32.mrf.mxu0
  %v582 = vadd.f32 0.0, %v581
  %v583 = vpop.f32.mrf.mxu0
  %v584 = vpop.f32.mrf.mxu0
  %v585 = vadd.f32 0.0, %v584
  %v586 = vpop.f32.mrf.mxu0
  %587 = vmatprep.mubr.bf16.mxu0 0
  %588 = vmatmul.mubr.bf16.gmra.mxu0 %v366
  %v589 = vpop.f32.mrf.mxu0
  %v590 = vadd.f32 0.0, %v589
  %v591 = vpop.f32.mrf.mxu0
  %v592 = vpop.f32.mrf.mxu0
  %v593 = vadd.f32 0.0, %v592
  %v594 = vpop.f32.mrf.mxu0
  %595 = vmatprep.mubr.bf16.mxu0 0
  %596 = vmatmul.mubr.bf16.gmra.mxu0 %v367
  %v597 = vpop.f32.mrf.mxu0
  %v598 = vadd.f32 0.0, %v597
  %v599 = vpop.f32.mrf.mxu0
  %v600 = vpop.f32.mrf.mxu0
  %v601 = vadd.f32 0.0, %v600
  %v602 = vpop.f32.mrf.mxu0
  %603 = vmatprep.mubr.bf16.mxu0 0
  %604 = vmatmul.mubr.bf16.gmra.mxu0 %v368
  %v605 = vpop.f32.mrf.mxu0
  %v606 = vadd.f32 0.0, %v605
  %v607 = vpop.f32.mrf.mxu0
  %v608 = vpop.f32.mrf.mxu0
  %v609 = vadd.f32 0.0, %v608
  %v610 = vpop.f32.mrf.mxu0
  %611 = vmatprep.mubr.bf16.mxu0 0
  %612 = vmatmul.mubr.bf16.gmra.mxu0 %v369
  %v613 = vpop.f32.mrf.mxu0
  %v614 = vadd.f32 0.0, %v613
  %v615 = vpop.f32.mrf.mxu0
  %v616 = vpop.f32.mrf.mxu0
  %v617 = vadd.f32 0.0, %v616
  %v618 = vpop.f32.mrf.mxu0
  %619 = vmatprep.mubr.bf16.mxu0 0
  %620 = vmatmul.mubr.bf16.gmra.mxu0 %v370
  %v621 = vpop.f32.mrf.mxu0
  %v622 = vadd.f32 0.0, %v621
  %v623 = vpop.f32.mrf.mxu0
  %v624 = vpop.f32.mrf.mxu0
  %v625 = vadd.f32 0.0, %v624
  %v626 = vpop.f32.mrf.mxu0
  %627 = vmatprep.mubr.bf16.mxu0 0
  %628 = vmatmul.mubr.bf16.gmra.mxu0 %v371
  %v629 = vpop.f32.mrf.mxu0
  %v630 = vadd.f32 0.0, %v629
  %v631 = vpop.f32.mrf.mxu0
  %v632 = vpop.f32.mrf.mxu0
  %v633 = vadd.f32 0.0, %v632
  %v634 = vpop.f32.mrf.mxu0
  %635 = vmatprep.mubr.bf16.mxu0 0
  %636 = vmatmul.mubr.bf16.gmra.mxu0 %v372
  %v637 = vpop.f32.mrf.mxu0
  %v638 = vadd.f32 0.0, %v637
  %v639 = vpop.f32.mrf.mxu0
  %v640 = vpop.f32.mrf.mxu0
  %v641 = vadd.f32 0.0, %v640
  %v642 = vpop.f32.mrf.mxu0
  %643 = vmatprep.mubr.bf16.mxu0 0
  %644 = vmatmul.mubr.bf16.gmra.mxu0 %v373
  %v645 = vpop.f32.mrf.mxu0
  %v646 = vadd.f32 0.0, %v645
  %v647 = vpop.f32.mrf.mxu0
  %v648 = vpop.f32.mrf.mxu0
  %v649 = vadd.f32 0.0, %v648
  %v650 = vpop.f32.mrf.mxu0
  %651 = vmatprep.mubr.bf16.mxu0 0
  %652 = vmatmul.mubr.bf16.gmra.mxu0 %v374
  %v653 = vpop.f32.mrf.mxu0
  %v654 = vadd.f32 0.0, %v653
  %v655 = vpop.f32.mrf.mxu0
  %v656 = vpop.f32.mrf.mxu0
  %v657 = vadd.f32 0.0, %v656
  %v658 = vpop.f32.mrf.mxu0
  %659 = vmatprep.mubr.bf16.mxu0 0
  %660 = vmatmul.mubr.bf16.gmra.mxu0 %v375
  %v661 = vpop.f32.mrf.mxu0
  %v662 = vadd.f32 0.0, %v661
  %v663 = vpop.f32.mrf.mxu0
  %v664 = vpop.f32.mrf.mxu0
  %v665 = vadd.f32 0.0, %v664
  %v666 = vpop.f32.mrf.mxu0
  %667 = vmatprep.mubr.bf16.mxu0 0
  %668 = vmatmul.mubr.bf16.gmra.mxu0 %v376
  %v669 = vpop.f32.mrf.mxu0
  %v670 = vadd.f32 0.0, %v669
  %v671 = vpop.f32.mrf.mxu0
  %v672 = vpop.f32.mrf.mxu0
  %v673 = vadd.f32 0.0, %v672
  %v674 = vpop.f32.mrf.mxu0
  %675 = vmatprep.mubr.bf16.mxu0 0
  %676 = vmatmul.mubr.bf16.gmra.mxu0 %v377
  %v677 = vpop.f32.mrf.mxu0
  %v678 = vadd.f32 0.0, %v677
  %v679 = vpop.f32.mrf.mxu0
  %v680 = vpop.f32.mrf.mxu0
  %v681 = vadd.f32 0.0, %v680
  %v682 = vpop.f32.mrf.mxu0
  %683 = vmatprep.mubr.bf16.mxu0 0
  %684 = vmatmul.mubr.bf16.gmra.mxu0 %v378
  %v685 = vpop.f32.mrf.mxu0
  %v686 = vadd.f32 0.0, %v685
  %v687 = vpop.f32.mrf.mxu0
  %v688 = vpop.f32.mrf.mxu0
  %v689 = vadd.f32 0.0, %v688
  %v690 = vpop.f32.mrf.mxu0
  %691 = vmatprep.mubr.bf16.mxu0 0
  %692 = vmatmul.mubr.bf16.gmra.mxu0 %v379
  %v693 = vpop.f32.mrf.mxu0
  %v694 = vadd.f32 0.0, %v693
  %v695 = vpop.f32.mrf.mxu0
  %v696 = vpop.f32.mrf.mxu0
  %v697 = vadd.f32 0.0, %v696
  %v698 = vpop.f32.mrf.mxu0
  %699 = vmatprep.mubr.bf16.mxu0 0
  %700 = vmatmul.mubr.bf16.gmra.mxu0 %v380
  %v701 = vpop.f32.mrf.mxu0
  %v702 = vadd.f32 0.0, %v701
  %v703 = vpop.f32.mrf.mxu0
  %v704 = vpop.f32.mrf.mxu0
  %v705 = vadd.f32 0.0, %v704
  %v706 = vpop.f32.mrf.mxu0
  %707 = vmatprep.mubr.bf16.mxu0 0
  %708 = vmatmul.mubr.bf16.gmra.mxu0 %v381
  %v709 = vpop.f32.mrf.mxu0
  %v710 = vadd.f32 0.0, %v709
  %v711 = vpop.f32.mrf.mxu0
  %v712 = vpop.f32.mrf.mxu0
  %v713 = vadd.f32 0.0, %v712
  %v714 = vpop.f32.mrf.mxu0
  %715 = vmatprep.mubr.bf16.mxu0 0
  %716 = vmatmul.mubr.bf16.gmra.mxu0 %v382
  %v717 = vpop.f32.mrf.mxu0
  %v718 = vadd.f32 0.0, %v717
  %v719 = vpop.f32.mrf.mxu0
  %v720 = vpop.f32.mrf.mxu0
  %v721 = vadd.f32 0.0, %v720
  %v722 = vpop.f32.mrf.mxu0
  %723 = vmatprep.mubr.bf16.mxu0 0
  %724 = vmatmul.mubr.bf16.gmra.mxu0 %v383
  %v725 = vpop.f32.mrf.mxu0
  %v726 = vadd.f32 0.0, %v725
  %v727 = vpop.f32.mrf.mxu0
  %v728 = vpop.f32.mrf.mxu0
  %v729 = vadd.f32 0.0, %v728
  %v730 = vpop.f32.mrf.mxu0
  %731 = vmatprep.mubr.bf16.mxu0 0
  %732 = vmatmul.mubr.bf16.gmra.mxu0 %v384
  %v733 = vpop.f32.mrf.mxu0
  %v734 = vadd.f32 0.0, %v733
  %v735 = vpop.f32.mrf.mxu0
  %v736 = vpop.f32.mrf.mxu0
  %v737 = vadd.f32 0.0, %v736
  %v738 = vpop.f32.mrf.mxu0
  %739 = vmatprep.mubr.bf16.mxu0 0
  %740 = vmatmul.mubr.bf16.gmra.mxu0 %v385
  %v741 = vpop.f32.mrf.mxu0
  %v742 = vadd.f32 0.0, %v741
  %v743 = vpop.f32.mrf.mxu0
  %v744 = vpop.f32.mrf.mxu0
  %v745 = vadd.f32 0.0, %v744
  %v746 = vpop.f32.mrf.mxu0
  %747 = vmatprep.mubr.bf16.mxu0 0
  %748 = vmatmul.mubr.bf16.gmra.mxu0 %v386
  %v749 = vpop.f32.mrf.mxu0
  %v750 = vadd.f32 0.0, %v749
  %v751 = vpop.f32.mrf.mxu0
  %v752 = vpop.f32.mrf.mxu0
  %v753 = vadd.f32 0.0, %v752
  %v754 = vpop.f32.mrf.mxu0
  %755 = vdwg.mxu0
  %v756 = vadd.f32 %v83, %v502
  %v757 = vadd.f32 %v84, %v505
  %v758 = vadd.f32 %v85, %v510
  %v759 = vadd.f32 %v86, %v513
  %v760 = vadd.f32 %v87, %v518
  %v761 = vadd.f32 %v88, %v521
  %v762 = vadd.f32 %v89, %v526
  %v763 = vadd.f32 %v90, %v529
  %v764 = vadd.f32 %v91, %v534
  %v765 = vadd.f32 %v92, %v537
  %v766 = vadd.f32 %v93, %v542
  %v767 = vadd.f32 %v94, %v545
  %v768 = vadd.f32 %v95, %v550
  %v769 = vadd.f32 %v96, %v553
  %v770 = vadd.f32 %v97, %v558
  %v771 = vadd.f32 %v98, %v561
  %v772 = vadd.f32 %v99, %v566
  %v773 = vadd.f32 %v100, %v569
  %v774 = vadd.f32 %v101, %v574
  %v775 = vadd.f32 %v102, %v577
  %v776 = vadd.f32 %v103, %v582
  %v777 = vadd.f32 %v104, %v585
  %v778 = vadd.f32 %v105, %v590
  %v779 = vadd.f32 %v106, %v593
  %v780 = vadd.f32 %v107, %v598
  %v781 = vadd.f32 %v108, %v601
  %v782 = vadd.f32 %v109, %v606
  %v783 = vadd.f32 %v110, %v609
  %v784 = vadd.f32 %v111, %v614
  %v785 = vadd.f32 %v112, %v617
  %v786 = vadd.f32 %v113, %v622
  %v787 = vadd.f32 %v114, %v625
  %v788 = vadd.f32 %v115, %v630
  %v789 = vadd.f32 %v116, %v633
  %v790 = vadd.f32 %v117, %v638
  %v791 = vadd.f32 %v118, %v641
  %v792 = vadd.f32 %v119, %v646
  %v793 = vadd.f32 %v120, %v649
  %v794 = vadd.f32 %v121, %v654
  %v795 = vadd.f32 %v122, %v657
  %v796 = vadd.f32 %v123, %v662
  %v797 = vadd.f32 %v124, %v665
  %v798 = vadd.f32 %v125, %v670
  %v799 = vadd.f32 %v126, %v673
  %v800 = vadd.f32 %v127, %v678
  %v801 = vadd.f32 %v128, %v681
  %v802 = vadd.f32 %v129, %v686
  %v803 = vadd.f32 %v130, %v689
  %v804 = vadd.f32 %v131, %v694
  %v805 = vadd.f32 %v132, %v697
  %v806 = vadd.f32 %v133, %v702
  %v807 = vadd.f32 %v134, %v705
  %v808 = vadd.f32 %v135, %v710
  %v809 = vadd.f32 %v136, %v713
  %v810 = vadd.f32 %v137, %v718
  %v811 = vadd.f32 %v138, %v721
  %v812 = vadd.f32 %v139, %v726
  %v813 = vadd.f32 %v140, %v729
  %v814 = vadd.f32 %v141, %v734
  %v815 = vadd.f32 %v142, %v737
  %v816 = vadd.f32 %v143, %v742
  %v817 = vadd.f32 %v144, %v745
  %v818 = vadd.f32 %v145, %v750
  %v819 = vadd.f32 %v146, %v753
  %820 = vst [vmem:[#allocation2] sm:$0xff] %v756
  %821 = vst [vmem:[#allocation2 + $0x8] sm:$0xff] %v757
  %822 = vst [vmem:[#allocation2 + $0x10] sm:$0xff] %v758
  %823 = vst [vmem:[#allocation2 + $0x18] sm:$0xff] %v759
  %824 = vst [vmem:[#allocation2 + $0x20] sm:$0xff] %v760
  %825 = vst [vmem:[#allocation2 + $0x28] sm:$0xff] %v761
  %826 = vst [vmem:[#allocation2 + $0x30] sm:$0xff] %v762
  %827 = vst [vmem:[#allocation2 + $0x38] sm:$0xff] %v763
  %828 = vst [vmem:[#allocation2 + $0x40] sm:$0xff] %v764
  %829 = vst [vmem:[#allocation2 + $0x48] sm:$0xff] %v765
  %830 = vst [vmem:[#allocation2 + $0x50] sm:$0xff] %v766
  %831 = vst [vmem:[#allocation2 + $0x58] sm:$0xff] %v767
  %832 = vst [vmem:[#allocation2 + $0x60] sm:$0xff] %v768
  %833 = vst [vmem:[#allocation2 + $0x68] sm:$0xff] %v769
  %834 = vst [vmem:[#allocation2 + $0x70] sm:$0xff] %v770
  %835 = vst [vmem:[#allocation2 + $0x78] sm:$0xff] %v771
  %836 = vst [vmem:[#allocation2 + $0x80] sm:$0xff] %v772
  %837 = vst [vmem:[#allocation2 + $0x88] sm:$0xff] %v773
  %838 = vst [vmem:[#allocation2 + $0x90] sm:$0xff] %v774
  %839 = vst [vmem:[#allocation2 + $0x98] sm:$0xff] %v775
  %840 = vst [vmem:[#allocation2 + $0xa0] sm:$0xff] %v776
  %841 = vst [vmem:[#allocation2 + $0xa8] sm:$0xff] %v777
  %842 = vst [vmem:[#allocation2 + $0xb0] sm:$0xff] %v778
  %843 = vst [vmem:[#allocation2 + $0xb8] sm:$0xff] %v779
  %844 = vst [vmem:[#allocation2 + $0xc0] sm:$0xff] %v780
  %845 = vst [vmem:[#allocation2 + $0xc8] sm:$0xff] %v781
  %846 = vst [vmem:[#allocation2 + $0xd0] sm:$0xff] %v782
  %847 = vst [vmem:[#allocation2 + $0xd8] sm:$0xff] %v783
  %848 = vst [vmem:[#allocation2 + $0xe0] sm:$0xff] %v784
  %849 = vst [vmem:[#allocation2 + $0xe8] sm:$0xff] %v785
  %850 = vst [vmem:[#allocation2 + $0xf0] sm:$0xff] %v786
  %851 = vst [vmem:[#allocation2 + $0xf8] sm:$0xff] %v787
  %852 = vst [vmem:[#allocation2 + $0x100] sm:$0xff] %v788
  %853 = vst [vmem:[#allocation2 + $0x108] sm:$0xff] %v789
  %854 = vst [vmem:[#allocation2 + $0x110] sm:$0xff] %v790
  %855 = vst [vmem:[#allocation2 + $0x118] sm:$0xff] %v791
  %856 = vst [vmem:[#allocation2 + $0x120] sm:$0xff] %v792
  %857 = vst [vmem:[#allocation2 + $0x128] sm:$0xff] %v793
  %858 = vst [vmem:[#allocation2 + $0x130] sm:$0xff] %v794
  %859 = vst [vmem:[#allocation2 + $0x138] sm:$0xff] %v795
  %860 = vst [vmem:[#allocation2 + $0x140] sm:$0xff] %v796
  %861 = vst [vmem:[#allocation2 + $0x148] sm:$0xff] %v797
  %862 = vst [vmem:[#allocation2 + $0x150] sm:$0xff] %v798
  %863 = vst [vmem:[#allocation2 + $0x158] sm:$0xff] %v799
  %864 = vst [vmem:[#allocation2 + $0x160] sm:$0xff] %v800
  %865 = vst [vmem:[#allocation2 + $0x168] sm:$0xff] %v801
  %866 = vst [vmem:[#allocation2 + $0x170] sm:$0xff] %v802
  %867 = vst [vmem:[#allocation2 + $0x178] sm:$0xff] %v803
  %868 = vst [vmem:[#allocation2 + $0x180] sm:$0xff] %v804
  %869 = vst [vmem:[#allocation2 + $0x188] sm:$0xff] %v805
  %870 = vst [vmem:[#allocation2 + $0x190] sm:$0xff] %v806
  %871 = vst [vmem:[#allocation2 + $0x198] sm:$0xff] %v807
  %872 = vst [vmem:[#allocation2 + $0x1a0] sm:$0xff] %v808
  %873 = vst [vmem:[#allocation2 + $0x1a8] sm:$0xff] %v809
  %874 = vst [vmem:[#allocation2 + $0x1b0] sm:$0xff] %v810
  %875 = vst [vmem:[#allocation2 + $0x1b8] sm:$0xff] %v811
  %876 = vst [vmem:[#allocation2 + $0x1c0] sm:$0xff] %v812
  %877 = vst [vmem:[#allocation2 + $0x1c8] sm:$0xff] %v813
  %878 = vst [vmem:[#allocation2 + $0x1d0] sm:$0xff] %v814
  %879 = vst [vmem:[#allocation2 + $0x1d8] sm:$0xff] %v815
  %880 = vst [vmem:[#allocation2 + $0x1e0] sm:$0xff] %v816
  %881 = vst [vmem:[#allocation2 + $0x1e8] sm:$0xff] %v817
  %882 = vst [vmem:[#allocation2 + $0x1f0] sm:$0xff] %v818
  %883 = vst [vmem:[#allocation2 + $0x1f8] sm:$0xff] %v819
  // Predicated region
  $region18: #{bottleneck_forward.4} parent=0 // pred_check
    %p884 = pneg %p15
  $region19: #{bottleneck_forward.4} parent=0 // pred_check_branch
    %886 = sbr.rel (%p884) target = $region21
  $region20: #{bottleneck_forward.4} parent=0 // pred_region
    %v887 = vld [vmem:[#allocation2] sm:$0xff]
    %v888 = vld [vmem:[#allocation2 + $0x8] sm:$0xff]
    %v889 = vld [vmem:[#allocation2 + $0x10] sm:$0xff]
    %v890 = vld [vmem:[#allocation2 + $0x18] sm:$0xff]
    %v891 = vld [vmem:[#allocation2 + $0x20] sm:$0xff]
    %v892 = vld [vmem:[#allocation2 + $0x28] sm:$0xff]
    %v893 = vld [vmem:[#allocation2 + $0x30] sm:$0xff]
    %v894 = vld [vmem:[#allocation2 + $0x38] sm:$0xff]
    %v895 = vld [vmem:[#allocation2 + $0x40] sm:$0xff]
    %v896 = vld [vmem:[#allocation2 + $0x48] sm:$0xff]
    %v897 = vld [vmem:[#allocation2 + $0x50] sm:$0xff]
    %v898 = vld [vmem:[#allocation2 + $0x58] sm:$0xff]
    %v899 = vld [vmem:[#allocation2 + $0x60] sm:$0xff]
    %v900 = vld [vmem:[#allocation2 + $0x68] sm:$0xff]
    %v901 = vld [vmem:[#allocation2 + $0x70] sm:$0xff]
    %v902 = vld [vmem:[#allocation2 + $0x78] sm:$0xff]
    %v903 = vld [vmem:[#allocation2 + $0x80] sm:$0xff]
    %v904 = vld [vmem:[#allocation2 + $0x88] sm:$0xff]
    %v905 = vld [vmem:[#allocation2 + $0x90] sm:$0xff]
    %v906 = vld [vmem:[#allocation2 + $0x98] sm:$0xff]
    %v907 = vld [vmem:[#allocation2 + $0xa0] sm:$0xff]
    %v908 = vld [vmem:[#allocation2 + $0xa8] sm:$0xff]
    %v909 = vld [vmem:[#allocation2 + $0xb0] sm:$0xff]
    %v910 = vld [vmem:[#allocation2 + $0xb8] sm:$0xff]
    %v911 = vld [vmem:[#allocation2 + $0xc0] sm:$0xff]
    %v912 = vld [vmem:[#allocation2 + $0xc8] sm:$0xff]
    %v913 = vld [vmem:[#allocation2 + $0xd0] sm:$0xff]
    %v914 = vld [vmem:[#allocation2 + $0xd8] sm:$0xff]
    %v915 = vld [vmem:[#allocation2 + $0xe0] sm:$0xff]
    %v916 = vld [vmem:[#allocation2 + $0xe8] sm:$0xff]
    %v917 = vld [vmem:[#allocation2 + $0xf0] sm:$0xff]
    %v918 = vld [vmem:[#allocation2 + $0xf8] sm:$0xff]
    %v919 = vld [vmem:[#allocation2 + $0x100] sm:$0xff]
    %v920 = vld [vmem:[#allocation2 + $0x108] sm:$0xff]
    %v921 = vld [vmem:[#allocation2 + $0x110] sm:$0xff]
    %v922 = vld [vmem:[#allocation2 + $0x118] sm:$0xff]
    %v923 = vld [vmem:[#allocation2 + $0x120] sm:$0xff]
    %v924 = vld [vmem:[#allocation2 + $0x128] sm:$0xff]
    %v925 = vld [vmem:[#allocation2 + $0x130] sm:$0xff]
    %v926 = vld [vmem:[#allocation2 + $0x138] sm:$0xff]
    %v927 = vld [vmem:[#allocation2 + $0x140] sm:$0xff]
    %v928 = vld [vmem:[#allocation2 + $0x148] sm:$0xff]
    %v929 = vld [vmem:[#allocation2 + $0x150] sm:$0xff]
    %v930 = vld [vmem:[#allocation2 + $0x158] sm:$0xff]
    %v931 = vld [vmem:[#allocation2 + $0x160] sm:$0xff]
    %v932 = vld [vmem:[#allocation2 + $0x168] sm:$0xff]
    %v933 = vld [vmem:[#allocation2 + $0x170] sm:$0xff]
    %v934 = vld [vmem:[#allocation2 + $0x178] sm:$0xff]
    %v935 = vld [vmem:[#allocation2 + $0x180] sm:$0xff]
    %v936 = vld [vmem:[#allocation2 + $0x188] sm:$0xff]
    %v937 = vld [vmem:[#allocation2 + $0x190] sm:$0xff]
    %v938 = vld [vmem:[#allocation2 + $0x198] sm:$0xff]
    %v939 = vld [vmem:[#allocation2 + $0x1a0] sm:$0xff]
    %v940 = vld [vmem:[#allocation2 + $0x1a8] sm:$0xff]
    %v941 = vld [vmem:[#allocation2 + $0x1b0] sm:$0xff]
    %v942 = vld [vmem:[#allocation2 + $0x1b8] sm:$0xff]
    %v943 = vld [vmem:[#allocation2 + $0x1c0] sm:$0xff]
    %v944 = vld [vmem:[#allocation2 + $0x1c8] sm:$0xff]
    %v945 = vld [vmem:[#allocation2 + $0x1d0] sm:$0xff]
    %v946 = vld [vmem:[#allocation2 + $0x1d8] sm:$0xff]
    %v947 = vld [vmem:[#allocation2 + $0x1e0] sm:$0xff]
    %v948 = vld [vmem:[#allocation2 + $0x1e8] sm:$0xff]
    %v949 = vld [vmem:[#allocation2 + $0x1f0] sm:$0xff]
    %v950 = vld [vmem:[#allocation2 + $0x1f8] sm:$0xff]
    %v951 = vld [vmem:[%s2] sm:$0x1]
    %v953 = vlaneseq
    %v954 = vshrl.u32 %v953, 7
    %v955 = vsub.s32 0, %v954
    %v956 = vrot.slane %v951, %v955
    %v958 = vadd.f32 %v887, %v956
    %v959 = vadd.f32 %v888, %v956
    %v960 = vadd.f32 %v889, %v956
    %v961 = vadd.f32 %v890, %v956
    %v962 = vadd.f32 %v891, %v956
    %v963 = vadd.f32 %v892, %v956
    %v964 = vadd.f32 %v893, %v956
    %v965 = vadd.f32 %v894, %v956
    %v966 = vadd.f32 %v895, %v956
    %v967 = vadd.f32 %v896, %v956
    %v968 = vadd.f32 %v897, %v956
    %v969 = vadd.f32 %v898, %v956
    %v970 = vadd.f32 %v899, %v956
    %v971 = vadd.f32 %v900, %v956
    %v972 = vadd.f32 %v901, %v956
    %v973 = vadd.f32 %v902, %v956
    %v974 = vadd.f32 %v903, %v956
    %v975 = vadd.f32 %v904, %v956
    %v976 = vadd.f32 %v905, %v956
    %v977 = vadd.f32 %v906, %v956
    %v978 = vadd.f32 %v907, %v956
    %v979 = vadd.f32 %v908, %v956
    %v980 = vadd.f32 %v909, %v956
    %v981 = vadd.f32 %v910, %v956
    %v982 = vadd.f32 %v911, %v956
    %v983 = vadd.f32 %v912, %v956
    %v984 = vadd.f32 %v913, %v956
    %v985 = vadd.f32 %v914, %v956
    %v986 = vadd.f32 %v915, %v956
    %v987 = vadd.f32 %v916, %v956
    %v988 = vadd.f32 %v917, %v956
    %v989 = vadd.f32 %v918, %v956
    %v990 = vadd.f32 %v919, %v956
    %v991 = vadd.f32 %v920, %v956
    %v992 = vadd.f32 %v921, %v956
    %v993 = vadd.f32 %v922, %v956
    %v994 = vadd.f32 %v923, %v956
    %v995 = vadd.f32 %v924, %v956
    %v996 = vadd.f32 %v925, %v956
    %v997 = vadd.f32 %v926, %v956
    %v998 = vadd.f32 %v927, %v956
    %v999 = vadd.f32 %v928, %v956
    %v1000 = vadd.f32 %v929, %v956
    %v1001 = vadd.f32 %v930, %v956
    %v1002 = vadd.f32 %v931, %v956
    %v1003 = vadd.f32 %v932, %v956
    %v1004 = vadd.f32 %v933, %v956
    %v1005 = vadd.f32 %v934, %v956
    %v1006 = vadd.f32 %v935, %v956
    %v1007 = vadd.f32 %v936, %v956
    %v1008 = vadd.f32 %v937, %v956
    %v1009 = vadd.f32 %v938, %v956
    %v1010 = vadd.f32 %v939, %v956
    %v1011 = vadd.f32 %v940, %v956
    %v1012 = vadd.f32 %v941, %v956
    %v1013 = vadd.f32 %v942, %v956
    %v1014 = vadd.f32 %v943, %v956
    %v1015 = vadd.f32 %v944, %v956
    %v1016 = vadd.f32 %v945, %v956
    %v1017 = vadd.f32 %v946, %v956
    %v1018 = vadd.f32 %v947, %v956
    %v1019 = vadd.f32 %v948, %v956
    %v1020 = vadd.f32 %v949, %v956
    %v1021 = vadd.f32 %v950, %v956
    %v1022 = vmax.f32 %v958, 0.0
    %v1023 = vmax.f32 %v959, 0.0
    %v1024 = vmax.f32 %v960, 0.0
    %v1025 = vmax.f32 %v961, 0.0
    %v1026 = vmax.f32 %v962, 0.0
    %v1027 = vmax.f32 %v963, 0.0
    %v1028 = vmax.f32 %v964, 0.0
    %v1029 = vmax.f32 %v965, 0.0
    %v1030 = vmax.f32 %v966, 0.0
    %v1031 = vmax.f32 %v967, 0.0
    %v1032 = vmax.f32 %v968, 0.0
    %v1033 = vmax.f32 %v969, 0.0
    %v1034 = vmax.f32 %v970, 0.0
    %v1035 = vmax.f32 %v971, 0.0
    %v1036 = vmax.f32 %v972, 0.0
    %v1037 = vmax.f32 %v973, 0.0
    %v1038 = vmax.f32 %v974, 0.0
    %v1039 = vmax.f32 %v975, 0.0
    %v1040 = vmax.f32 %v976, 0.0
    %v1041 = vmax.f32 %v977, 0.0
    %v1042 = vmax.f32 %v978, 0.0
    %v1043 = vmax.f32 %v979, 0.0
    %v1044 = vmax.f32 %v980, 0.0
    %v1045 = vmax.f32 %v981, 0.0
    %v1046 = vmax.f32 %v982, 0.0
    %v1047 = vmax.f32 %v983, 0.0
    %v1048 = vmax.f32 %v984, 0.0
    %v1049 = vmax.f32 %v985, 0.0
    %v1050 = vmax.f32 %v986, 0.0
    %v1051 = vmax.f32 %v987, 0.0
    %v1052 = vmax.f32 %v988, 0.0
    %v1053 = vmax.f32 %v989, 0.0
    %v1054 = vmax.f32 %v990, 0.0
    %v1055 = vmax.f32 %v991, 0.0
    %v1056 = vmax.f32 %v992, 0.0
    %v1057 = vmax.f32 %v993, 0.0
    %v1058 = vmax.f32 %v994, 0.0
    %v1059 = vmax.f32 %v995, 0.0
    %v1060 = vmax.f32 %v996, 0.0
    %v1061 = vmax.f32 %v997, 0.0
    %v1062 = vmax.f32 %v998, 0.0
    %v1063 = vmax.f32 %v999, 0.0
    %v1064 = vmax.f32 %v1000, 0.0
    %v1065 = vmax.f32 %v1001, 0.0
    %v1066 = vmax.f32 %v1002, 0.0
    %v1067 = vmax.f32 %v1003, 0.0
    %v1068 = vmax.f32 %v1004, 0.0
    %v1069 = vmax.f32 %v1005, 0.0
    %v1070 = vmax.f32 %v1006, 0.0
    %v1071 = vmax.f32 %v1007, 0.0
    %v1072 = vmax.f32 %v1008, 0.0
    %v1073 = vmax.f32 %v1009, 0.0
    %v1074 = vmax.f32 %v1010, 0.0
    %v1075 = vmax.f32 %v1011, 0.0
    %v1076 = vmax.f32 %v1012, 0.0
    %v1077 = vmax.f32 %v1013, 0.0
    %v1078 = vmax.f32 %v1014, 0.0
    %v1079 = vmax.f32 %v1015, 0.0
    %v1080 = vmax.f32 %v1016, 0.0
    %v1081 = vmax.f32 %v1017, 0.0
    %v1082 = vmax.f32 %v1018, 0.0
    %v1083 = vmax.f32 %v1019, 0.0
    %v1084 = vmax.f32 %v1020, 0.0
    %v1085 = vmax.f32 %v1021, 0.0
    %v1086 = vpack.c.bf16 %v1023, %v1022
    %v1087 = vpack.c.bf16 %v1025, %v1024
    %v1088 = vpack.c.bf16 %v1027, %v1026
    %v1089 = vpack.c.bf16 %v1029, %v1028
    %v1090 = vpack.c.bf16 %v1031, %v1030
    %v1091 = vpack.c.bf16 %v1033, %v1032
    %v1092 = vpack.c.bf16 %v1035, %v1034
    %v1093 = vpack.c.bf16 %v1037, %v1036
    %v1094 = vpack.c.bf16 %v1039, %v1038
    %v1095 = vpack.c.bf16 %v1041, %v1040
    %v1096 = vpack.c.bf16 %v1043, %v1042
    %v1097 = vpack.c.bf16 %v1045, %v1044
    %v1098 = vpack.c.bf16 %v1047, %v1046
    %v1099 = vpack.c.bf16 %v1049, %v1048
    %v1100 = vpack.c.bf16 %v1051, %v1050
    %v1101 = vpack.c.bf16 %v1053, %v1052
    %v1102 = vpack.c.bf16 %v1055, %v1054
    %v1103 = vpack.c.bf16 %v1057, %v1056
    %v1104 = vpack.c.bf16 %v1059, %v1058
    %v1105 = vpack.c.bf16 %v1061, %v1060
    %v1106 = vpack.c.bf16 %v1063, %v1062
    %v1107 = vpack.c.bf16 %v1065, %v1064
    %v1108 = vpack.c.bf16 %v1067, %v1066
    %v1109 = vpack.c.bf16 %v1069, %v1068
    %v1110 = vpack.c.bf16 %v1071, %v1070
    %v1111 = vpack.c.bf16 %v1073, %v1072
    %v1112 = vpack.c.bf16 %v1075, %v1074
    %v1113 = vpack.c.bf16 %v1077, %v1076
    %v1114 = vpack.c.bf16 %v1079, %v1078
    %v1115 = vpack.c.bf16 %v1081, %v1080
    %v1116 = vpack.c.bf16 %v1083, %v1082
    %v1117 = vpack.c.bf16 %v1085, %v1084
    %v1150 = vunpack.c.l.b16 %v1086
    %v1151 = vunpack.c.h.b16 %v1086
    %v1152 = vunpack.c.l.b16 %v1087
    %v1153 = vunpack.c.h.b16 %v1087
    %v1154 = vunpack.c.l.b16 %v1088
    %v1155 = vunpack.c.h.b16 %v1088
    %v1156 = vunpack.c.l.b16 %v1089
    %v1157 = vunpack.c.h.b16 %v1089
    %v1158 = vunpack.c.l.b16 %v1090
    %v1159 = vunpack.c.h.b16 %v1090
    %v1160 = vunpack.c.l.b16 %v1091
    %v1161 = vunpack.c.h.b16 %v1091
    %v1162 = vunpack.c.l.b16 %v1092
    %v1163 = vunpack.c.h.b16 %v1092
    %v1164 = vunpack.c.l.b16 %v1093
    %v1165 = vunpack.c.h.b16 %v1093
    %v1166 = vunpack.c.l.b16 %v1094
    %v1167 = vunpack.c.h.b16 %v1094
    %v1168 = vunpack.c.l.b16 %v1095
    %v1169 = vunpack.c.h.b16 %v1095
    %v1170 = vunpack.c.l.b16 %v1096
    %v1171 = vunpack.c.h.b16 %v1096
    %v1172 = vunpack.c.l.b16 %v1097
    %v1173 = vunpack.c.h.b16 %v1097
    %v1174 = vunpack.c.l.b16 %v1098
    %v1175 = vunpack.c.h.b16 %v1098
    %v1176 = vunpack.c.l.b16 %v1099
    %v1177 = vunpack.c.h.b16 %v1099
    %v1178 = vunpack.c.l.b16 %v1100
    %v1179 = vunpack.c.h.b16 %v1100
    %v1180 = vunpack.c.l.b16 %v1101
    %v1181 = vunpack.c.h.b16 %v1101
    %v1182 = vunpack.c.l.b16 %v1102
    %v1183 = vunpack.c.h.b16 %v1102
    %v1184 = vunpack.c.l.b16 %v1103
    %v1185 = vunpack.c.h.b16 %v1103
    %v1186 = vunpack.c.l.b16 %v1104
    %v1187 = vunpack.c.h.b16 %v1104
    %v1188 = vunpack.c.l.b16 %v1105
    %v1189 = vunpack.c.h.b16 %v1105
    %v1190 = vunpack.c.l.b16 %v1106
    %v1191 = vunpack.c.h.b16 %v1106
    %v1192 = vunpack.c.l.b16 %v1107
    %v1193 = vunpack.c.h.b16 %v1107
    %v1194 = vunpack.c.l.b16 %v1108
    %v1195 = vunpack.c.h.b16 %v1108
    %v1196 = vunpack.c.l.b16 %v1109
    %v1197 = vunpack.c.h.b16 %v1109
    %v1198 = vunpack.c.l.b16 %v1110
    %v1199 = vunpack.c.h.b16 %v1110
    %v1200 = vunpack.c.l.b16 %v1111
    %v1201 = vunpack.c.h.b16 %v1111
    %v1202 = vunpack.c.l.b16 %v1112
    %v1203 = vunpack.c.h.b16 %v1112
    %v1204 = vunpack.c.l.b16 %v1113
    %v1205 = vunpack.c.h.b16 %v1113
    %v1206 = vunpack.c.l.b16 %v1114
    %v1207 = vunpack.c.h.b16 %v1114
    %v1208 = vunpack.c.l.b16 %v1115
    %v1209 = vunpack.c.h.b16 %v1115
    %v1210 = vunpack.c.l.b16 %v1116
    %v1211 = vunpack.c.h.b16 %v1116
    %v1212 = vunpack.c.l.b16 %v1117
    %v1213 = vunpack.c.h.b16 %v1117
    %v1214 = vpack.c.b16 %v1150, %v1150
    %v1215 = vpack.c.b16 %v1151, %v1151
    %v1216 = vpack.c.b16 %v1152, %v1152
    %v1217 = vpack.c.b16 %v1153, %v1153
    %v1218 = vpack.c.b16 %v1154, %v1154
    %v1219 = vpack.c.b16 %v1155, %v1155
    %v1220 = vpack.c.b16 %v1156, %v1156
    %v1221 = vpack.c.b16 %v1157, %v1157
    %v1222 = vpack.c.b16 %v1158, %v1158
    %v1223 = vpack.c.b16 %v1159, %v1159
    %v1224 = vpack.c.b16 %v1160, %v1160
    %v1225 = vpack.c.b16 %v1161, %v1161
    %v1226 = vpack.c.b16 %v1162, %v1162
    %v1227 = vpack.c.b16 %v1163, %v1163
    %v1228 = vpack.c.b16 %v1164, %v1164
    %v1229 = vpack.c.b16 %v1165, %v1165
    %v1230 = vpack.c.b16 %v1166, %v1166
    %v1231 = vpack.c.b16 %v1167, %v1167
    %v1232 = vpack.c.b16 %v1168, %v1168
    %v1233 = vpack.c.b16 %v1169, %v1169
    %v1234 = vpack.c.b16 %v1170, %v1170
    %v1235 = vpack.c.b16 %v1171, %v1171
    %v1236 = vpack.c.b16 %v1172, %v1172
    %v1237 = vpack.c.b16 %v1173, %v1173
    %v1238 = vpack.c.b16 %v1174, %v1174
    %v1239 = vpack.c.b16 %v1175, %v1175
    %v1240 = vpack.c.b16 %v1176, %v1176
    %v1241 = vpack.c.b16 %v1177, %v1177
    %v1242 = vpack.c.b16 %v1178, %v1178
    %v1243 = vpack.c.b16 %v1179, %v1179
    %v1244 = vpack.c.b16 %v1180, %v1180
    %v1245 = vpack.c.b16 %v1181, %v1181
    %v1246 = vpack.c.b16 %v1182, %v1182
    %v1247 = vpack.c.b16 %v1183, %v1183
    %v1248 = vpack.c.b16 %v1184, %v1184
    %v1249 = vpack.c.b16 %v1185, %v1185
    %v1250 = vpack.c.b16 %v1186, %v1186
    %v1251 = vpack.c.b16 %v1187, %v1187
    %v1252 = vpack.c.b16 %v1188, %v1188
    %v1253 = vpack.c.b16 %v1189, %v1189
    %v1254 = vpack.c.b16 %v1190, %v1190
    %v1255 = vpack.c.b16 %v1191, %v1191
    %v1256 = vpack.c.b16 %v1192, %v1192
    %v1257 = vpack.c.b16 %v1193, %v1193
    %v1258 = vpack.c.b16 %v1194, %v1194
    %v1259 = vpack.c.b16 %v1195, %v1195
    %v1260 = vpack.c.b16 %v1196, %v1196
    %v1261 = vpack.c.b16 %v1197, %v1197
    %v1262 = vpack.c.b16 %v1198, %v1198
    %v1263 = vpack.c.b16 %v1199, %v1199
    %v1264 = vpack.c.b16 %v1200, %v1200
    %v1265 = vpack.c.b16 %v1201, %v1201
    %v1266 = vpack.c.b16 %v1202, %v1202
    %v1267 = vpack.c.b16 %v1203, %v1203
    %v1268 = vpack.c.b16 %v1204, %v1204
    %v1269 = vpack.c.b16 %v1205, %v1205
    %v1270 = vpack.c.b16 %v1206, %v1206
    %v1271 = vpack.c.b16 %v1207, %v1207
    %v1272 = vpack.c.b16 %v1208, %v1208
    %v1273 = vpack.c.b16 %v1209, %v1209
    %v1274 = vpack.c.b16 %v1210, %v1210
    %v1275 = vpack.c.b16 %v1211, %v1211
    %v1276 = vpack.c.b16 %v1212, %v1212
    %v1277 = vpack.c.b16 %v1213, %v1213
    %1342 = vst [vmem:[%s3] sm:$0xf] %v1214
    %1343 = vst [vmem:[%s3 + $0x4] sm:$0xf] %v1215
    %1344 = vst [vmem:[%s3 + $0x8] sm:$0xf] %v1216
    %1345 = vst [vmem:[%s3 + $0xc] sm:$0xf] %v1217
    %1346 = vst [vmem:[%s3 + $0x10] sm:$0xf] %v1218
    %1347 = vst [vmem:[%s3 + $0x14] sm:$0xf] %v1219
    %1348 = vst [vmem:[%s3 + $0x18] sm:$0xf] %v1220
    %1349 = vst [vmem:[%s3 + $0x1c] sm:$0xf] %v1221
    %1350 = vst [vmem:[%s3 + $0x20] sm:$0xf] %v1222
    %1351 = vst [vmem:[%s3 + $0x24] sm:$0xf] %v1223
    %1352 = vst [vmem:[%s3 + $0x28] sm:$0xf] %v1224
    %1353 = vst [vmem:[%s3 + $0x2c] sm:$0xf] %v1225
    %1354 = vst [vmem:[%s3 + $0x30] sm:$0xf] %v1226
    %1355 = vst [vmem:[%s3 + $0x34] sm:$0xf] %v1227
    %1356 = vst [vmem:[%s3 + $0x38] sm:$0xf] %v1228
    %1357 = vst [vmem:[%s3 + $0x3c] sm:$0xf] %v1229
    %1358 = vst [vmem:[%s3 + $0x40] sm:$0xf] %v1230
    %1359 = vst [vmem:[%s3 + $0x44] sm:$0xf] %v1231
    %1360 = vst [vmem:[%s3 + $0x48] sm:$0xf] %v1232
    %1361 = vst [vmem:[%s3 + $0x4c] sm:$0xf] %v1233
    %1362 = vst [vmem:[%s3 + $0x50] sm:$0xf] %v1234
    %1363 = vst [vmem:[%s3 + $0x54] sm:$0xf] %v1235
    %1364 = vst [vmem:[%s3 + $0x58] sm:$0xf] %v1236
    %1365 = vst [vmem:[%s3 + $0x5c] sm:$0xf] %v1237
    %1366 = vst [vmem:[%s3 + $0x60] sm:$0xf] %v1238
    %1367 = vst [vmem:[%s3 + $0x64] sm:$0xf] %v1239
    %1368 = vst [vmem:[%s3 + $0x68] sm:$0xf] %v1240
    %1369 = vst [vmem:[%s3 + $0x6c] sm:$0xf] %v1241
    %1370 = vst [vmem:[%s3 + $0x70] sm:$0xf] %v1242
    %1371 = vst [vmem:[%s3 + $0x74] sm:$0xf] %v1243
    %1372 = vst [vmem:[%s3 + $0x78] sm:$0xf] %v1244
    %1373 = vst [vmem:[%s3 + $0x7c] sm:$0xf] %v1245
    %1374 = vst [vmem:[%s3 + $0x80] sm:$0xf] %v1246
    %1375 = vst [vmem:[%s3 + $0x84] sm:$0xf] %v1247
    %1376 = vst [vmem:[%s3 + $0x88] sm:$0xf] %v1248
    %1377 = vst [vmem:[%s3 + $0x8c] sm:$0xf] %v1249
    %1378 = vst [vmem:[%s3 + $0x90] sm:$0xf] %v1250
    %1379 = vst [vmem:[%s3 + $0x94] sm:$0xf] %v1251
    %1380 = vst [vmem:[%s3 + $0x98] sm:$0xf] %v1252
    %1381 = vst [vmem:[%s3 + $0x9c] sm:$0xf] %v1253
    %1382 = vst [vmem:[%s3 + $0xa0] sm:$0xf] %v1254
    %1383 = vst [vmem:[%s3 + $0xa4] sm:$0xf] %v1255
    %1384 = vst [vmem:[%s3 + $0xa8] sm:$0xf] %v1256
    %1385 = vst [vmem:[%s3 + $0xac] sm:$0xf] %v1257
    %1386 = vst [vmem:[%s3 + $0xb0] sm:$0xf] %v1258
    %1387 = vst [vmem:[%s3 + $0xb4] sm:$0xf] %v1259
    %1388 = vst [vmem:[%s3 + $0xb8] sm:$0xf] %v1260
    %1389 = vst [vmem:[%s3 + $0xbc] sm:$0xf] %v1261
    %1390 = vst [vmem:[%s3 + $0xc0] sm:$0xf] %v1262
    %1391 = vst [vmem:[%s3 + $0xc4] sm:$0xf] %v1263
    %1392 = vst [vmem:[%s3 + $0xc8] sm:$0xf] %v1264
    %1393 = vst [vmem:[%s3 + $0xcc] sm:$0xf] %v1265
    %1394 = vst [vmem:[%s3 + $0xd0] sm:$0xf] %v1266
    %1395 = vst [vmem:[%s3 + $0xd4] sm:$0xf] %v1267
    %1396 = vst [vmem:[%s3 + $0xd8] sm:$0xf] %v1268
    %1397 = vst [vmem:[%s3 + $0xdc] sm:$0xf] %v1269
    %1398 = vst [vmem:[%s3 + $0xe0] sm:$0xf] %v1270
    %1399 = vst [vmem:[%s3 + $0xe4] sm:$0xf] %v1271
    %1400 = vst [vmem:[%s3 + $0xe8] sm:$0xf] %v1272
    %1401 = vst [vmem:[%s3 + $0xec] sm:$0xf] %v1273
    %1402 = vst [vmem:[%s3 + $0xf0] sm:$0xf] %v1274
    %1403 = vst [vmem:[%s3 + $0xf4] sm:$0xf] %v1275
    %1404 = vst [vmem:[%s3 + $0xf8] sm:$0xf] %v1276
    %1405 = vst [vmem:[%s3 + $0xfc] sm:$0xf] %v1277
  $region21: #{bottleneck_forward.4} parent=0 // pred_fallthru
    _
  // Predicated region
  $region22: #{bottleneck_forward.4} parent=0 // pred_check
    _
  $region23: #{bottleneck_forward.4} parent=0 // pred_check_branch
    %1407 = sbr.rel (0) target = $region25
  $region24: #{bottleneck_forward.4} parent=0 // pred_region
    _
  $region25: #{bottleneck_forward.4} parent=0 // pred_fallthru
    _
  // Predicated region
  $region26: #{bottleneck_forward.4} parent=0 // pred_check
    _
  $region27: #{bottleneck_forward.4} parent=0 // pred_check_branch
    %1409 = sbr.rel (0) target = $region29
  $region28: #{bottleneck_forward.4} parent=0 // pred_region
    _
  $region29: #{bottleneck_forward.4} parent=0 // pred_fallthru
    _

// kernel: bottleneck_forward.5
$region0: #{bottleneck_forward.5}
  #allocation0 [shape = 'u32[]', space=smem, size = 0x4, offset = 0x4, fixed_abs, tag = 'smem constant byte address 0x4 - core index']
  #allocation1 [shape = 'u32[144,128]{1,0:T(1,128)}', space=vmem, size = 0x12000, scoped, tag = 'internal scratch']
  #allocation2 [shape = 'f32[128,128]{1,0:T(8,128)}', space=vmem, size = 0x10000, scoped, tag = 'scratch operand']
  %s0 = inlined_call_operand.vmem [shape: bf16[128,384], index: 0, kind: input, shape index: {}]
  %s1 = inlined_call_operand.vmem [shape: bf16[384,128], index: 1, kind: input, shape index: {}]
  %s2 = inlined_call_operand.vmem [shape: f32[1,128], index: 2, kind: input, shape index: {}]
  %s3 = inlined_call_operand.vmem [shape: bf16[128,128], index: 3, kind: output, shape index: {}]
  %s4 = sld [smem:[#allocation0]]
  $region94: #{bottleneck_forward.5} parent=0
    _
  %s6 = ssub.s32 1, %s4
  %s7 = scalar_select 0, %s6, %s4
  $region1: #{bottleneck_forward.5} parent=0
    #allocation3 [shape = 'u8[65536]{0}', space=vmem, size = 0x10000, scoped, tag = 'input window, operand 0']
    loop: start=0, step=1, limit=5
    $region2: #{bottleneck_forward.5} parent=1 // loop_pre_header
      _
    $region3: #{bottleneck_forward.5} parent=1 // loop_header
      %s9 = sphi 0, %s13
      %p10 = scmp.ge.s32.totalorder %s9, 5
      %s16 = sphi 0, %s35
      %s17 = sphi 0, %s31
      %s18 = sphi 0, %s27
      %s19 = sphi 0, %s16
      %s20 = sphi 0, %s17
      %s21 = sphi 0, %s18
      %s22 = sphi 0, %s19
      %s23 = sphi 0, %s20
      %s24 = sphi 0, %s21
      %s40 = sphi 0, %s42
      %s43 = sphi 0, %s40
      %s44 = sphi 0, %s43
      %s60 = sphi 0, %s44
      %s68 = sphi 0, %s70
      %s71 = sphi 0, %s68
      %s72 = sphi 0, %s71
      %s88 = sphi 0, %s72
      %s94 = sphi 0, %s96
      %s97 = sphi 0, %s94
      %s98 = sphi 0, %s97
      %s114 = sphi 0, %s98
      %s122 = sphi 0, %s124
      %s125 = sphi 0, %s122
      %s126 = sphi 0, %s125
      %s142 = sphi 0, %s126
    $region4: #{bottleneck_forward.5} parent=1 // loop_header_branch
      %12 = sbr.rel (%p10) target = $region8
    $region5: #{bottleneck_forward.5} parent=1 // loop_body
      %s14 = ssub.s32 %s9, 1
      %s15 = ssub.s32 %s9, 2
      %s25 = sadd.s32 1, %s18
      %p26 = scmp.ge.s32.totalorder %s25, 3
      %s27 = scalar_select %p26, 0, %s25
      %s28 = sadd.s32 1, %s17
      %s29 = scalar_select %p26, %s28, %s17
      %p30 = scmp.ge.s32.totalorder %s29, 1
      %s31 = scalar_select %p30, 0, %s29
      %s32 = sadd.s32 1, %s16
      %s33 = scalar_select %p30, %s32, %s16
      %p34 = scmp.ge.s32.totalorder %s33, 1
      %s35 = scalar_select %p34, 0, %s33
      %s36 = ssub.s32 %s16, %s35
      %s37 = ssub.s32 %s18, %s27
      %s38 = sor.u32 %s36, %s37
      %p39 = scmp.eq.s32.totalorder %s38, 0
      %s41 = sadd.s32 %s40, 1
      %s42 = scalar_select %p39, %s40, %s41
      %p45 = pneg %p39
      %p46 = scmp.eq.s32.totalorder %s9, 2
      %p47 = por %p45, %p46
      %p48 = scmp.ne.s32.totalorder %s40, %s43
      %p49 = scmp.eq.s32.totalorder %s9, 0
      %p50 = por %p48, %p49
      %p51 = scmp.ne.s32.totalorder %s40, %s43
      %p52 = scmp.eq.s32.totalorder %s14, 2
      %p53 = por %p51, %p52
      %p54 = scmp.ne.s32.totalorder %s43, %s44
      %p55 = scmp.eq.s32.totalorder %s14, 0
      %p56 = por %p54, %p55
      %p57 = scmp.ne.s32.totalorder %s43, %s44
      %p58 = scmp.eq.s32.totalorder %s15, 2
      %p59 = por %p57, %p58
      %p61 = scmp.ne.s32.totalorder %s44, %s60
      %p62 = scmp.eq.s32.totalorder %s15, 0
      %p63 = por %p61, %p62
      %s64 = ssub.s32 %s18, %s27
      %s65 = ssub.s32 %s17, %s31
      %s66 = sor.u32 %s64, %s65
      %p67 = scmp.eq.s32.totalorder %s66, 0
      %s69 = sadd.s32 %s68, 1
      %s70 = scalar_select %p67, %s68, %s69
      %p73 = pneg %p67
      %p74 = scmp.eq.s32.totalorder %s9, 2
      %p75 = por %p73, %p74
      %p76 = scmp.ne.s32.totalorder %s68, %s71
      %p77 = scmp.eq.s32.totalorder %s9, 0
      %p78 = por %p76, %p77
      %p79 = scmp.ne.s32.totalorder %s68, %s71
      %p80 = scmp.eq.s32.totalorder %s14, 2
      %p81 = por %p79, %p80
      %p82 = scmp.ne.s32.totalorder %s71, %s72
      %p83 = scmp.eq.s32.totalorder %s14, 0
      %p84 = por %p82, %p83
      %p85 = scmp.ne.s32.totalorder %s71, %s72
      %p86 = scmp.eq.s32.totalorder %s15, 2
      %p87 = por %p85, %p86
      %p89 = scmp.ne.s32.totalorder %s72, %s88
      %p90 = scmp.eq.s32.totalorder %s15, 0
      %p91 = por %p89, %p90
      %s92 = ssub.s32 %s17, %s31
      %p93 = scmp.eq.s32.totalorder %s92, 0
      %s95 = sadd.s32 %s94, 1
      %s96 = scalar_select %p93, %s94, %s95
      %p99 = pneg %p93
      %p100 = scmp.eq.s32.totalorder %s9, 2
      %p101 = por %p99, %p100
      %p102 = scmp.ne.s32.totalorder %s94, %s97
      %p103 = scmp.eq.s32.totalorder %s9, 0
      %p104 = por %p102, %p103
      %p105 = scmp.ne.s32.totalorder %s94, %s97
      %p106 = scmp.eq.s32.totalorder %s14, 2
      %p107 = por %p105, %p106
      %p108 = scmp.ne.s32.totalorder %s97, %s98
      %p109 = scmp.eq.s32.totalorder %s14, 0
      %p110 = por %p108, %p109
      %p111 = scmp.ne.s32.totalorder %s97, %s98
      %p112 = scmp.eq.s32.totalorder %s15, 2
      %p113 = por %p111, %p112
      %p115 = scmp.ne.s32.totalorder %s98, %s114
      %p116 = scmp.eq.s32.totalorder %s15, 0
      %p117 = por %p115, %p116
      %s118 = ssub.s32 %s16, %s35
      %s119 = ssub.s32 %s17, %s31
      %s120 = sor.u32 %s118, %s119
      %p121 = scmp.eq.s32.totalorder %s120, 0
      %s123 = sadd.s32 %s122, 1
      %s124 = scalar_select %p121, %s122, %s123
      %p127 = pneg %p121
      %p128 = scmp.eq.s32.totalorder %s9, 2
      %p129 = por %p127, %p128
      %p130 = scmp.ne.s32.totalorder %s122, %s125
      %p131 = scmp.eq.s32.totalorder %s9, 0
      %p132 = por %p130, %p131
      %p133 = scmp.ne.s32.totalorder %s122, %s125
      %p134 = scmp.eq.s32.totalorder %s14, 2
      %p135 = por %p133, %p134
      %p136 = scmp.ne.s32.totalorder %s125, %s126
      %p137 = scmp.eq.s32.totalorder %s14, 0
      %p138 = por %p136, %p137
      %p139 = scmp.ne.s32.totalorder %s125, %s126
      %p140 = scmp.eq.s32.totalorder %s15, 2
      %p141 = por %p139, %p140
      %p143 = scmp.ne.s32.totalorder %s126, %s142
      %p144 = scmp.eq.s32.totalorder %s15, 0
      %p145 = por %p143, %p144
      %p146 = scmp.le.s32.totalorder 1, %s9
      %p147 = scmp.lt.s32.totalorder %s9, 4
      %p148 = pnand %p146, %p147
      %p149 = pneg %p148
      // Predicated region
      $region9: #{bottleneck_forward.5} parent=5 // pred_check
        _
      $region10: #{bottleneck_forward.5} parent=5 // pred_check_branch
        %151 = sbr.rel (%p148) target = $region12
      $region11: #{bottleneck_forward.5} parent=5 // pred_region
        %s152 = ssub.s32 %s9, 1
        // Predicated region
        $region13: #{bottleneck_forward.5} parent=11 // pred_check
          %p153 = pneg %p110
        $region14: #{bottleneck_forward.5} parent=11 // pred_check_branch
          %155 = sbr.rel (%p153) target = $region16
        $region15: #{bottleneck_forward.5} parent=11 // pred_region
          %p156 = scmp.lt.s32.totalorder %s20, 0
          %s157 = scalar_select %p156, %s20, 0
          %s158 = scalar_lea.vmem %s2, %s157
        $region16: #{bottleneck_forward.5} parent=11 // pred_fallthru
          _
      $region12: #{bottleneck_forward.5} parent=5 // pred_fallthru
        _
      %p159 = scmp.lt.s32.totalorder %s9, 3
      // Predicated region
      $region17: #{bottleneck_forward.5} parent=5 // pred_check
        %p160 = pneg %p159
      $region18: #{bottleneck_forward.5} parent=5 // pred_check_branch
        %162 = sbr.rel (%p160) target = $region20
      $region19: #{bottleneck_forward.5} parent=5 // pred_region
        // Predicated region
        $region21: #{bottleneck_forward.5} parent=19 // pred_check
          %p163 = pneg %p50
        $region22: #{bottleneck_forward.5} parent=19 // pred_check_branch
          %165 = sbr.rel (%p163) target = $region24
        $region23: #{bottleneck_forward.5} parent=19 // pred_region
          %s166 = sand.u32 %s40, 1
          %s167 = sand.u32 %s40, 1
          %s168 = smul.addr %s167, 64
          %s169 = scalar_lea.vmem [#allocation3], %s168
          %s170 = smul.u32 16, %s16
          %s171 = smul.addr %s170, 3
          %s172 = sadd.s32 %s18, %s171
          %s173 = smul.addr %s172, 4
          %s174 = scalar_lea.vmem %s0, %s173
          // Predicated region
          $region25: #{bottleneck_forward.5} parent=23 // pred_check
            _
          $region26: #{bottleneck_forward.5} parent=23 // pred_check_branch
            %176 = sbr.rel (0) target = $region28
          $region27: #{bottleneck_forward.5} parent=23 // pred_region
            // Predicated region
            $region29: #{bottleneck_forward.5} parent=27 // pred_check
              _
            $region30: #{bottleneck_forward.5} parent=27 // pred_check_branch
              %178 = sbr.rel target = $region32
            $region31: #{bottleneck_forward.5} parent=27 // pred_region
              // Predicated region
              $region44: #{bottleneck_forward.5} parent=31 // pred_check
                _
              $region45: #{bottleneck_forward.5} parent=31 // pred_check_branch
                %224 = sbr.rel (0) target = $region47
              $region46: #{bottleneck_forward.5} parent=31 // pred_region
                loop: start=0, step=1, limit=1
                $region48: #{bottleneck_forward.5} parent=46 // loop_pre_header
                  _
                $region49: #{bottleneck_forward.5} parent=46 // loop_header
                  %s226 = sphi 0, %s230
                  %p227 = scmp.ge.s32.totalorder %s226, 1
                  %s231 = sphi %s174, %s174
                  %s232 = sphi %s169, %s169
                $region50: #{bottleneck_forward.5} parent=46 // loop_header_branch
                  %229 = sbr.rel (%p227) target = $region54
                $region51: #{bottleneck_forward.5} parent=46 // loop_body
                  _
                $region52: #{bottleneck_forward.5} parent=46 // loop_footer
                  %s230 = sadd.s32 1, %s226
                $region53: #{bottleneck_forward.5} parent=46 // loop_footer_branch
                  %225 = sbr.rel target = $region49
                $region54: #{bottleneck_forward.5} parent=46 // loop_exit
                  _
                %s234 = ssub.s32 16, 1
                loop: start=0, step=1, limit=1
                $region55: #{bottleneck_forward.5} parent=46 // loop_pre_header
                  _
                $region56: #{bottleneck_forward.5} parent=46 // loop_header
                  %s236 = sphi 0, %s240
                  %p237 = scmp.ge.s32.totalorder %s236, 1
                  %s241 = sphi %s174, %s174
                  %s242 = sphi %s169, %s169
                $region57: #{bottleneck_forward.5} parent=46 // loop_header_branch
                  %239 = sbr.rel (%p237) target = $region61
                $region58: #{bottleneck_forward.5} parent=46 // loop_body
                  %v243 = vld [vmem:[%s241] sm:%s234]
                  %244 = vst [vmem:[%s242] sm:%s234] %v243
                  %v245 = vld [vmem:[%s241 + $0xc] sm:%s234]
                  %246 = vst [vmem:[%s242 + $0x4] sm:%s234] %v245
                  %v247 = vld [vmem:[%s241 + $0x18] sm:%s234]
                  %248 = vst [vmem:[%s242 + $0x8] sm:%s234] %v247
                  %v249 = vld [vmem:[%s241 + $0x24] sm:%s234]
                  %250 = vst [vmem:[%s242 + $0xc] sm:%s234] %v249
                  %v251 = vld [vmem:[%s241 + $0x30] sm:%s234]
                  %252 = vst [vmem:[%s242 + $0x10] sm:%s234] %v251
                  %v253 = vld [vmem:[%s241 + $0x3c] sm:%s234]
                  %254 = vst [vmem:[%s242 + $0x14] sm:%s234] %v253
                  %v255 = vld [vmem:[%s241 + $0x48] sm:%s234]
                  %256 = vst [vmem:[%s242 + $0x18] sm:%s234] %v255
                  %v257 = vld [vmem:[%s241 + $0x54] sm:%s234]
                  %258 = vst [vmem:[%s242 + $0x1c] sm:%s234] %v257
                  %v259 = vld [vmem:[%s241 + $0x60] sm:%s234]
                  %260 = vst [vmem:[%s242 + $0x20] sm:%s234] %v259
                  %v261 = vld [vmem:[%s241 + $0x6c] sm:%s234]
                  %262 = vst [vmem:[%s242 + $0x24] sm:%s234] %v261
                  %v263 = vld [vmem:[%s241 + $0x78] sm:%s234]
                  %264 = vst [vmem:[%s242 + $0x28] sm:%s234] %v263
                  %v265 = vld [vmem:[%s241 + $0x84] sm:%s234]
                  %266 = vst [vmem:[%s242 + $0x2c] sm:%s234] %v265
                  %v267 = vld [vmem:[%s241 + $0x90] sm:%s234]
                  %268 = vst [vmem:[%s242 + $0x30] sm:%s234] %v267
                  %v269 = vld [vmem:[%s241 + $0x9c] sm:%s234]
                  %270 = vst [vmem:[%s242 + $0x34] sm:%s234] %v269
                  %v271 = vld [vmem:[%s241 + $0xa8] sm:%s234]
                  %272 = vst [vmem:[%s242 + $0x38] sm:%s234] %v271
                  %v273 = vld [vmem:[%s241 + $0xb4] sm:%s234]
                  %274 = vst [vmem:[%s242 + $0x3c] sm:%s234] %v273
                $region59: #{bottleneck_forward.5} parent=46 // loop_footer
                  %s240 = sadd.s32 1, %s236
                $region60: #{bottleneck_forward.5} parent=46 // loop_footer_branch
                  %235 = sbr.rel target = $region56
                $region61: #{bottleneck_forward.5} parent=46 // loop_exit
                  _
              $region47: #{bottleneck_forward.5} parent=31 // pred_fallthru
                _
            $region32: #{bottleneck_forward.5} parent=27 // pred_fallthru
              _
            // Predicated region
            $region33: #{bottleneck_forward.5} parent=27 // pred_check
              _
            $region34: #{bottleneck_forward.5} parent=27 // pred_check_branch
              %180 = sbr.rel (0) target = $region36
            $region35: #{bottleneck_forward.5} parent=27 // pred_region
              %s182 = ssub.s32 16, 1
              loop: start=0, step=1, limit=1
              $region37: #{bottleneck_forward.5} parent=35 // loop_pre_header
                _
              $region38: #{bottleneck_forward.5} parent=35 // loop_header
                %s184 = sphi 0, %s188
                %p185 = scmp.ge.s32.totalorder %s184, 1
                %s189 = sphi %s174, %s174
                %s190 = sphi %s169, %s169
              $region39: #{bottleneck_forward.5} parent=35 // loop_header_branch
                %187 = sbr.rel (%p185) target = $region43
              $region40: #{bottleneck_forward.5} parent=35 // loop_body
                %v191 = vld [vmem:[%s189] sm:%s182]
                %192 = vst [vmem:[%s190] sm:%s182] %v191
                %v193 = vld [vmem:[%s189 + $0xc] sm:%s182]
                %194 = vst [vmem:[%s190 + $0x4] sm:%s182] %v193
                %v195 = vld [vmem:[%s189 + $0x18] sm:%s182]
                %196 = vst [vmem:[%s190 + $0x8] sm:%s182] %v195
                %v197 = vld [vmem:[%s189 + $0x24] sm:%s182]
                %198 = vst [vmem:[%s190 + $0xc] sm:%s182] %v197
                %v199 = vld [vmem:[%s189 + $0x30] sm:%s182]
                %200 = vst [vmem:[%s190 + $0x10] sm:%s182] %v199
                %v201 = vld [vmem:[%s189 + $0x3c] sm:%s182]
                %202 = vst [vmem:[%s190 + $0x14] sm:%s182] %v201
                %v203 = vld [vmem:[%s189 + $0x48] sm:%s182]
                %204 = vst [vmem:[%s190 + $0x18] sm:%s182] %v203
                %v205 = vld [vmem:[%s189 + $0x54] sm:%s182]
                %206 = vst [vmem:[%s190 + $0x1c] sm:%s182] %v205
                %v207 = vld [vmem:[%s189 + $0x60] sm:%s182]
                %208 = vst [vmem:[%s190 + $0x20] sm:%s182] %v207
                %v209 = vld [vmem:[%s189 + $0x6c] sm:%s182]
                %210 = vst [vmem:[%s190 + $0x24] sm:%s182] %v209
                %v211 = vld [vmem:[%s189 + $0x78] sm:%s182]
                %212 = vst [vmem:[%s190 + $0x28] sm:%s182] %v211
                %v213 = vld [vmem:[%s189 + $0x84] sm:%s182]
                %214 = vst [vmem:[%s190 + $0x2c] sm:%s182] %v213
                %v215 = vld [vmem:[%s189 + $0x90] sm:%s182]
                %216 = vst [vmem:[%s190 + $0x30] sm:%s182] %v215
                %v217 = vld [vmem:[%s189 + $0x9c] sm:%s182]
                %218 = vst [vmem:[%s190 + $0x34] sm:%s182] %v217
                %v219 = vld [vmem:[%s189 + $0xa8] sm:%s182]
                %220 = vst [vmem:[%s190 + $0x38] sm:%s182] %v219
                %v221 = vld [vmem:[%s189 + $0xb4] sm:%s182]
                %222 = vst [vmem:[%s190 + $0x3c] sm:%s182] %v221
              $region41: #{bottleneck_forward.5} parent=35 // loop_footer
                %s188 = sadd.s32 1, %s184
              $region42: #{bottleneck_forward.5} parent=35 // loop_footer_branch
                %183 = sbr.rel target = $region38
              $region43: #{bottleneck_forward.5} parent=35 // loop_exit
                _
            $region36: #{bottleneck_forward.5} parent=27 // pred_fallthru
              _
          $region28: #{bottleneck_forward.5} parent=23 // pred_fallthru
            _
          %275 = vnop
        $region24: #{bottleneck_forward.5} parent=19 // pred_fallthru
          _
        // Predicated region
        $region62: #{bottleneck_forward.5} parent=19 // pred_check
          %p276 = pneg %p78
        $region63: #{bottleneck_forward.5} parent=19 // pred_check_branch
          %278 = sbr.rel (%p276) target = $region65
        $region64: #{bottleneck_forward.5} parent=19 // pred_region
          %s279 = smul.u32 16, %s18
          %p280 = scmp.lt.s32.totalorder %s279, 47
          %s281 = scalar_select %p280, %s279, 47
          %p282 = scmp.lt.s32.totalorder %s17, 0
          %s283 = scalar_select %p282, %s17, 0
          %s284 = sadd.s32 %s283, %s281
          %s285 = smul.addr %s284, 4
          %s286 = scalar_lea.vmem %s1, %s285
          %s287 = smul.u32 16, %s18
        $region65: #{bottleneck_forward.5} parent=19 // pred_fallthru
          _
      $region20: #{bottleneck_forward.5} parent=5 // pred_fallthru
        _
      %p288 = scmp.le.s32.totalorder 1, %s9
      %p289 = scmp.lt.s32.totalorder %s9, 4
      %p290 = pnand %p288, %p289
      %p291 = pneg %p290
      // Predicated region
      $region66: #{bottleneck_forward.5} parent=5 // pred_check
        _
      $region67: #{bottleneck_forward.5} parent=5 // pred_check_branch
        %293 = sbr.rel (%p290) target = $region69
      $region68: #{bottleneck_forward.5} parent=5 // pred_region
        %s294 = ssub.s32 %s9, 1
        %s295 = sand.u32 %s43, 1
        %s296 = sand.u32 %s43, 1
        %s297 = smul.addr %s296, 64
        %s298 = scalar_lea.vmem [#allocation3], %s297
        // Predicated region
        $region70: #{bottleneck_forward.5} parent=68 // pred_check
          %p299 = pneg %p56
        $region71: #{bottleneck_forward.5} parent=68 // pred_check_branch
          %301 = sbr.rel (%p299) target = $region73
        $region72: #{bottleneck_forward.5} parent=68 // pred_region
          _
        $region73: #{bottleneck_forward.5} parent=68 // pred_fallthru
          _
        %s302 = sand.u32 %s43, 1
        %s303 = sand.u32 %s43, 1
        %s304 = smul.addr %s303, 64
        %s305 = scalar_lea.vmem [#allocation3], %s304
        %p306 = pneg %p56
        %p307 = pneg %p53
        %s308 = smul.u32 16, %s21
        %p309 = scmp.lt.s32.totalorder %s308, 47
        %s310 = scalar_select %p309, %s308, 47
        %p311 = scmp.lt.s32.totalorder %s20, 0
        %s312 = scalar_select %p311, %s20, 0
        %s313 = sadd.s32 %s312, %s310
        %s314 = smul.addr %s313, 4
        %s315 = scalar_lea.vmem %s1, %s314
        %p316 = pneg %p84
        %p317 = pneg %p81
        %p318 = scmp.lt.s32.totalorder %s20, 0
        %s319 = scalar_select %p318, %s20, 0
        %s320 = scalar_lea.vmem %s2, %s319
        %p321 = pneg %p110
        %p322 = pneg %p107
        %p323 = pneg %p138
        %p324 = pneg %p135
        %s325 = smul.u32 16, %s19
        %p326 = scmp.lt.s32.totalorder %s325, 15
        %s327 = scalar_select %p326, %s325, 15
        %p328 = scmp.lt.s32.totalorder %s20, 0
        %s329 = scalar_select %p328, %s20, 0
        %s330 = sadd.s32 %s329, %s327
        %s331 = smul.addr %s330, 4
        %s332 = scalar_lea.vmem %s3, %s331
        %s333 = smul.u32 16, %s19
        %s334 = smul.u32 16, %s21
        %p335 = scmp.lt.s32.totalorder %s334, 47
        %s336 = scalar_select %p335, %s334, 47
        %p337 = scmp.lt.s32.totalorder %s20, 0
        %s338 = scalar_select %p337, %s20, 0
        %s339 = sadd.s32 %s338, %s336
        %s340 = smul.addr %s339, 4
        %s341 = scalar_lea.vmem %s1, %s340
        %s342 = smul.u32 16, %s21
        %p343 = scmp.lt.s32.totalorder %s20, 0
        %s344 = scalar_select %p343, %s20, 0
        %s345 = scalar_lea.vmem %s2, %s344
        %s346 = smul.u32 16, %s19
        %p347 = scmp.lt.s32.totalorder %s346, 15
        %s348 = scalar_select %p347, %s346, 15
        %p349 = scmp.lt.s32.totalorder %s20, 0
        %s350 = scalar_select %p349, %s20, 0
        %s351 = sadd.s32 %s350, %s348
        %s352 = smul.addr %s351, 4
        %s353 = scalar_lea.vmem %s3, %s352
        %s354 = smul.u32 16, %s19
        %p356 = scmp.eq.s32.totalorder %s21, 0
        // Predicated region
        $region74: #{bottleneck_forward.5} parent=68 // pred_check
          %p357 = pneg %p356
        $region75: #{bottleneck_forward.5} parent=68 // pred_check_branch
          %359 = sbr.rel (%p357) target = $region77
        $region76: #{bottleneck_forward.5} parent=68 // pred_region
          %360 = vst [vmem:[#allocation2] sm:$0xff] 0.0
          %361 = vst [vmem:[#allocation2 + $0x8] sm:$0xff] 0.0
          %362 = vst [vmem:[#allocation2 + $0x10] sm:$0xff] 0.0
          %363 = vst [vmem:[#allocation2 + $0x18] sm:$0xff] 0.0
          %364 = vst [vmem:[#allocation2 + $0x20] sm:$0xff] 0.0
          %365 = vst [vmem:[#allocation2 + $0x28] sm:$0xff] 0.0
          %366 = vst [vmem:[#allocation2 + $0x30] sm:$0xff] 0.0
          %367 = vst [vmem:[#allocation2 + $0x38] sm:$0xff] 0.0
          %368 = vst [vmem:[#allocation2 + $0x40] sm:$0xff] 0.0
          %369 = vst [vmem:[#allocation2 + $0x48] sm:$0xff] 0.0
          %370 = vst [vmem:[#allocation2 + $0x50] sm:$0xff] 0.0
          %371 = vst [vmem:[#allocation2 + $0x58] sm:$0xff] 0.0
          %372 = vst [vmem:[#allocation2 + $0x60] sm:$0xff] 0.0
          %373 = vst [vmem:[#allocation2 + $0x68] sm:$0xff] 0.0
          %374 = vst [vmem:[#allocation2 + $0x70] sm:$0xff] 0.0
          %375 = vst [vmem:[#allocation2 + $0x78] sm:$0xff] 0.0
        $region77: #{bottleneck_forward.5} parent=68 // pred_fallthru
          _
        %v376 = vld [vmem:[#allocation2] sm:$0xff]
        %v377 = vld [vmem:[#allocation2 + $0x8] sm:$0xff]
        %v378 = vld [vmem:[#allocation2 + $0x10] sm:$0xff]
        %v379 = vld [vmem:[#allocation2 + $0x18] sm:$0xff]
        %v380 = vld [vmem:[#allocation2 + $0x20] sm:$0xff]
        %v381 = vld [vmem:[#allocation2 + $0x28] sm:$0xff]
        %v382 = vld [vmem:[#allocation2 + $0x30] sm:$0xff]
        %v383 = vld [vmem:[#allocation2 + $0x38] sm:$0xff]
        %v384 = vld [vmem:[#allocation2 + $0x40] sm:$0xff]
        %v385 = vld [vmem:[#allocation2 + $0x48] sm:$0xff]
        %v386 = vld [vmem:[#allocation2 + $0x50] sm:$0xff]
        %v387 = vld [vmem:[#allocation2 + $0x58] sm:$0xff]
        %v388 = vld [vmem:[#allocation2 + $0x60] sm:$0xff]
        %v389 = vld [vmem:[#allocation2 + $0x68] sm:$0xff]
        %v390 = vld [vmem:[#allocation2 + $0x70] sm:$0xff]
        %v391 = vld [vmem:[#allocation2 + $0x78] sm:$0xff]
        %v392 = vld [vmem:[%s298] sm:$0xf]
        %v393 = vld [vmem:[%s298 + $0x4] sm:$0xf]
        %v394 = vld [vmem:[%s298 + $0x8] sm:$0xf]
        %v395 = vld [vmem:[%s298 + $0xc] sm:$0xf]
        %v396 = vld [vmem:[%s298 + $0x10] sm:$0xf]
        %v397 = vld [vmem:[%s298 + $0x14] sm:$0xf]
        %v398 = vld [vmem:[%s298 + $0x18] sm:$0xf]
        %v399 = vld [vmem:[%s298 + $0x1c] sm:$0xf]
        %v400 = vld [vmem:[%s298 + $0x20] sm:$0xf]
        %v401 = vld [vmem:[%s298 + $0x24] sm:$0xf]
        %v402 = vld [vmem:[%s298 + $0x28] sm:$0xf]
        %v403 = vld [vmem:[%s298 + $0x2c] sm:$0xf]
        %v404 = vld [vmem:[%s298 + $0x30] sm:$0xf]
        %v405 = vld [vmem:[%s298 + $0x34] sm:$0xf]
        %v406 = vld [vmem:[%s298 + $0x38] sm:$0xf]
        %v407 = vld [vmem:[%s298 + $0x3c] sm:$0xf]
        %v408 = vld [vmem:[%s341] sm:$0xf]
        %v409 = vld [vmem:[%s341 + $0x4] sm:$0xf]
        %v410 = vld [vmem:[%s341 + $0x8] sm:$0xf]
        %v411 = vld [vmem:[%s341 + $0xc] sm:$0xf]
        %v412 = vld [vmem:[%s341 + $0x10] sm:$0xf]
        %v413 = vld [vmem:[%s341 + $0x14] sm:$0xf]
        %v414 = vld [vmem:[%s341 + $0x18] sm:$0xf]
        %v415 = vld [vmem:[%s341 + $0x1c] sm:$0xf]
        %v416 = vld [vmem:[%s341 + $0x20] sm:$0xf]
        %v417 = vld [vmem:[%s341 + $0x24] sm:$0xf]
        %v418 = vld [vmem:[%s341 + $0x28] sm:$0xf]
        %v419 = vld [vmem:[%s341 + $0x2c] sm:$0xf]
        %v420 = vld [vmem:[%s341 + $0x30] sm:$0xf]
        %v421 = vld [vmem:[%s341 + $0x34] sm:$0xf]
        %v422 = vld [vmem:[%s341 + $0x38] sm:$0xf]
        %v423 = vld [vmem:[%s341 + $0x3c] sm:$0xf]
        %v440 = vunpack.c.l.b16 %v392
        %v441 = vunpack.c.l.b16 %v393
        %v442 = vunpack.c.l.b16 %v394
        %v443 = vunpack.c.l.b16 %v395
        %v444 = vunpack.c.l.b16 %v396
        %v445 = vunpack.c.l.b16 %v397
        %v446 = vunpack.c.l.b16 %v398
        %v447 = vunpack.c.l.b16 %v399
        %v448 = vunpack.c.l.b16 %v400
        %v449 = vunpack.c.l.b16 %v401
        %v450 = vunpack.c.l.b16 %v402
        %v451 = vunpack.c.l.b16 %v403
        %v452 = vunpack.c.l.b16 %v404
        %v453 = vunpack.c.l.b16 %v405
        %v454 = vunpack.c.l.b16 %v406
        %v455 = vunpack.c.l.b16 %v407
        %v456 = vpack.c.b16 %v441, %v440
        %v457 = vpack.c.b16 %v443, %v442
        %v458 = vpack.c.b16 %v445, %v444
        %v459 = vpack.c.b16 %v447, %v446
        %v460 = vpack.c.b16 %v449, %v448
        %v461 = vpack.c.b16 %v451, %v450
        %v462 = vpack.c.b16 %v453, %v452
        %v463 = vpack.c.b16 %v455, %v454
        %v488 = vunpack.c.l.b16 %v408
        %v489 = vunpack.c.l.b16 %v409
        %v490 = vunpack.c.l.b16 %v410
        %v491 = vunpack.c.l.b16 %v411
        %v492 = vunpack.c.l.b16 %v412
        %v493 = vunpack.c.l.b16 %v413
        %v494 = vunpack.c.l.b16 %v414
        %v495 = vunpack.c.l.b16 %v415
        %v496 = vunpack.c.l.b16 %v416
        %v497 = vunpack.c.l.b16 %v417
        %v498 = vunpack.c.l.b16 %v418
        %v499 = vunpack.c.l.b16 %v419
        %v500 = vunpack.c.l.b16 %v420
        %v501 = vunpack.c.l.b16 %v421
        %v502 = vunpack.c.l.b16 %v422
        %v503 = vunpack.c.l.b16 %v423
        %v504 = vpack.c.b16 %v489, %v488
        %v505 = vpack.c.b16 %v491, %v490
        %v506 = vpack.c.b16 %v493, %v492
        %v507 = vpack.c.b16 %v495, %v494
        %v508 = vpack.c.b16 %v497, %v496
        %v509 = vpack.c.b16 %v499, %v498
        %v510 = vpack.c.b16 %v501, %v500
        %v511 = vpack.c.b16 %v503, %v502
        %520 = vmatprep.subr.bf16.mxu0 0
        %521 = vmatpush1.bf16.msra.mxu0 %v511
        %522 = vmatprep.subr.bf16.mxu0 0
        %523 = vmatpush1.bf16.msra.mxu0 %v510
        %524 = vmatprep.subr.bf16.mxu0 0
        %525 = vmatpush1.bf16.msra.mxu0 %v509
        %526 = vmatprep.subr.bf16.mxu0 0
        %527 = vmatpush1.bf16.msra.mxu0 %v508
        %528 = vmatprep.subr.bf16.mxu0 0
        %529 = vmatpush1.bf16.msra.mxu0 %v507
        %530 = vmatprep.subr.bf16.mxu0 0
        %531 = vmatpush1.bf16.msra.mxu0 %v506
        %532 = vmatprep.subr.bf16.mxu0 0
        %533 = vmatpush1.bf16.msra.mxu0 %v505
        %534 = vmatprep.subr.bf16.mxu0 0
        %535 = vmatpush1.bf16.msra.mxu0 %v504
        %536 = vmatprep.subr.bf16.mxu0 0
        %537 = vmatpush2.bf16.msra.mxu0 0
        %538 = vmatprep.subr.bf16.mxu0 0
        %539 = vmatpush2.bf16.msra.mxu0 0
        %540 = vmatprep.subr.bf16.mxu0 0
        %541 = vmatpush2.bf16.msra.mxu0 0
        %542 = vmatprep.subr.bf16.mxu0 0
        %543 = vmatpush2.bf16.msra.mxu0 0
        %544 = vmatprep.subr.bf16.mxu0 0
        %545 = vmatpush2.bf16.msra.mxu0 0
        %546 = vmatprep.subr.bf16.mxu0 0
        %547 = vmatpush2.bf16.msra.mxu0 0
        %548 = vmatprep.subr.bf16.mxu0 0
        %549 = vmatpush2.bf16.msra.mxu0 0
        %550 = vmatprep.subr.bf16.mxu0 0
        %551 = vmatpush2.bf16.msra.mxu0 0
        %552 = vmatprep.mubr.bf16.mxu0 0
        %553 = vmatmul.mubr.bf16.gmra.mxu0 %v456
        %v554 = vpop.f32.mrf.mxu0
        %v555 = vadd.f32 0.0, %v554
        %v556 = vpop.f32.mrf.mxu0
        %v557 = vpop.f32.mrf.mxu0
        %v558 = vadd.f32 0.0, %v557
        %v559 = vpop.f32.mrf.mxu0
        %560 = vmatprep.mubr.bf16.mxu0 0
        %561 = vmatmul.mubr.bf16.gmra.mxu0 %v457
        %v562 = vpop.f32.mrf.mxu0
        %v563 = vadd.f32 0.0, %v562
        %v564 = vpop.f32.mrf.mxu0
        %v565 = vpop.f32.mrf.mxu0
        %v566 = vadd.f32 0.0, %v565
        %v567 = vpop.f32.mrf.mxu0
        %568 = vmatprep.mubr.bf16.mxu0 0
        %569 = vmatmul.mubr.bf16.gmra.mxu0 %v458
        %v570 = vpop.f32.mrf.mxu0
        %v571 = vadd.f32 0.0, %v570
        %v572 = vpop.f32.mrf.mxu0
        %v573 = vpop.f32.mrf.mxu0
        %v574 = vadd.f32 0.0, %v573
        %v575 = vpop.f32.mrf.mxu0
        %576 = vmatprep.mubr.bf16.mxu0 0
        %577 = vmatmul.mubr.bf16.gmra.mxu0 %v459
        %v578 = vpop.f32.mrf.mxu0
        %v579 = vadd.f32 0.0, %v578
        %v580 = vpop.f32.mrf.mxu0
        %v581 = vpop.f32.mrf.mxu0
        %v582 = vadd.f32 0.0, %v581
        %v583 = vpop.f32.mrf.mxu0
        %584 = vmatprep.mubr.bf16.mxu0 0
        %585 = vmatmul.mubr.bf16.gmra.mxu0 %v460
        %v586 = vpop.f32.mrf.mxu0
        %v587 = vadd.f32 0.0, %v586
        %v588 = vpop.f32.mrf.mxu0
        %v589 = vpop.f32.mrf.mxu0
        %v590 = vadd.f32 0.0, %v589
        %v591 = vpop.f32.mrf.mxu0
        %592 = vmatprep.mubr.bf16.mxu0 0
        %593 = vmatmul.mubr.bf16.gmra.mxu0 %v461
        %v594 = vpop.f32.mrf.mxu0
        %v595 = vadd.f32 0.0, %v594
        %v596 = vpop.f32.mrf.mxu0
        %v597 = vpop.f32.mrf.mxu0
        %v598 = vadd.f32 0.0, %v597
        %v599 = vpop.f32.mrf.mxu0
        %600 = vmatprep.mubr.bf16.mxu0 0
        %601 = vmatmul.mubr.bf16.gmra.mxu0 %v462
        %v602 = vpop.f32.mrf.mxu0
        %v603 = vadd.f32 0.0, %v602
        %v604 = vpop.f32.mrf.mxu0
        %v605 = vpop.f32.mrf.mxu0
        %v606 = vadd.f32 0.0, %v605
        %v607 = vpop.f32.mrf.mxu0
        %608 = vmatprep.mubr.bf16.mxu0 0
        %609 = vmatmul.mubr.bf16.gmra.mxu0 %v463
        %v610 = vpop.f32.mrf.mxu0
        %v611 = vadd.f32 0.0, %v610
        %v612 = vpop.f32.mrf.mxu0
        %v613 = vpop.f32.mrf.mxu0
        %v614 = vadd.f32 0.0, %v613
        %v615 = vpop.f32.mrf.mxu0
        %616 = vdwg.mxu0
        %v617 = vadd.f32 %v376, %v555
        %v618 = vadd.f32 %v377, %v558
        %v619 = vadd.f32 %v378, %v563
        %v620 = vadd.f32 %v379, %v566
        %v621 = vadd.f32 %v380, %v571
        %v622 = vadd.f32 %v381, %v574
        %v623 = vadd.f32 %v382, %v579
        %v624 = vadd.f32 %v383, %v582
        %v625 = vadd.f32 %v384, %v587
        %v626 = vadd.f32 %v385, %v590
        %v627 = vadd.f32 %v386, %v595
        %v628 = vadd.f32 %v387, %v598
        %v629 = vadd.f32 %v388, %v603
        %v630 = vadd.f32 %v389, %v606
        %v631 = vadd.f32 %v390, %v611
        %v632 = vadd.f32 %v391, %v614
        %633 = vst [vmem:[#allocation2] sm:$0xff] %v617
        %634 = vst [vmem:[#allocation2 + $0x8] sm:$0xff] %v618
        %635 = vst [vmem:[#allocation2 + $0x10] sm:$0xff] %v619
        %636 = vst [vmem:[#allocation2 + $0x18] sm:$0xff] %v620
        %637 = vst [vmem:[#allocation2 + $0x20] sm:$0xff] %v621
        %638 = vst [vmem:[#allocation2 + $0x28] sm:$0xff] %v622
        %639 = vst [vmem:[#allocation2 + $0x30] sm:$0xff] %v623
        %640 = vst [vmem:[#allocation2 + $0x38] sm:$0xff] %v624
        %641 = vst [vmem:[#allocation2 + $0x40] sm:$0xff] %v625
        %642 = vst [vmem:[#allocation2 + $0x48] sm:$0xff] %v626
        %643 = vst [vmem:[#allocation2 + $0x50] sm:$0xff] %v627
        %644 = vst [vmem:[#allocation2 + $0x58] sm:$0xff] %v628
        %645 = vst [vmem:[#allocation2 + $0x60] sm:$0xff] %v629
        %646 = vst [vmem:[#allocation2 + $0x68] sm:$0xff] %v630
        %647 = vst [vmem:[#allocation2 + $0x70] sm:$0xff] %v631
        %648 = vst [vmem:[#allocation2 + $0x78] sm:$0xff] %v632
        %p649 = scmp.eq.s32.totalorder %s21, 2
        // Predicated region
        $region78: #{bottleneck_forward.5} parent=68 // pred_check
          %p650 = pneg %p649
        $region79: #{bottleneck_forward.5} parent=68 // pred_check_branch
          %652 = sbr.rel (%p650) target = $region81
        $region80: #{bottleneck_forward.5} parent=68 // pred_region
          %v653 = vld [vmem:[#allocation2] sm:$0xff]
          %v654 = vld [vmem:[#allocation2 + $0x8] sm:$0xff]
          %v655 = vld [vmem:[#allocation2 + $0x10] sm:$0xff]
          %v656 = vld [vmem:[#allocation2 + $0x18] sm:$0xff]
          %v657 = vld [vmem:[#allocation2 + $0x20] sm:$0xff]
          %v658 = vld [vmem:[#allocation2 + $0x28] sm:$0xff]
          %v659 = vld [vmem:[#allocation2 + $0x30] sm:$0xff]
          %v660 = vld [vmem:[#allocation2 + $0x38] sm:$0xff]
          %v661 = vld [vmem:[#allocation2 + $0x40] sm:$0xff]
          %v662 = vld [vmem:[#allocation2 + $0x48] sm:$0xff]
          %v663 = vld [vmem:[#allocation2 + $0x50] sm:$0xff]
          %v664 = vld [vmem:[#allocation2 + $0x58] sm:$0xff]
          %v665 = vld [vmem:[#allocation2 + $0x60] sm:$0xff]
          %v666 = vld [vmem:[#allocation2 + $0x68] sm:$0xff]
          %v667 = vld [vmem:[#allocation2 + $0x70] sm:$0xff]
          %v668 = vld [vmem:[#allocation2 + $0x78] sm:$0xff]
          %v669 = vld [vmem:[%s345] sm:$0x1]
          %v671 = vlaneseq
          %v672 = vshrl.u32 %v671, 7
          %v673 = vsub.s32 0, %v672
          %v674 = vrot.slane %v669, %v673
          %v676 = vadd.f32 %v653, %v674
          %v677 = vadd.f32 %v654, %v674
          %v678 = vadd.f32 %v655, %v674
          %v679 = vadd.f32 %v656, %v674
          %v680 = vadd.f32 %v657, %v674
          %v681 = vadd.f32 %v658, %v674
          %v682 = vadd.f32 %v659, %v674
          %v683 = vadd.f32 %v660, %v674
          %v684 = vadd.f32 %v661, %v674
          %v685 = vadd.f32 %v662, %v674
          %v686 = vadd.f32 %v663, %v674
          %v687 = vadd.f32 %v664, %v674
          %v688 = vadd.f32 %v665, %v674
          %v689 = vadd.f32 %v666, %v674
          %v690 = vadd.f32 %v667, %v674
          %v691 = vadd.f32 %v668, %v674
          %v692 = vmax.f32 %v676, 0.0
          %v693 = vmax.f32 %v677, 0.0
          %v694 = vmax.f32 %v678, 0.0
          %v695 = vmax.f32 %v679, 0.0
          %v696 = vmax.f32 %v680, 0.0
          %v697 = vmax.f32 %v681, 0.0
          %v698 = vmax.f32 %v682, 0.0
          %v699 = vmax.f32 %v683, 0.0
          %v700 = vmax.f32 %v684, 0.0
          %v701 = vmax.f32 %v685, 0.0
          %v702 = vmax.f32 %v686, 0.0
          %v703 = vmax.f32 %v687, 0.0
          %v704 = vmax.f32 %v688, 0.0
          %v705 = vmax.f32 %v689, 0.0
          %v706 = vmax.f32 %v690, 0.0
          %v707 = vmax.f32 %v691, 0.0
          %v708 = vpack.c.bf16 %v693, %v692
          %v709 = vpack.c.bf16 %v695, %v694
          %v710 = vpack.c.bf16 %v697, %v696
          %v711 = vpack.c.bf16 %v699, %v698
          %v712 = vpack.c.bf16 %v701, %v700
          %v713 = vpack.c.bf16 %v703, %v702
          %v714 = vpack.c.bf16 %v705, %v704
          %v715 = vpack.c.bf16 %v707, %v706
          %v724 = vunpack.c.l.b16 %v708
          %v725 = vunpack.c.h.b16 %v708
          %v726 = vunpack.c.l.b16 %v709
          %v727 = vunpack.c.h.b16 %v709
          %v728 = vunpack.c.l.b16 %v710
          %v729 = vunpack.c.h.b16 %v710
          %v730 = vunpack.c.l.b16 %v711
          %v731 = vunpack.c.h.b16 %v711
          %v732 = vunpack.c.l.b16 %v712
          %v733 = vunpack.c.h.b16 %v712
          %v734 = vunpack.c.l.b16 %v713
          %v735 = vunpack.c.h.b16 %v713
          %v736 = vunpack.c.l.b16 %v714
          %v737 = vunpack.c.h.b16 %v714
          %v738 = vunpack.c.l.b16 %v715
          %v739 = vunpack.c.h.b16 %v715
          %v740 = vpack.c.b16 %v724, %v724
          %v741 = vpack.c.b16 %v725, %v725
          %v742 = vpack.c.b16 %v726, %v726
          %v743 = vpack.c.b16 %v727, %v727
          %v744 = vpack.c.b16 %v728, %v728
          %v745 = vpack.c.b16 %v729, %v729
          %v746 = vpack.c.b16 %v730, %v730
          %v747 = vpack.c.b16 %v731, %v731
          %v748 = vpack.c.b16 %v732, %v732
          %v749 = vpack.c.b16 %v733, %v733
          %v750 = vpack.c.b16 %v734, %v734
          %v751 = vpack.c.b16 %v735, %v735
          %v752 = vpack.c.b16 %v736, %v736
          %v753 = vpack.c.b16 %v737, %v737
          %v754 = vpack.c.b16 %v738, %v738
          %v755 = vpack.c.b16 %v739, %v739
          %772 = vst [vmem:[%s353] sm:$0xf] %v740
          %773 = vst [vmem:[%s353 + $0x4] sm:$0xf] %v741
          %774 = vst [vmem:[%s353 + $0x8] sm:$0xf] %v742
          %775 = vst [vmem:[%s353 + $0xc] sm:$0xf] %v743
          %776 = vst [vmem:[%s353 + $0x10] sm:$0xf] %v744
          %777 = vst [vmem:[%s353 + $0x14] sm:$0xf] %v745
          %778 = vst [vmem:[%s353 + $0x18] sm:$0xf] %v746
          %779 = vst [vmem:[%s353 + $0x1c] sm:$0xf] %v747
          %780 = vst [vmem:[%s353 + $0x20] sm:$0xf] %v748
          %781 = vst [vmem:[%s353 + $0x24] sm:$0xf] %v749
          %782 = vst [vmem:[%s353 + $0x28] sm:$0xf] %v750
          %783 = vst [vmem:[%s353 + $0x2c] sm:$0xf] %v751
          %784 = vst [vmem:[%s353 + $0x30] sm:$0xf] %v752
          %785 = vst [vmem:[%s353 + $0x34] sm:$0xf] %v753
          %786 = vst [vmem:[%s353 + $0x38] sm:$0xf] %v754
          %787 = vst [vmem:[%s353 + $0x3c] sm:$0xf] %v755
        $region81: #{bottleneck_forward.5} parent=68 // pred_fallthru
          _
        %s788 = smul.u32 16, %s19
        %p789 = scmp.lt.s32.totalorder %s788, 15
        %s790 = scalar_select %p789, %s788, 15
        %p791 = scmp.lt.s32.totalorder %s20, 0
        %s792 = scalar_select %p791, %s20, 0
        %s793 = sadd.s32 %s792, %s790
        %s794 = smul.addr %s793, 4
        %s795 = scalar_lea.vmem %s3, %s794
        // Predicated region
        $region82: #{bottleneck_forward.5} parent=68 // pred_check
          %p796 = pneg %p135
        $region83: #{bottleneck_forward.5} parent=68 // pred_check_branch
          %798 = sbr.rel (%p796) target = $region85
        $region84: #{bottleneck_forward.5} parent=68 // pred_region
          %s799 = smul.u32 16, %s19
        $region85: #{bottleneck_forward.5} parent=68 // pred_fallthru
          _
        // Predicated region
        $region86: #{bottleneck_forward.5} parent=68 // pred_check
          %p800 = pneg %p135
        $region87: #{bottleneck_forward.5} parent=68 // pred_check_branch
          %802 = sbr.rel (%p800) target = $region89
        $region88: #{bottleneck_forward.5} parent=68 // pred_region
          %s803 = smul.u32 16, %s19
          %p804 = scmp.lt.s32.totalorder %s803, 15
          %s805 = scalar_select %p804, %s803, 15
          %p806 = scmp.lt.s32.totalorder %s20, 0
          %s807 = scalar_select %p806, %s20, 0
          %s808 = sadd.s32 %s807, %s805
          %s809 = smul.addr %s808, 4
          %s810 = scalar_lea.vmem %s3, %s809
        $region89: #{bottleneck_forward.5} parent=68 // pred_fallthru
          _
      $region69: #{bottleneck_forward.5} parent=5 // pred_fallthru
        _
      %p811 = scmp.le.s32.totalorder 2, %s9
      // Predicated region
      $region90: #{bottleneck_forward.5} parent=5 // pred_check
        %p812 = pneg %p811
      $region91: #{bottleneck_forward.5} parent=5 // pred_check_branch
        %814 = sbr.rel (%p812) target = $region93
      $region92: #{bottleneck_forward.5} parent=5 // pred_region
        %s815 = ssub.s32 %s9, 2
      $region93: #{bottleneck_forward.5} parent=5 // pred_fallthru
        _
    $region6: #{bottleneck_forward.5} parent=1 // loop_footer
      %s13 = sadd.s32 1, %s9
    $region7: #{bottleneck_forward.5} parent=1 // loop_footer_branch
      %8 = sbr.rel target = $region3
    $region8: #{bottleneck_forward.5} parent=1 // loop_exit
      _

// kernel: bottleneck_forward.6
$region0: #{bottleneck_forward.6}
  #allocation0 [shape = 'u32[]', space=smem, size = 0x4, offset = 0x4, fixed_abs, tag = 'smem constant byte address 0x4 - core index']
  #allocation1 [shape = 'u32[144,128]{1,0:T(1,128)}', space=vmem, size = 0x12000, scoped, tag = 'internal scratch']
  #allocation2 [shape = 'f32[128,128]{1,0:T(8,128)}', space=vmem, size = 0x10000, scoped, tag = 'scratch operand']
  %s0 = inlined_call_operand.vmem [shape: bf16[128,128], index: 0, kind: input, shape index: {}]
  %s1 = inlined_call_operand.vmem [shape: bf16[128,128], index: 1, kind: input, shape index: {}]
  %s2 = inlined_call_operand.vmem [shape: f32[1,128], index: 2, kind: input, shape index: {}]
  %s3 = inlined_call_operand.vmem [shape: bf16[128,128], index: 3, kind: output, shape index: {}]
  %s4 = sld [smem:[#allocation0]]
  $region30: #{bottleneck_forward.6} parent=0
    _
  %s6 = ssub.s32 1, %s4
  %s7 = scalar_select 0, %s6, %s4
  // Predicated region
  $region2: #{bottleneck_forward.6} parent=0 // pred_check
    _
  $region3: #{bottleneck_forward.6} parent=0 // pred_check_branch
    %9 = sbr.rel (0) target = $region5
  $region4: #{bottleneck_forward.6} parent=0 // pred_region
    _
  $region5: #{bottleneck_forward.6} parent=0 // pred_fallthru
    _
  // Predicated region
  $region6: #{bottleneck_forward.6} parent=0 // pred_check
    _
  $region7: #{bottleneck_forward.6} parent=0 // pred_check_branch
    %11 = sbr.rel (0) target = $region9
  $region8: #{bottleneck_forward.6} parent=0 // pred_region
    _
  $region9: #{bottleneck_forward.6} parent=0 // pred_fallthru
    _
  // Predicated region
  $region10: #{bottleneck_forward.6} parent=0 // pred_check
    _
  $region11: #{bottleneck_forward.6} parent=0 // pred_check_branch
    %13 = sbr.rel (0) target = $region13
  $region12: #{bottleneck_forward.6} parent=0 // pred_region
    _
  $region13: #{bottleneck_forward.6} parent=0 // pred_fallthru
    _
  %p15 = scmp.eq.s32.totalorder 0, 0
  // Predicated region
  $region14: #{bottleneck_forward.6} parent=0 // pred_check
    %p16 = pneg %p15
  $region15: #{bottleneck_forward.6} parent=0 // pred_check_branch
    %18 = sbr.rel (%p16) target = $region17
  $region16: #{bottleneck_forward.6} parent=0 // pred_region
    %19 = vst [vmem:[#allocation2] sm:$0xff] 0.0
    %20 = vst [vmem:[#allocation2 + $0x8] sm:$0xff] 0.0
    %21 = vst [vmem:[#allocation2 + $0x10] sm:$0xff] 0.0
    %22 = vst [vmem:[#allocation2 + $0x18] sm:$0xff] 0.0
    %23 = vst [vmem:[#allocation2 + $0x20] sm:$0xff] 0.0
    %24 = vst [vmem:[#allocation2 + $0x28] sm:$0xff] 0.0
    %25 = vst [vmem:[#allocation2 + $0x30] sm:$0xff] 0.0
    %26 = vst [vmem:[#allocation2 + $0x38] sm:$0xff] 0.0
    %27 = vst [vmem:[#allocation2 + $0x40] sm:$0xff] 0.0
    %28 = vst [vmem:[#allocation2 + $0x48] sm:$0xff] 0.0
    %29 = vst [vmem:[#allocation2 + $0x50] sm:$0xff] 0.0
    %30 = vst [vmem:[#allocation2 + $0x58] sm:$0xff] 0.0
    %31 = vst [vmem:[#allocation2 + $0x60] sm:$0xff] 0.0
    %32 = vst [vmem:[#allocation2 + $0x68] sm:$0xff] 0.0
    %33 = vst [vmem:[#allocation2 + $0x70] sm:$0xff] 0.0
    %34 = vst [vmem:[#allocation2 + $0x78] sm:$0xff] 0.0
  $region17: #{bottleneck_forward.6} parent=0 // pred_fallthru
    _
  %v35 = vld [vmem:[#allocation2] sm:$0xff]
  %v36 = vld [vmem:[#allocation2 + $0x8] sm:$0xff]
  %v37 = vld [vmem:[#allocation2 + $0x10] sm:$0xff]
  %v38 = vld [vmem:[#allocation2 + $0x18] sm:$0xff]
  %v39 = vld [vmem:[#allocation2 + $0x20] sm:$0xff]
  %v40 = vld [vmem:[#allocation2 + $0x28] sm:$0xff]
  %v41 = vld [vmem:[#allocation2 + $0x30] sm:$0xff]
  %v42 = vld [vmem:[#allocation2 + $0x38] sm:$0xff]
  %v43 = vld [vmem:[#allocation2 + $0x40] sm:$0xff]
  %v44 = vld [vmem:[#allocation2 + $0x48] sm:$0xff]
  %v45 = vld [vmem:[#allocation2 + $0x50] sm:$0xff]
  %v46 = vld [vmem:[#allocation2 + $0x58] sm:$0xff]
  %v47 = vld [vmem:[#allocation2 + $0x60] sm:$0xff]
  %v48 = vld [vmem:[#allocation2 + $0x68] sm:$0xff]
  %v49 = vld [vmem:[#allocation2 + $0x70] sm:$0xff]
  %v50 = vld [vmem:[#allocation2 + $0x78] sm:$0xff]
  %v51 = vld [vmem:[%s0] sm:$0xf]
  %v52 = vld [vmem:[%s0 + $0x4] sm:$0xf]
  %v53 = vld [vmem:[%s0 + $0x8] sm:$0xf]
  %v54 = vld [vmem:[%s0 + $0xc] sm:$0xf]
  %v55 = vld [vmem:[%s0 + $0x10] sm:$0xf]
  %v56 = vld [vmem:[%s0 + $0x14] sm:$0xf]
  %v57 = vld [vmem:[%s0 + $0x18] sm:$0xf]
  %v58 = vld [vmem:[%s0 + $0x1c] sm:$0xf]
  %v59 = vld [vmem:[%s0 + $0x20] sm:$0xf]
  %v60 = vld [vmem:[%s0 + $0x24] sm:$0xf]
  %v61 = vld [vmem:[%s0 + $0x28] sm:$0xf]
  %v62 = vld [vmem:[%s0 + $0x2c] sm:$0xf]
  %v63 = vld [vmem:[%s0 + $0x30] sm:$0xf]
  %v64 = vld [vmem:[%s0 + $0x34] sm:$0xf]
  %v65 = vld [vmem:[%s0 + $0x38] sm:$0xf]
  %v66 = vld [vmem:[%s0 + $0x3c] sm:$0xf]
  %v67 = vld [vmem:[%s1] sm:$0xf]
  %v68 = vld [vmem:[%s1 + $0x4] sm:$0xf]
  %v69 = vld [vmem:[%s1 + $0x8] sm:$0xf]
  %v70 = vld [vmem:[%s1 + $0xc] sm:$0xf]
  %v71 = vld [vmem:[%s1 + $0x10] sm:$0xf]
  %v72 = vld [vmem:[%s1 + $0x14] sm:$0xf]
  %v73 = vld [vmem:[%s1 + $0x18] sm:$0xf]
  %v74 = vld [vmem:[%s1 + $0x1c] sm:$0xf]
  %v75 = vld [vmem:[%s1 + $0x20] sm:$0xf]
  %v76 = vld [vmem:[%s1 + $0x24] sm:$0xf]
  %v77 = vld [vmem:[%s1 + $0x28] sm:$0xf]
  %v78 = vld [vmem:[%s1 + $0x2c] sm:$0xf]
  %v79 = vld [vmem:[%s1 + $0x30] sm:$0xf]
  %v80 = vld [vmem:[%s1 + $0x34] sm:$0xf]
  %v81 = vld [vmem:[%s1 + $0x38] sm:$0xf]
  %v82 = vld [vmem:[%s1 + $0x3c] sm:$0xf]
  %v99 = vunpack.c.l.b16 %v51
  %v100 = vunpack.c.l.b16 %v52
  %v101 = vunpack.c.l.b16 %v53
  %v102 = vunpack.c.l.b16 %v54
  %v103 = vunpack.c.l.b16 %v55
  %v104 = vunpack.c.l.b16 %v56
  %v105 = vunpack.c.l.b16 %v57
  %v106 = vunpack.c.l.b16 %v58
  %v107 = vunpack.c.l.b16 %v59
  %v108 = vunpack.c.l.b16 %v60
  %v109 = vunpack.c.l.b16 %v61
  %v110 = vunpack.c.l.b16 %v62
  %v111 = vunpack.c.l.b16 %v63
  %v112 = vunpack.c.l.b16 %v64
  %v113 = vunpack.c.l.b16 %v65
  %v114 = vunpack.c.l.b16 %v66
  %v115 = vpack.c.b16 %v100, %v99
  %v116 = vpack.c.b16 %v102, %v101
  %v117 = vpack.c.b16 %v104, %v103
  %v118 = vpack.c.b16 %v106, %v105
  %v119 = vpack.c.b16 %v108, %v107
  %v120 = vpack.c.b16 %v110, %v109
  %v121 = vpack.c.b16 %v112, %v111
  %v122 = vpack.c.b16 %v114, %v113
  %v147 = vunpack.c.l.b16 %v67
  %v148 = vunpack.c.l.b16 %v68
  %v149 = vunpack.c.l.b16 %v69
  %v150 = vunpack.c.l.b16 %v70
  %v151 = vunpack.c.l.b16 %v71
  %v152 = vunpack.c.l.b16 %v72
  %v153 = vunpack.c.l.b16 %v73
  %v154 = vunpack.c.l.b16 %v74
  %v155 = vunpack.c.l.b16 %v75
  %v156 = vunpack.c.l.b16 %v76
  %v157 = vunpack.c.l.b16 %v77
  %v158 = vunpack.c.l.b16 %v78
  %v159 = vunpack.c.l.b16 %v79
  %v160 = vunpack.c.l.b16 %v80
  %v161 = vunpack.c.l.b16 %v81
  %v162 = vunpack.c.l.b16 %v82
  %v163 = vpack.c.b16 %v148, %v147
  %v164 = vpack.c.b16 %v150, %v149
  %v165 = vpack.c.b16 %v152, %v151
  %v166 = vpack.c.b16 %v154, %v153
  %v167 = vpack.c.b16 %v156, %v155
  %v168 = vpack.c.b16 %v158, %v157
  %v169 = vpack.c.b16 %v160, %v159
  %v170 = vpack.c.b16 %v162, %v161
  %179 = vmatprep.subr.bf16.mxu0 0
  %180 = vmatpush1.bf16.msra.mxu0 %v170
  %181 = vmatprep.subr.bf16.mxu0 0
  %182 = vmatpush1.bf16.msra.mxu0 %v169
  %183 = vmatprep.subr.bf16.mxu0 0
  %184 = vmatpush1.bf16.msra.mxu0 %v168
  %185 = vmatprep.subr.bf16.mxu0 0
  %186 = vmatpush1.bf16.msra.mxu0 %v167
  %187 = vmatprep.subr.bf16.mxu0 0
  %188 = vmatpush1.bf16.msra.mxu0 %v166
  %189 = vmatprep.subr.bf16.mxu0 0
  %190 = vmatpush1.bf16.msra.mxu0 %v165
  %191 = vmatprep.subr.bf16.mxu0 0
  %192 = vmatpush1.bf16.msra.mxu0 %v164
  %193 = vmatprep.subr.bf16.mxu0 0
  %194 = vmatpush1.bf16.msra.mxu0 %v163
  %195 = vmatprep.subr.bf16.mxu0 0
  %196 = vmatpush2.bf16.msra.mxu0 0
  %197 = vmatprep.subr.bf16.mxu0 0
  %198 = vmatpush2.bf16.msra.mxu0 0
  %199 = vmatprep.subr.bf16.mxu0 0
  %200 = vmatpush2.bf16.msra.mxu0 0
  %201 = vmatprep.subr.bf16.mxu0 0
  %202 = vmatpush2.bf16.msra.mxu0 0
  %203 = vmatprep.subr.bf16.mxu0 0
  %204 = vmatpush2.bf16.msra.mxu0 0
  %205 = vmatprep.subr.bf16.mxu0 0
  %206 = vmatpush2.bf16.msra.mxu0 0
  %207 = vmatprep.subr.bf16.mxu0 0
  %208 = vmatpush2.bf16.msra.mxu0 0
  %209 = vmatprep.subr.bf16.mxu0 0
  %210 = vmatpush2.bf16.msra.mxu0 0
  %211 = vmatprep.mubr.bf16.mxu0 0
  %212 = vmatmul.mubr.bf16.gmra.mxu0 %v115
  %v213 = vpop.f32.mrf.mxu0
  %v214 = vadd.f32 0.0, %v213
  %v215 = vpop.f32.mrf.mxu0
  %v216 = vpop.f32.mrf.mxu0
  %v217 = vadd.f32 0.0, %v216
  %v218 = vpop.f32.mrf.mxu0
  %219 = vmatprep.mubr.bf16.mxu0 0
  %220 = vmatmul.mubr.bf16.gmra.mxu0 %v116
  %v221 = vpop.f32.mrf.mxu0
  %v222 = vadd.f32 0.0, %v221
  %v223 = vpop.f32.mrf.mxu0
  %v224 = vpop.f32.mrf.mxu0
  %v225 = vadd.f32 0.0, %v224
  %v226 = vpop.f32.mrf.mxu0
  %227 = vmatprep.mubr.bf16.mxu0 0
  %228 = vmatmul.mubr.bf16.gmra.mxu0 %v117
  %v229 = vpop.f32.mrf.mxu0
  %v230 = vadd.f32 0.0, %v229
  %v231 = vpop.f32.mrf.mxu0
  %v232 = vpop.f32.mrf.mxu0
  %v233 = vadd.f32 0.0, %v232
  %v234 = vpop.f32.mrf.mxu0
  %235 = vmatprep.mubr.bf16.mxu0 0
  %236 = vmatmul.mubr.bf16.gmra.mxu0 %v118
  %v237 = vpop.f32.mrf.mxu0
  %v238 = vadd.f32 0.0, %v237
  %v239 = vpop.f32.mrf.mxu0
  %v240 = vpop.f32.mrf.mxu0
  %v241 = vadd.f32 0.0, %v240
  %v242 = vpop.f32.mrf.mxu0
  %243 = vmatprep.mubr.bf16.mxu0 0
  %244 = vmatmul.mubr.bf16.gmra.mxu0 %v119
  %v245 = vpop.f32.mrf.mxu0
  %v246 = vadd.f32 0.0, %v245
  %v247 = vpop.f32.mrf.mxu0
  %v248 = vpop.f32.mrf.mxu0
  %v249 = vadd.f32 0.0, %v248
  %v250 = vpop.f32.mrf.mxu0
  %251 = vmatprep.mubr.bf16.mxu0 0
  %252 = vmatmul.mubr.bf16.gmra.mxu0 %v120
  %v253 = vpop.f32.mrf.mxu0
  %v254 = vadd.f32 0.0, %v253
  %v255 = vpop.f32.mrf.mxu0
  %v256 = vpop.f32.mrf.mxu0
  %v257 = vadd.f32 0.0, %v256
  %v258 = vpop.f32.mrf.mxu0
  %259 = vmatprep.mubr.bf16.mxu0 0
  %260 = vmatmul.mubr.bf16.gmra.mxu0 %v121
  %v261 = vpop.f32.mrf.mxu0
  %v262 = vadd.f32 0.0, %v261
  %v263 = vpop.f32.mrf.mxu0
  %v264 = vpop.f32.mrf.mxu0
  %v265 = vadd.f32 0.0, %v264
  %v266 = vpop.f32.mrf.mxu0
  %267 = vmatprep.mubr.bf16.mxu0 0
  %268 = vmatmul.mubr.bf16.gmra.mxu0 %v122
  %v269 = vpop.f32.mrf.mxu0
  %v270 = vadd.f32 0.0, %v269
  %v271 = vpop.f32.mrf.mxu0
  %v272 = vpop.f32.mrf.mxu0
  %v273 = vadd.f32 0.0, %v272
  %v274 = vpop.f32.mrf.mxu0
  %275 = vdwg.mxu0
  %v276 = vadd.f32 %v35, %v214
  %v277 = vadd.f32 %v36, %v217
  %v278 = vadd.f32 %v37, %v222
  %v279 = vadd.f32 %v38, %v225
  %v280 = vadd.f32 %v39, %v230
  %v281 = vadd.f32 %v40, %v233
  %v282 = vadd.f32 %v41, %v238
  %v283 = vadd.f32 %v42, %v241
  %v284 = vadd.f32 %v43, %v246
  %v285 = vadd.f32 %v44, %v249
  %v286 = vadd.f32 %v45, %v254
  %v287 = vadd.f32 %v46, %v257
  %v288 = vadd.f32 %v47, %v262
  %v289 = vadd.f32 %v48, %v265
  %v290 = vadd.f32 %v49, %v270
  %v291 = vadd.f32 %v50, %v273
  %292 = vst [vmem:[#allocation2] sm:$0xff] %v276
  %293 = vst [vmem:[#allocation2 + $0x8] sm:$0xff] %v277
  %294 = vst [vmem:[#allocation2 + $0x10] sm:$0xff] %v278
  %295 = vst [vmem:[#allocation2 + $0x18] sm:$0xff] %v279
  %296 = vst [vmem:[#allocation2 + $0x20] sm:$0xff] %v280
  %297 = vst [vmem:[#allocation2 + $0x28] sm:$0xff] %v281
  %298 = vst [vmem:[#allocation2 + $0x30] sm:$0xff] %v282
  %299 = vst [vmem:[#allocation2 + $0x38] sm:$0xff] %v283
  %300 = vst [vmem:[#allocation2 + $0x40] sm:$0xff] %v284
  %301 = vst [vmem:[#allocation2 + $0x48] sm:$0xff] %v285
  %302 = vst [vmem:[#allocation2 + $0x50] sm:$0xff] %v286
  %303 = vst [vmem:[#allocation2 + $0x58] sm:$0xff] %v287
  %304 = vst [vmem:[#allocation2 + $0x60] sm:$0xff] %v288
  %305 = vst [vmem:[#allocation2 + $0x68] sm:$0xff] %v289
  %306 = vst [vmem:[#allocation2 + $0x70] sm:$0xff] %v290
  %307 = vst [vmem:[#allocation2 + $0x78] sm:$0xff] %v291
  // Predicated region
  $region18: #{bottleneck_forward.6} parent=0 // pred_check
    %p308 = pneg %p15
  $region19: #{bottleneck_forward.6} parent=0 // pred_check_branch
    %310 = sbr.rel (%p308) target = $region21
  $region20: #{bottleneck_forward.6} parent=0 // pred_region
    %v311 = vld [vmem:[#allocation2] sm:$0xff]
    %v312 = vld [vmem:[#allocation2 + $0x8] sm:$0xff]
    %v313 = vld [vmem:[#allocation2 + $0x10] sm:$0xff]
    %v314 = vld [vmem:[#allocation2 + $0x18] sm:$0xff]
    %v315 = vld [vmem:[#allocation2 + $0x20] sm:$0xff]
    %v316 = vld [vmem:[#allocation2 + $0x28] sm:$0xff]
    %v317 = vld [vmem:[#allocation2 + $0x30] sm:$0xff]
    %v318 = vld [vmem:[#allocation2 + $0x38] sm:$0xff]
    %v319 = vld [vmem:[#allocation2 + $0x40] sm:$0xff]
    %v320 = vld [vmem:[#allocation2 + $0x48] sm:$0xff]
    %v321 = vld [vmem:[#allocation2 + $0x50] sm:$0xff]
    %v322 = vld [vmem:[#allocation2 + $0x58] sm:$0xff]
    %v323 = vld [vmem:[#allocation2 + $0x60] sm:$0xff]
    %v324 = vld [vmem:[#allocation2 + $0x68] sm:$0xff]
    %v325 = vld [vmem:[#allocation2 + $0x70] sm:$0xff]
    %v326 = vld [vmem:[#allocation2 + $0x78] sm:$0xff]
    %v327 = vld [vmem:[%s2] sm:$0x1]
    %v329 = vlaneseq
    %v330 = vshrl.u32 %v329, 7
    %v331 = vsub.s32 0, %v330
    %v332 = vrot.slane %v327, %v331
    %v334 = vadd.f32 %v311, %v332
    %v335 = vadd.f32 %v312, %v332
    %v336 = vadd.f32 %v313, %v332
    %v337 = vadd.f32 %v314, %v332
    %v338 = vadd.f32 %v315, %v332
    %v339 = vadd.f32 %v316, %v332
    %v340 = vadd.f32 %v317, %v332
    %v341 = vadd.f32 %v318, %v332
    %v342 = vadd.f32 %v319, %v332
    %v343 = vadd.f32 %v320, %v332
    %v344 = vadd.f32 %v321, %v332
    %v345 = vadd.f32 %v322, %v332
    %v346 = vadd.f32 %v323, %v332
    %v347 = vadd.f32 %v324, %v332
    %v348 = vadd.f32 %v325, %v332
    %v349 = vadd.f32 %v326, %v332
    %v350 = vpack.c.bf16 %v335, %v334
    %v351 = vpack.c.bf16 %v337, %v336
    %v352 = vpack.c.bf16 %v339, %v338
    %v353 = vpack.c.bf16 %v341, %v340
    %v354 = vpack.c.bf16 %v343, %v342
    %v355 = vpack.c.bf16 %v345, %v344
    %v356 = vpack.c.bf16 %v347, %v346
    %v357 = vpack.c.bf16 %v349, %v348
    %v366 = vunpack.c.l.b16 %v350
    %v367 = vunpack.c.h.b16 %v350
    %v368 = vunpack.c.l.b16 %v351
    %v369 = vunpack.c.h.b16 %v351
    %v370 = vunpack.c.l.b16 %v352
    %v371 = vunpack.c.h.b16 %v352
    %v372 = vunpack.c.l.b16 %v353
    %v373 = vunpack.c.h.b16 %v353
    %v374 = vunpack.c.l.b16 %v354
    %v375 = vunpack.c.h.b16 %v354
    %v376 = vunpack.c.l.b16 %v355
    %v377 = vunpack.c.h.b16 %v355
    %v378 = vunpack.c.l.b16 %v356
    %v379 = vunpack.c.h.b16 %v356
    %v380 = vunpack.c.l.b16 %v357
    %v381 = vunpack.c.h.b16 %v357
    %v382 = vpack.c.b16 %v366, %v366
    %v383 = vpack.c.b16 %v367, %v367
    %v384 = vpack.c.b16 %v368, %v368
    %v385 = vpack.c.b16 %v369, %v369
    %v386 = vpack.c.b16 %v370, %v370
    %v387 = vpack.c.b16 %v371, %v371
    %v388 = vpack.c.b16 %v372, %v372
    %v389 = vpack.c.b16 %v373, %v373
    %v390 = vpack.c.b16 %v374, %v374
    %v391 = vpack.c.b16 %v375, %v375
    %v392 = vpack.c.b16 %v376, %v376
    %v393 = vpack.c.b16 %v377, %v377
    %v394 = vpack.c.b16 %v378, %v378
    %v395 = vpack.c.b16 %v379, %v379
    %v396 = vpack.c.b16 %v380, %v380
    %v397 = vpack.c.b16 %v381, %v381
    %414 = vst [vmem:[%s3] sm:$0xf] %v382
    %415 = vst [vmem:[%s3 + $0x4] sm:$0xf] %v383
    %416 = vst [vmem:[%s3 + $0x8] sm:$0xf] %v384
    %417 = vst [vmem:[%s3 + $0xc] sm:$0xf] %v385
    %418 = vst [vmem:[%s3 + $0x10] sm:$0xf] %v386
    %419 = vst [vmem:[%s3 + $0x14] sm:$0xf] %v387
    %420 = vst [vmem:[%s3 + $0x18] sm:$0xf] %v388
    %421 = vst [vmem:[%s3 + $0x1c] sm:$0xf] %v389
    %422 = vst [vmem:[%s3 + $0x20] sm:$0xf] %v390
    %423 = vst [vmem:[%s3 + $0x24] sm:$0xf] %v391
    %424 = vst [vmem:[%s3 + $0x28] sm:$0xf] %v392
    %425 = vst [vmem:[%s3 + $0x2c] sm:$0xf] %v393
    %426 = vst [vmem:[%s3 + $0x30] sm:$0xf] %v394
    %427 = vst [vmem:[%s3 + $0x34] sm:$0xf] %v395
    %428 = vst [vmem:[%s3 + $0x38] sm:$0xf] %v396
    %429 = vst [vmem:[%s3 + $0x3c] sm:$0xf] %v397
  $region21: #{bottleneck_forward.6} parent=0 // pred_fallthru
    _
  // Predicated region
  $region22: #{bottleneck_forward.6} parent=0 // pred_check
    _
  $region23: #{bottleneck_forward.6} parent=0 // pred_check_branch
    %431 = sbr.rel (0) target = $region25
  $region24: #{bottleneck_forward.6} parent=0 // pred_region
    _
  $region25: #{bottleneck_forward.6} parent=0 // pred_fallthru
    _
  // Predicated region
  $region26: #{bottleneck_forward.6} parent=0 // pred_check
    _
  $region27: #{bottleneck_forward.6} parent=0 // pred_check_branch
    %433 = sbr.rel (0) target = $region29
  $region28: #{bottleneck_forward.6} parent=0 // pred_region
    _
  $region29: #{bottleneck_forward.6} parent=0 // pred_fallthru
    _

// kernel: bottleneck_forward.7
$region0: #{bottleneck_forward.7}
  #allocation0 [shape = 'u32[]', space=smem, size = 0x4, offset = 0x4, fixed_abs, tag = 'smem constant byte address 0x4 - core index']
  #allocation1 [shape = 'u32[144,128]{1,0:T(1,128)}', space=vmem, size = 0x12000, scoped, tag = 'internal scratch']
  #allocation2 [shape = 'f32[128,128]{1,0:T(8,128)}', space=vmem, size = 0x10000, scoped, tag = 'scratch operand']
  %s0 = inlined_call_operand.vmem [shape: bf16[128,128], index: 0, kind: input, shape index: {}]
  %s1 = inlined_call_operand.vmem [shape: bf16[128,128], index: 1, kind: input, shape index: {}]
  %s2 = inlined_call_operand.vmem [shape: f32[1,128], index: 2, kind: input, shape index: {}]
  %s3 = inlined_call_operand.vmem [shape: bf16[128,128], index: 3, kind: input, shape index: {}]
  %s4 = inlined_call_operand.hbm [shape: f32[128,128], index: 4, kind: output, shape index: {}]
  %s5 = sld [smem:[#allocation0]]
  $region34: #{bottleneck_forward.7} parent=0
    _
  %s7 = ssub.s32 1, %s5
  %s8 = scalar_select 0, %s7, %s5
  $region1: #{bottleneck_forward.7} parent=0
    #allocation3 [shape = 'u8[65536]{0}', space=vmem, size = 0x10000, scoped, tag = 'output window, operand 0, single buffered']
    #allocation4 [shape = 's32[1]{0}', space=sflag, size = 0x4, scoped, tag = 'scoped memory for bottleneck_forward.7']
    %9 = vsyncpa [#allocation4], 0
    // Predicated region
    $region2: #{bottleneck_forward.7} parent=1 // pred_check
      _
    $region3: #{bottleneck_forward.7} parent=1 // pred_check_branch
      %11 = sbr.rel (0) target = $region5
    $region4: #{bottleneck_forward.7} parent=1 // pred_region
      _
    $region5: #{bottleneck_forward.7} parent=1 // pred_fallthru
      _
    // Predicated region
    $region6: #{bottleneck_forward.7} parent=1 // pred_check
      _
    $region7: #{bottleneck_forward.7} parent=1 // pred_check_branch
      %13 = sbr.rel (0) target = $region9
    $region8: #{bottleneck_forward.7} parent=1 // pred_region
      _
    $region9: #{bottleneck_forward.7} parent=1 // pred_fallthru
      _
    // Predicated region
    $region10: #{bottleneck_forward.7} parent=1 // pred_check
      _
    $region11: #{bottleneck_forward.7} parent=1 // pred_check_branch
      %15 = sbr.rel (0) target = $region13
    $region12: #{bottleneck_forward.7} parent=1 // pred_region
      _
    $region13: #{bottleneck_forward.7} parent=1 // pred_fallthru
      _
    // Predicated region
    $region14: #{bottleneck_forward.7} parent=1 // pred_check
      _
    $region15: #{bottleneck_forward.7} parent=1 // pred_check_branch
      %17 = sbr.rel (0) target = $region17
    $region16: #{bottleneck_forward.7} parent=1 // pred_region
      _
    $region17: #{bottleneck_forward.7} parent=1 // pred_fallthru
      _
    %p19 = scmp.eq.s32.totalorder 0, 0
    // Predicated region
    $region18: #{bottleneck_forward.7} parent=1 // pred_check
      %p20 = pneg %p19
    $region19: #{bottleneck_forward.7} parent=1 // pred_check_branch
      %22 = sbr.rel (%p20) target = $region21
    $region20: #{bottleneck_forward.7} parent=1 // pred_region
      %23 = vst [vmem:[#allocation2] sm:$0xff] 0.0
      %24 = vst [vmem:[#allocation2 + $0x8] sm:$0xff] 0.0
      %25 = vst [vmem:[#allocation2 + $0x10] sm:$0xff] 0.0
      %26 = vst [vmem:[#allocation2 + $0x18] sm:$0xff] 0.0
      %27 = vst [vmem:[#allocation2 + $0x20] sm:$0xff] 0.0
      %28 = vst [vmem:[#allocation2 + $0x28] sm:$0xff] 0.0
      %29 = vst [vmem:[#allocation2 + $0x30] sm:$0xff] 0.0
      %30 = vst [vmem:[#allocation2 + $0x38] sm:$0xff] 0.0
      %31 = vst [vmem:[#allocation2 + $0x40] sm:$0xff] 0.0
      %32 = vst [vmem:[#allocation2 + $0x48] sm:$0xff] 0.0
      %33 = vst [vmem:[#allocation2 + $0x50] sm:$0xff] 0.0
      %34 = vst [vmem:[#allocation2 + $0x58] sm:$0xff] 0.0
      %35 = vst [vmem:[#allocation2 + $0x60] sm:$0xff] 0.0
      %36 = vst [vmem:[#allocation2 + $0x68] sm:$0xff] 0.0
      %37 = vst [vmem:[#allocation2 + $0x70] sm:$0xff] 0.0
      %38 = vst [vmem:[#allocation2 + $0x78] sm:$0xff] 0.0
    $region21: #{bottleneck_forward.7} parent=1 // pred_fallthru
      _
    %v39 = vld [vmem:[#allocation2] sm:$0xff]
    %v40 = vld [vmem:[#allocation2 + $0x8] sm:$0xff]
    %v41 = vld [vmem:[#allocation2 + $0x10] sm:$0xff]
    %v42 = vld [vmem:[#allocation2 + $0x18] sm:$0xff]
    %v43 = vld [vmem:[#allocation2 + $0x20] sm:$0xff]
    %v44 = vld [vmem:[#allocation2 + $0x28] sm:$0xff]
    %v45 = vld [vmem:[#allocation2 + $0x30] sm:$0xff]
    %v46 = vld [vmem:[#allocation2 + $0x38] sm:$0xff]
    %v47 = vld [vmem:[#allocation2 + $0x40] sm:$0xff]
    %v48 = vld [vmem:[#allocation2 + $0x48] sm:$0xff]
    %v49 = vld [vmem:[#allocation2 + $0x50] sm:$0xff]
    %v50 = vld [vmem:[#allocation2 + $0x58] sm:$0xff]
    %v51 = vld [vmem:[#allocation2 + $0x60] sm:$0xff]
    %v52 = vld [vmem:[#allocation2 + $0x68] sm:$0xff]
    %v53 = vld [vmem:[#allocation2 + $0x70] sm:$0xff]
    %v54 = vld [vmem:[#allocation2 + $0x78] sm:$0xff]
    %v55 = vld [vmem:[%s0] sm:$0xf]
    %v56 = vld [vmem:[%s0 + $0x4] sm:$0xf]
    %v57 = vld [vmem:[%s0 + $0x8] sm:$0xf]
    %v58 = vld [vmem:[%s0 + $0xc] sm:$0xf]
    %v59 = vld [vmem:[%s0 + $0x10] sm:$0xf]
    %v60 = vld [vmem:[%s0 + $0x14] sm:$0xf]
    %v61 = vld [vmem:[%s0 + $0x18] sm:$0xf]
    %v62 = vld [vmem:[%s0 + $0x1c] sm:$0xf]
    %v63 = vld [vmem:[%s0 + $0x20] sm:$0xf]
    %v64 = vld [vmem:[%s0 + $0x24] sm:$0xf]
    %v65 = vld [vmem:[%s0 + $0x28] sm:$0xf]
    %v66 = vld [vmem:[%s0 + $0x2c] sm:$0xf]
    %v67 = vld [vmem:[%s0 + $0x30] sm:$0xf]
    %v68 = vld [vmem:[%s0 + $0x34] sm:$0xf]
    %v69 = vld [vmem:[%s0 + $0x38] sm:$0xf]
    %v70 = vld [vmem:[%s0 + $0x3c] sm:$0xf]
    %v71 = vld [vmem:[%s1] sm:$0xf]
    %v72 = vld [vmem:[%s1 + $0x4] sm:$0xf]
    %v73 = vld [vmem:[%s1 + $0x8] sm:$0xf]
    %v74 = vld [vmem:[%s1 + $0xc] sm:$0xf]
    %v75 = vld [vmem:[%s1 + $0x10] sm:$0xf]
    %v76 = vld [vmem:[%s1 + $0x14] sm:$0xf]
    %v77 = vld [vmem:[%s1 + $0x18] sm:$0xf]
    %v78 = vld [vmem:[%s1 + $0x1c] sm:$0xf]
    %v79 = vld [vmem:[%s1 + $0x20] sm:$0xf]
    %v80 = vld [vmem:[%s1 + $0x24] sm:$0xf]
    %v81 = vld [vmem:[%s1 + $0x28] sm:$0xf]
    %v82 = vld [vmem:[%s1 + $0x2c] sm:$0xf]
    %v83 = vld [vmem:[%s1 + $0x30] sm:$0xf]
    %v84 = vld [vmem:[%s1 + $0x34] sm:$0xf]
    %v85 = vld [vmem:[%s1 + $0x38] sm:$0xf]
    %v86 = vld [vmem:[%s1 + $0x3c] sm:$0xf]
    %v103 = vunpack.c.l.b16 %v55
    %v104 = vunpack.c.l.b16 %v56
    %v105 = vunpack.c.l.b16 %v57
    %v106 = vunpack.c.l.b16 %v58
    %v107 = vunpack.c.l.b16 %v59
    %v108 = vunpack.c.l.b16 %v60
    %v109 = vunpack.c.l.b16 %v61
    %v110 = vunpack.c.l.b16 %v62
    %v111 = vunpack.c.l.b16 %v63
    %v112 = vunpack.c.l.b16 %v64
    %v113 = vunpack.c.l.b16 %v65
    %v114 = vunpack.c.l.b16 %v66
    %v115 = vunpack.c.l.b16 %v67
    %v116 = vunpack.c.l.b16 %v68
    %v117 = vunpack.c.l.b16 %v69
    %v118 = vunpack.c.l.b16 %v70
    %v119 = vpack.c.b16 %v104, %v103
    %v120 = vpack.c.b16 %v106, %v105
    %v121 = vpack.c.b16 %v108, %v107
    %v122 = vpack.c.b16 %v110, %v109
    %v123 = vpack.c.b16 %v112, %v111
    %v124 = vpack.c.b16 %v114, %v113
    %v125 = vpack.c.b16 %v116, %v115
    %v126 = vpack.c.b16 %v118, %v117
    %v151 = vunpack.c.l.b16 %v71
    %v152 = vunpack.c.l.b16 %v72
    %v153 = vunpack.c.l.b16 %v73
    %v154 = vunpack.c.l.b16 %v74
    %v155 = vunpack.c.l.b16 %v75
    %v156 = vunpack.c.l.b16 %v76
    %v157 = vunpack.c.l.b16 %v77
    %v158 = vunpack.c.l.b16 %v78
    %v159 = vunpack.c.l.b16 %v79
    %v160 = vunpack.c.l.b16 %v80
    %v161 = vunpack.c.l.b16 %v81
    %v162 = vunpack.c.l.b16 %v82
    %v163 = vunpack.c.l.b16 %v83
    %v164 = vunpack.c.l.b16 %v84
    %v165 = vunpack.c.l.b16 %v85
    %v166 = vunpack.c.l.b16 %v86
    %v167 = vpack.c.b16 %v152, %v151
    %v168 = vpack.c.b16 %v154, %v153
    %v169 = vpack.c.b16 %v156, %v155
    %v170 = vpack.c.b16 %v158, %v157
    %v171 = vpack.c.b16 %v160, %v159
    %v172 = vpack.c.b16 %v162, %v161
    %v173 = vpack.c.b16 %v164, %v163
    %v174 = vpack.c.b16 %v166, %v165
    %183 = vmatprep.subr.bf16.mxu0 0
    %184 = vmatpush1.bf16.msra.mxu0 %v174
    %185 = vmatprep.subr.bf16.mxu0 0
    %186 = vmatpush1.bf16.msra.mxu0 %v173
    %187 = vmatprep.subr.bf16.mxu0 0
    %188 = vmatpush1.bf16.msra.mxu0 %v172
    %189 = vmatprep.subr.bf16.mxu0 0
    %190 = vmatpush1.bf16.msra.mxu0 %v171
    %191 = vmatprep.subr.bf16.mxu0 0
    %192 = vmatpush1.bf16.msra.mxu0 %v170
    %193 = vmatprep.subr.bf16.mxu0 0
    %194 = vmatpush1.bf16.msra.mxu0 %v169
    %195 = vmatprep.subr.bf16.mxu0 0
    %196 = vmatpush1.bf16.msra.mxu0 %v168
    %197 = vmatprep.subr.bf16.mxu0 0
    %198 = vmatpush1.bf16.msra.mxu0 %v167
    %199 = vmatprep.subr.bf16.mxu0 0
    %200 = vmatpush2.bf16.msra.mxu0 0
    %201 = vmatprep.subr.bf16.mxu0 0
    %202 = vmatpush2.bf16.msra.mxu0 0
    %203 = vmatprep.subr.bf16.mxu0 0
    %204 = vmatpush2.bf16.msra.mxu0 0
    %205 = vmatprep.subr.bf16.mxu0 0
    %206 = vmatpush2.bf16.msra.mxu0 0
    %207 = vmatprep.subr.bf16.mxu0 0
    %208 = vmatpush2.bf16.msra.mxu0 0
    %209 = vmatprep.subr.bf16.mxu0 0
    %210 = vmatpush2.bf16.msra.mxu0 0
    %211 = vmatprep.subr.bf16.mxu0 0
    %212 = vmatpush2.bf16.msra.mxu0 0
    %213 = vmatprep.subr.bf16.mxu0 0
    %214 = vmatpush2.bf16.msra.mxu0 0
    %215 = vmatprep.mubr.bf16.mxu0 0
    %216 = vmatmul.mubr.bf16.gmra.mxu0 %v119
    %v217 = vpop.f32.mrf.mxu0
    %v218 = vadd.f32 0.0, %v217
    %v219 = vpop.f32.mrf.mxu0
    %v220 = vpop.f32.mrf.mxu0
    %v221 = vadd.f32 0.0, %v220
    %v222 = vpop.f32.mrf.mxu0
    %223 = vmatprep.mubr.bf16.mxu0 0
    %224 = vmatmul.mubr.bf16.gmra.mxu0 %v120
    %v225 = vpop.f32.mrf.mxu0
    %v226 = vadd.f32 0.0, %v225
    %v227 = vpop.f32.mrf.mxu0
    %v228 = vpop.f32.mrf.mxu0
    %v229 = vadd.f32 0.0, %v228
    %v230 = vpop.f32.mrf.mxu0
    %231 = vmatprep.mubr.bf16.mxu0 0
    %232 = vmatmul.mubr.bf16.gmra.mxu0 %v121
    %v233 = vpop.f32.mrf.mxu0
    %v234 = vadd.f32 0.0, %v233
    %v235 = vpop.f32.mrf.mxu0
    %v236 = vpop.f32.mrf.mxu0
    %v237 = vadd.f32 0.0, %v236
    %v238 = vpop.f32.mrf.mxu0
    %239 = vmatprep.mubr.bf16.mxu0 0
    %240 = vmatmul.mubr.bf16.gmra.mxu0 %v122
    %v241 = vpop.f32.mrf.mxu0
    %v242 = vadd.f32 0.0, %v241
    %v243 = vpop.f32.mrf.mxu0
    %v244 = vpop.f32.mrf.mxu0
    %v245 = vadd.f32 0.0, %v244
    %v246 = vpop.f32.mrf.mxu0
    %247 = vmatprep.mubr.bf16.mxu0 0
    %248 = vmatmul.mubr.bf16.gmra.mxu0 %v123
    %v249 = vpop.f32.mrf.mxu0
    %v250 = vadd.f32 0.0, %v249
    %v251 = vpop.f32.mrf.mxu0
    %v252 = vpop.f32.mrf.mxu0
    %v253 = vadd.f32 0.0, %v252
    %v254 = vpop.f32.mrf.mxu0
    %255 = vmatprep.mubr.bf16.mxu0 0
    %256 = vmatmul.mubr.bf16.gmra.mxu0 %v124
    %v257 = vpop.f32.mrf.mxu0
    %v258 = vadd.f32 0.0, %v257
    %v259 = vpop.f32.mrf.mxu0
    %v260 = vpop.f32.mrf.mxu0
    %v261 = vadd.f32 0.0, %v260
    %v262 = vpop.f32.mrf.mxu0
    %263 = vmatprep.mubr.bf16.mxu0 0
    %264 = vmatmul.mubr.bf16.gmra.mxu0 %v125
    %v265 = vpop.f32.mrf.mxu0
    %v266 = vadd.f32 0.0, %v265
    %v267 = vpop.f32.mrf.mxu0
    %v268 = vpop.f32.mrf.mxu0
    %v269 = vadd.f32 0.0, %v268
    %v270 = vpop.f32.mrf.mxu0
    %271 = vmatprep.mubr.bf16.mxu0 0
    %272 = vmatmul.mubr.bf16.gmra.mxu0 %v126
    %v273 = vpop.f32.mrf.mxu0
    %v274 = vadd.f32 0.0, %v273
    %v275 = vpop.f32.mrf.mxu0
    %v276 = vpop.f32.mrf.mxu0
    %v277 = vadd.f32 0.0, %v276
    %v278 = vpop.f32.mrf.mxu0
    %279 = vdwg.mxu0
    %v280 = vadd.f32 %v39, %v218
    %v281 = vadd.f32 %v40, %v221
    %v282 = vadd.f32 %v41, %v226
    %v283 = vadd.f32 %v42, %v229
    %v284 = vadd.f32 %v43, %v234
    %v285 = vadd.f32 %v44, %v237
    %v286 = vadd.f32 %v45, %v242
    %v287 = vadd.f32 %v46, %v245
    %v288 = vadd.f32 %v47, %v250
    %v289 = vadd.f32 %v48, %v253
    %v290 = vadd.f32 %v49, %v258
    %v291 = vadd.f32 %v50, %v261
    %v292 = vadd.f32 %v51, %v266
    %v293 = vadd.f32 %v52, %v269
    %v294 = vadd.f32 %v53, %v274
    %v295 = vadd.f32 %v54, %v277
    %296 = vst [vmem:[#allocation2] sm:$0xff] %v280
    %297 = vst [vmem:[#allocation2 + $0x8] sm:$0xff] %v281
    %298 = vst [vmem:[#allocation2 + $0x10] sm:$0xff] %v282
    %299 = vst [vmem:[#allocation2 + $0x18] sm:$0xff] %v283
    %300 = vst [vmem:[#allocation2 + $0x20] sm:$0xff] %v284
    %301 = vst [vmem:[#allocation2 + $0x28] sm:$0xff] %v285
    %302 = vst [vmem:[#allocation2 + $0x30] sm:$0xff] %v286
    %303 = vst [vmem:[#allocation2 + $0x38] sm:$0xff] %v287
    %304 = vst [vmem:[#allocation2 + $0x40] sm:$0xff] %v288
    %305 = vst [vmem:[#allocation2 + $0x48] sm:$0xff] %v289
    %306 = vst [vmem:[#allocation2 + $0x50] sm:$0xff] %v290
    %307 = vst [vmem:[#allocation2 + $0x58] sm:$0xff] %v291
    %308 = vst [vmem:[#allocation2 + $0x60] sm:$0xff] %v292
    %309 = vst [vmem:[#allocation2 + $0x68] sm:$0xff] %v293
    %310 = vst [vmem:[#allocation2 + $0x70] sm:$0xff] %v294
    %311 = vst [vmem:[#allocation2 + $0x78] sm:$0xff] %v295
    // Predicated region
    $region22: #{bottleneck_forward.7} parent=1 // pred_check
      %p312 = pneg %p19
    $region23: #{bottleneck_forward.7} parent=1 // pred_check_branch
      %314 = sbr.rel (%p312) target = $region25
    $region24: #{bottleneck_forward.7} parent=1 // pred_region
      %v315 = vld [vmem:[#allocation2] sm:$0xff]
      %v316 = vld [vmem:[#allocation2 + $0x8] sm:$0xff]
      %v317 = vld [vmem:[#allocation2 + $0x10] sm:$0xff]
      %v318 = vld [vmem:[#allocation2 + $0x18] sm:$0xff]
      %v319 = vld [vmem:[#allocation2 + $0x20] sm:$0xff]
      %v320 = vld [vmem:[#allocation2 + $0x28] sm:$0xff]
      %v321 = vld [vmem:[#allocation2 + $0x30] sm:$0xff]
      %v322 = vld [vmem:[#allocation2 + $0x38] sm:$0xff]
      %v323 = vld [vmem:[#allocation2 + $0x40] sm:$0xff]
      %v324 = vld [vmem:[#allocation2 + $0x48] sm:$0xff]
      %v325 = vld [vmem:[#allocation2 + $0x50] sm:$0xff]
      %v326 = vld [vmem:[#allocation2 + $0x58] sm:$0xff]
      %v327 = vld [vmem:[#allocation2 + $0x60] sm:$0xff]
      %v328 = vld [vmem:[#allocation2 + $0x68] sm:$0xff]
      %v329 = vld [vmem:[#allocation2 + $0x70] sm:$0xff]
      %v330 = vld [vmem:[#allocation2 + $0x78] sm:$0xff]
      %v331 = vld [vmem:[%s2] sm:$0x1]
      %v333 = vlaneseq
      %v334 = vshrl.u32 %v333, 7
      %v335 = vsub.s32 0, %v334
      %v336 = vrot.slane %v331, %v335
      %v338 = vadd.f32 %v315, %v336
      %v339 = vadd.f32 %v316, %v336
      %v340 = vadd.f32 %v317, %v336
      %v341 = vadd.f32 %v318, %v336
      %v342 = vadd.f32 %v319, %v336
      %v343 = vadd.f32 %v320, %v336
      %v344 = vadd.f32 %v321, %v336
      %v345 = vadd.f32 %v322, %v336
      %v346 = vadd.f32 %v323, %v336
      %v347 = vadd.f32 %v324, %v336
      %v348 = vadd.f32 %v325, %v336
      %v349 = vadd.f32 %v326, %v336
      %v350 = vadd.f32 %v327, %v336
      %v351 = vadd.f32 %v328, %v336
      %v352 = vadd.f32 %v329, %v336
      %v353 = vadd.f32 %v330, %v336
      %v354 = vld [vmem:[%s3] sm:$0xf]
      %v355 = vld [vmem:[%s3 + $0x4] sm:$0xf]
      %v356 = vld [vmem:[%s3 + $0x8] sm:$0xf]
      %v357 = vld [vmem:[%s3 + $0xc] sm:$0xf]
      %v358 = vld [vmem:[%s3 + $0x10] sm:$0xf]
      %v359 = vld [vmem:[%s3 + $0x14] sm:$0xf]
      %v360 = vld [vmem:[%s3 + $0x18] sm:$0xf]
      %v361 = vld [vmem:[%s3 + $0x1c] sm:$0xf]
      %v362 = vld [vmem:[%s3 + $0x20] sm:$0xf]
      %v363 = vld [vmem:[%s3 + $0x24] sm:$0xf]
      %v364 = vld [vmem:[%s3 + $0x28] sm:$0xf]
      %v365 = vld [vmem:[%s3 + $0x2c] sm:$0xf]
      %v366 = vld [vmem:[%s3 + $0x30] sm:$0xf]
      %v367 = vld [vmem:[%s3 + $0x34] sm:$0xf]
      %v368 = vld [vmem:[%s3 + $0x38] sm:$0xf]
      %v369 = vld [vmem:[%s3 + $0x3c] sm:$0xf]
      %v370 = vunpack.c.l.bf16 %v354
      %v371 = vunpack.c.l.bf16 %v355
      %v372 = vunpack.c.l.bf16 %v356
      %v373 = vunpack.c.l.bf16 %v357
      %v374 = vunpack.c.l.bf16 %v358
      %v375 = vunpack.c.l.bf16 %v359
      %v376 = vunpack.c.l.bf16 %v360
      %v377 = vunpack.c.l.bf16 %v361
      %v378 = vunpack.c.l.bf16 %v362
      %v379 = vunpack.c.l.bf16 %v363
      %v380 = vunpack.c.l.bf16 %v364
      %v381 = vunpack.c.l.bf16 %v365
      %v382 = vunpack.c.l.bf16 %v366
      %v383 = vunpack.c.l.bf16 %v367
      %v384 = vunpack.c.l.bf16 %v368
      %v385 = vunpack.c.l.bf16 %v369
      %v386 = vadd.f32 %v338, %v370
      %v387 = vadd.f32 %v339, %v371
      %v388 = vadd.f32 %v340, %v372
      %v389 = vadd.f32 %v341, %v373
      %v390 = vadd.f32 %v342, %v374
      %v391 = vadd.f32 %v343, %v375
      %v392 = vadd.f32 %v344, %v376
      %v393 = vadd.f32 %v345, %v377
      %v394 = vadd.f32 %v346, %v378
      %v395 = vadd.f32 %v347, %v379
      %v396 = vadd.f32 %v348, %v380
      %v397 = vadd.f32 %v349, %v381
      %v398 = vadd.f32 %v350, %v382
      %v399 = vadd.f32 %v351, %v383
      %v400 = vadd.f32 %v352, %v384
      %v401 = vadd.f32 %v353, %v385
      %402 = vst [vmem:[#allocation3] sm:$0xff] %v386
      %403 = vst [vmem:[#allocation3 + $0x8] sm:$0xff] %v387
      %404 = vst [vmem:[#allocation3 + $0x10] sm:$0xff] %v388
      %405 = vst [vmem:[#allocation3 + $0x18] sm:$0xff] %v389
      %406 = vst [vmem:[#allocation3 + $0x20] sm:$0xff] %v390
      %407 = vst [vmem:[#allocation3 + $0x28] sm:$0xff] %v391
      %408 = vst [vmem:[#allocation3 + $0x30] sm:$0xff] %v392
      %409 = vst [vmem:[#allocation3 + $0x38] sm:$0xff] %v393
      %410 = vst [vmem:[#allocation3 + $0x40] sm:$0xff] %v394
      %411 = vst [vmem:[#allocation3 + $0x48] sm:$0xff] %v395
      %412 = vst [vmem:[#allocation3 + $0x50] sm:$0xff] %v396
      %413 = vst [vmem:[#allocation3 + $0x58] sm:$0xff] %v397
      %414 = vst [vmem:[#allocation3 + $0x60] sm:$0xff] %v398
      %415 = vst [vmem:[#allocation3 + $0x68] sm:$0xff] %v399
      %416 = vst [vmem:[#allocation3 + $0x70] sm:$0xff] %v400
      %417 = vst [vmem:[#allocation3 + $0x78] sm:$0xff] %v401
    $region25: #{bottleneck_forward.7} parent=1 // pred_fallthru
      _
    // Predicated region
    $region26: #{bottleneck_forward.7} parent=1 // pred_check
      _
    $region27: #{bottleneck_forward.7} parent=1 // pred_check_branch
      %419 = sbr.rel (0) target = $region29
    $region28: #{bottleneck_forward.7} parent=1 // pred_region
      %s421 = ssub.s32 2048, 2048
      %422 = vsyncadd [#allocation4], %s421
      %s423 = sshll.u32 [#allocation3], 4
      %s424 = int_to_ptr.vmem [resolvable:$true] %s423
      %429 = dma.vmem_to_hbm [thread:$0]  %s424, 2048, %s4, [#allocation4], 128, 128, 8
    $region29: #{bottleneck_forward.7} parent=1 // pred_fallthru
      _
    // Predicated region
    $region30: #{bottleneck_forward.7} parent=1 // pred_check
      _
    $region31: #{bottleneck_forward.7} parent=1 // pred_check_branch
      %431 = sbr.rel (0) target = $region33
    $region32: #{bottleneck_forward.7} parent=1 // pred_region
      %432 = dma.done [#allocation4], 2048
    $region33: #{bottleneck_forward.7} parent=1 // pred_fallthru
      _
    %433 = vsyncpa [#allocation4], 1

</llo_original>
